<compile_context>
chip_gen: v7x
topology: tpu7x:2x2x1
jax: 0.10.0
libtpu: 0.0.40
codegen_flags: <defaults>
</compile_context>

<pallas_src>
import math

import jax
import jax.numpy as jnp
from jax.experimental import pallas as pl
from jax.experimental.pallas import tpu as pltpu

# ----------------------- small, module-consistent config -----------------------
B = 2                    # batch
CHANNELS = 1             # channels
IMAGE_SIZE = 16          # image_size (H = W)
IMAGE_PATCH = 8          # image_patch_size
DEPTH = 8                # depth (number of slices / frames)
DEPTH_PATCH = 4          # depth_patch_size
DIM = 32                 # args.dim
DIM_MLP = 64             # args.dim_mlp
N_HEADS = 4              # args.n_heads
DIM_HEAD = 8             # args.dim_head
ATTN_LAYERS = 2          # args.attn_layers

N_PATCHES = (IMAGE_SIZE // IMAGE_PATCH) ** 2 * (DEPTH // DEPTH_PATCH)   # 8
PATCH_DIM = CHANNELS * IMAGE_PATCH * IMAGE_PATCH * DEPTH_PATCH          # 256
TOKENS = N_PATCHES + 1                                                  # 9 (cls + patches)
INNER = N_HEADS * DIM_HEAD                                              # 32
EPS = 1e-5               # torch nn.LayerNorm default eps
MXU_DTYPE = jnp.bfloat16 # matmul operand dtype (accumulation stays f32)
OUT_LANES = 128          # lane-dense final store; true output in column 0

# ------------------------- packed-parameter slab layout -------------------------
# vec slab: all 1-D params + cls + pos, f32, one row each, padded to width 256
VW = 256
VROW_PE_G, VROW_PE_B = 0, 1
VROW_BPE, VROW_PE2_G, VROW_PE2_B, VROW_CLS = 2, 3, 4, 5
VROW_FNG, VROW_FNB = 6, 7
VROW_POS = 8                                   # TOKENS rows (8..16)
VROW_LAYER0 = 24                               # per-layer block, stride 8 rows
VL_ALG, VL_ALB, VL_BO, VL_FLG, VL_FLB, VL_B1, VL_B2 = range(7)
VROW_BP1 = VROW_LAYER0 + 8 * ATTN_LAYERS       # 40
VROW_BP2 = VROW_BP1 + 1                        # 41
VROW_BP3 = VROW_BP1 + 2                        # 42
VROWS = 48

# weight slab: bf16, width 128, all row offsets multiples of 16 (bf16 sublane tile)
WW = 128
WROW_WPE = 0                                   # PATCH_DIM rows, width DIM
WROW_LAYER0 = PATCH_DIM                        # 256
W_LAYER_STRIDE = DIM + DIM_MLP                 # 96 rows/layer: w1 (DIM rows), w2 (DIM_MLP rows)
WROW_WP1 = WROW_LAYER0 + ATTN_LAYERS * W_LAYER_STRIDE   # 448, DIM rows, width 128
WROW_WP2 = WROW_WP1 + DIM                               # 480, 128 rows, width 64
WROW_WP3 = WROW_WP2 + 128                               # 608, 64 rows, width 128 (padded; col 0 real)
WROWS = WROW_WP3 + 64                                   # 672


# ------------------------------- kernel helpers --------------------------------
def _layernorm(x, g, b):
    mu = jnp.mean(x, axis=-1, keepdims=True)
    var = jnp.mean(jnp.square(x - mu), axis=-1, keepdims=True)
    return (x - mu) * jax.lax.rsqrt(var + EPS) * g + b


def _gelu(x):
    # TODO(synk): torch nn.GELU() default is exact-erf GELU; erf lowering is not
    # guaranteed in Mosaic, so we use the tanh approximation (max abs err ~1e-3).
    c = math.sqrt(2.0 / math.pi)
    return 0.5 * x * (1.0 + jnp.tanh(c * (x + 0.044715 * x * x * x)))


def _mm(a, b):
    # bf16 operands, f32 accumulation (MXU native path on v6e/v7x; fine on v5e)
    return jnp.dot(a.astype(MXU_DTYPE), b.astype(MXU_DTYPE),
                   preferred_element_type=jnp.float32)


def _mm_nt(a, b):
    # a @ b.T (contract last dims of both), f32 accumulation
    return jax.lax.dot_general(a.astype(MXU_DTYPE), b.astype(MXU_DTYPE),
                               (((1,), (1,)), ((), ())),
                               preferred_element_type=jnp.float32)


# ----------------------------------- kernel ------------------------------------
def vit_brainage_kernel(patches_ref, vec_ref, w_ref, wqkv_ref, wo_ref, out_ref):
    patches = patches_ref[0]                                       # (TOKENS, PATCH_DIM); row 0 = zeros (cls slot)

    pe_g = vec_ref[VROW_PE_G:VROW_PE_G + 1, :PATCH_DIM]
    pe_b = vec_ref[VROW_PE_B:VROW_PE_B + 1, :PATCH_DIM]
    bpe = vec_ref[VROW_BPE:VROW_BPE + 1, :DIM]
    pe2_g = vec_ref[VROW_PE2_G:VROW_PE2_G + 1, :DIM]
    pe2_b = vec_ref[VROW_PE2_B:VROW_PE2_B + 1, :DIM]
    cls = vec_ref[VROW_CLS:VROW_CLS + 1, :DIM]
    pos = vec_ref[VROW_POS:VROW_POS + TOKENS, :DIM]

    # ---- patch embedding: LayerNorm -> Linear -> LayerNorm ----
    x = _layernorm(patches, pe_g, pe_b)
    x = _mm(x, w_ref[WROW_WPE:WROW_WPE + PATCH_DIM, :DIM]) + bpe   # (TOKENS, DIM)
    x = _layernorm(x, pe2_g, pe2_b)

    # ---- cls token into row 0 (VALU select, no sublane concat) + pos emb ----
    row_id = jax.lax.broadcasted_iota(jnp.int32, (TOKENS, DIM), 0)
    x = jnp.where(row_id == 0, cls, x) + pos                       # emb_dropout = identity

    scale = DIM_HEAD ** -0.5
    for l in range(ATTN_LAYERS):
        vbase = VROW_LAYER0 + 8 * l
        wbase = WROW_LAYER0 + W_LAYER_STRIDE * l
        alg = vec_ref[vbase + VL_ALG:vbase + VL_ALG + 1, :DIM]
        alb = vec_ref[vbase + VL_ALB:vbase + VL_ALB + 1, :DIM]
        bo = vec_ref[vbase + VL_BO:vbase + VL_BO + 1, :DIM]
        flg = vec_ref[vbase + VL_FLG:vbase + VL_FLG + 1, :DIM]
        flb = vec_ref[vbase + VL_FLB:vbase + VL_FLB + 1, :DIM]
        b1 = vec_ref[vbase + VL_B1:vbase + VL_B1 + 1, :DIM_MLP]
        b2 = vec_ref[vbase + VL_B2:vbase + VL_B2 + 1, :DIM]

        # ------------- attention block (pre-LN, residual) -------------
        hb = _layernorm(x, alg, alb).astype(MXU_DTYPE)             # cast once per layer
        o_acc = None
        for hd in range(N_HEADS):                                  # static unroll, per-head weights
            qidx = (l * N_HEADS + hd) * 3
            qh = _mm(hb, wqkv_ref[qidx + 0])                       # (T, Dh)
            kh = _mm(hb, wqkv_ref[qidx + 1])
            vh = _mm(hb, wqkv_ref[qidx + 2])
            s = _mm_nt(qh, kh) * scale                             # (T, T)
            s = s - jnp.max(s, axis=-1, keepdims=True)
            e = jnp.exp(s)
            p = e * pl.reciprocal(jnp.sum(e, axis=-1, keepdims=True), approx=True)
            oh = _mm(p, vh)                                        # (T, Dh)
            contrib = _mm(oh, wo_ref[l * N_HEADS + hd])            # head concat folded into out-proj
            o_acc = contrib if o_acc is None else o_acc + contrib
        x = x + o_acc + bo

        # ------------- feed-forward block (pre-LN, residual) -------------
        hf = _layernorm(x, flg, flb)
        hf = _gelu(_mm(hf, w_ref[wbase:wbase + DIM, :DIM_MLP]) + b1)          # (T, DIM_MLP)
        hf = _mm(hf, w_ref[wbase + DIM:wbase + DIM + DIM_MLP, :DIM]) + b2     # (T, DIM)
        x = x + hf

    # ---- final LayerNorm + mean pooling over tokens (pooling == "mean") ----
    fng = vec_ref[VROW_FNG:VROW_FNG + 1, :DIM]
    fnb = vec_ref[VROW_FNB:VROW_FNB + 1, :DIM]
    x = _layernorm(x, fng, fnb)
    z = jnp.mean(x, axis=0, keepdims=True)                         # (1, DIM)

    # ---- predictor: Linear(dim,128) GELU [Dropout=id] Linear(128,64) GELU Linear(64,1) ----
    bp1 = vec_ref[VROW_BP1:VROW_BP1 + 1, :OUT_LANES]
    bp2 = vec_ref[VROW_BP2:VROW_BP2 + 1, :64]
    bp3 = vec_ref[VROW_BP3:VROW_BP3 + 1, :OUT_LANES]
    z = _gelu(_mm(z, w_ref[WROW_WP1:WROW_WP1 + DIM, :]) + bp1)     # (1, 128)
    z = _gelu(_mm(z, w_ref[WROW_WP2:WROW_WP2 + 128, :64]) + bp2)   # (1, 64)
    z = _mm(z, w_ref[WROW_WP3:WROW_WP3 + 64, :]) + bp3             # (1, 128); real output at col 0
    out_ref[0] = z                                                 # lane-dense store


# ------------------------------- plain-JAX glue ---------------------------------
def patchify(img):
    # 'b c (f pf) (h p1) (w p2) -> b (f h w) (p1 p2 pf c)'
    Bn, C, D, H, W = img.shape
    pf, p1, p2 = DEPTH_PATCH, IMAGE_PATCH, IMAGE_PATCH
    x = img.reshape(Bn, C, D // pf, pf, H // p1, p1, W // p2, p2)
    x = jnp.transpose(x, (0, 2, 4, 6, 5, 7, 3, 1))   # B, f, h, w, p1, p2, pf, C
    return x.reshape(Bn, (D // pf) * (H // p1) * (W // p2), p1 * p2 * pf * C)


def init_params(key):
    ks = jax.random.split(key, 16)

    def nrm(k, shape, scale=0.02):
        return (scale * jax.random.normal(k, shape)).astype(jnp.float32)

    L = ATTN_LAYERS
    f32 = jnp.float32
    return {
        "pe_g": jnp.ones((1, PATCH_DIM), f32), "pe_b": jnp.zeros((1, PATCH_DIM), f32),
        "wpe": nrm(ks[0], (PATCH_DIM, DIM)), "bpe": jnp.zeros((1, DIM), f32),
        "pe2_g": jnp.ones((1, DIM), f32), "pe2_b": jnp.zeros((1, DIM), f32),
        "cls": nrm(ks[1], (1, DIM)), "pos": nrm(ks[2], (TOKENS, DIM)),
        "alg": jnp.ones((L, 1, DIM), f32), "alb": jnp.zeros((L, 1, DIM), f32),
        "wqkv": nrm(ks[3], (L, DIM, 3 * INNER)),
        "wo": nrm(ks[4], (L, INNER, DIM)), "bo": jnp.zeros((L, 1, DIM), f32),
        "flg": jnp.ones((L, 1, DIM), f32), "flb": jnp.zeros((L, 1, DIM), f32),
        "w1": nrm(ks[5], (L, DIM, DIM_MLP)), "b1": jnp.zeros((L, 1, DIM_MLP), f32),
        "w2": nrm(ks[6], (L, DIM_MLP, DIM)), "b2": jnp.zeros((L, 1, DIM), f32),
        "fng": jnp.ones((1, DIM), f32), "fnb": jnp.zeros((1, DIM), f32),
        "wp1": nrm(ks[7], (DIM, 128)), "bp1": jnp.zeros((1, 128), f32),
        "wp2": nrm(ks[8], (128, 64)), "bp2": jnp.zeros((1, 64), f32),
        "wp3": nrm(ks[9], (64, 1)), "bp3": jnp.zeros((1, 1), f32),
    }


def pack_params(params):
    """Pack the ~27 small tensors into 4 arrays (one-time host-side cost)."""
    f32 = jnp.float32
    v = jnp.zeros((VROWS, VW), f32)

    def setrow(slab, r, arr):
        a = jnp.asarray(arr, f32).reshape(-1)
        return slab.at[r, :a.shape[0]].set(a)

    v = setrow(v, VROW_PE_G, params["pe_g"])
    v = setrow(v, VROW_PE_B, params["pe_b"])
    v = setrow(v, VROW_BPE, params["bpe"])
    v = setrow(v, VROW_PE2_G, params["pe2_g"])
    v = setrow(v, VROW_PE2_B, params["pe2_b"])
    v = setrow(v, VROW_CLS, params["cls"])
    v = setrow(v, VROW_FNG, params["fng"])
    v = setrow(v, VROW_FNB, params["fnb"])
    v = v.at[VROW_POS:VROW_POS + TOKENS, :DIM].set(params["pos"].astype(f32))
    for l in range(ATTN_LAYERS):
        base = VROW_LAYER0 + 8 * l
        v = setrow(v, base + VL_ALG, params["alg"][l])
        v = setrow(v, base + VL_ALB, params["alb"][l])
        v = setrow(v, base + VL_BO, params["bo"][l])
        v = setrow(v, base + VL_FLG, params["flg"][l])
        v = setrow(v, base + VL_FLB, params["flb"][l])
        v = setrow(v, base + VL_B1, params["b1"][l])
        v = setrow(v, base + VL_B2, params["b2"][l])
    v = setrow(v, VROW_BP1, params["bp1"])
    v = setrow(v, VROW_BP2, params["bp2"])
    v = setrow(v, VROW_BP3, params["bp3"])

    w = jnp.zeros((WROWS, WW), f32)
    w = w.at[WROW_WPE:WROW_WPE + PATCH_DIM, :DIM].set(params["wpe"])
    for l in range(ATTN_LAYERS):
        base = WROW_LAYER0 + W_LAYER_STRIDE * l
        w = w.at[base:base + DIM, :DIM_MLP].set(params["w1"][l])
        w = w.at[base + DIM:base + DIM + DIM_MLP, :DIM].set(params["w2"][l])
    w = w.at[WROW_WP1:WROW_WP1 + DIM, :128].set(params["wp1"])
    w = w.at[WROW_WP2:WROW_WP2 + 128, :64].set(params["wp2"])
    w = w.at[WROW_WP3:WROW_WP3 + 64, :1].set(params["wp3"])

    # per-head pre-split attention weights (q/k/v columns are head-major h*Dh+d)
    wqkv = params["wqkv"].reshape(ATTN_LAYERS, DIM, 3, N_HEADS, DIM_HEAD)
    wqkv = jnp.transpose(wqkv, (0, 3, 2, 1, 4))                     # (L, H, 3, DIM, Dh)
    wqkv_h = wqkv.reshape(ATTN_LAYERS * N_HEADS * 3, DIM, DIM_HEAD)
    wo_h = params["wo"].reshape(ATTN_LAYERS * N_HEADS, DIM_HEAD, DIM)

    return {
        "vec": v,
        "w": w.astype(MXU_DTYPE),
        "wqkv": wqkv_h.astype(MXU_DTYPE),
        "wo": wo_h.astype(MXU_DTYPE),
    }


@jax.jit
def brain_age_forward(img, packed):
    f32 = jnp.float32
    patches = patchify(img.astype(f32))                          # (B, N, PATCH_DIM)
    patches = jnp.pad(patches, ((0, 0), (1, 0), (0, 0)))         # row 0 = cls slot (zeros)
    bsz = patches.shape[0]
    out = pl.pallas_call(
        vit_brainage_kernel,
        out_shape=jax.ShapeDtypeStruct((bsz, 1, OUT_LANES), f32),
        grid=(bsz,),
        in_specs=[
            pl.BlockSpec((1, TOKENS, PATCH_DIM), lambda b: (b, 0, 0)),
            pl.BlockSpec((VROWS, VW), lambda b: (0, 0)),
            pl.BlockSpec((WROWS, WW), lambda b: (0, 0)),
            pl.BlockSpec((ATTN_LAYERS * N_HEADS * 3, DIM, DIM_HEAD), lambda b: (0, 0, 0)),
            pl.BlockSpec((ATTN_LAYERS * N_HEADS, DIM_HEAD, DIM), lambda b: (0, 0, 0)),
        ],
        out_specs=pl.BlockSpec((1, 1, OUT_LANES), lambda b: (b, 0, 0)),
        compiler_params=pltpu.CompilerParams(
            dimension_semantics=("parallel",)),                  # 2 TCs on v7x take one batch each
    )(patches, packed["vec"], packed["w"], packed["wqkv"], packed["wo"])
    return out[:, 0, :1]                                         # (B, 1)


# TODO(synk): forward_with_mask's MONAI transforms (CenterSpatialCrop/Resize/
# NormalizeIntensity) are host-side preprocessing, not part of forward(); omitted.

if __name__ == "__main__":
    key = jax.random.PRNGKey(0)
    k_img, k_par = jax.random.split(key)
    img = jax.random.normal(
        k_img, (B, CHANNELS, DEPTH, IMAGE_SIZE, IMAGE_SIZE), dtype=jnp.float32)
    params = init_params(k_par)
    packed = pack_params(params)
    out = brain_age_forward(img, packed)
    jax.block_until_ready(out)
    assert out.shape == (B, 1) and out.dtype == jnp.float32
    print("KERNEL_OK")
</pallas_src>

<mosaic_0001>
module attributes {stable_mosaic.version = 11 : i64} {
  func.func @vit_brainage_kernel(%arg0: i32, %arg1: memref<1x9x256xf32, #tpu.memory_space<vmem>>, %arg2: memref<48x256xf32, #tpu.memory_space<vmem>>, %arg3: memref<672x128xbf16, #tpu.memory_space<vmem>>, %arg4: memref<24x32x8xbf16, #tpu.memory_space<vmem>>, %arg5: memref<8x8x32xbf16, #tpu.memory_space<vmem>>, %arg6: memref<1x1x128xf32, #tpu.memory_space<vmem>>) attributes {dimension_semantics = [#tpu.dimension_semantics<parallel>], iteration_bounds = array<i64: 2>, scalar_prefetch = 0 : i64, scratch_operands = 0 : i64, tpu.core_type = #tpu.core_type<tc>, window_params = [{transform_indices = @transform_0, window_bounds = array<i64: 1, 9, 256>}, {pipeline_mode = #tpu.pipeline_mode<synchronous>, transform_indices = @transform_1, window_bounds = array<i64: 48, 256>}, {pipeline_mode = #tpu.pipeline_mode<synchronous>, transform_indices = @transform_2, window_bounds = array<i64: 672, 128>}, {pipeline_mode = #tpu.pipeline_mode<synchronous>, transform_indices = @transform_3, window_bounds = array<i64: 24, 32, 8>}, {pipeline_mode = #tpu.pipeline_mode<synchronous>, transform_indices = @transform_4, window_bounds = array<i64: 8, 8, 32>}, {transform_indices = @transform_5, window_bounds = array<i64: 1, 1, 128>}]} {
    %c0 = arith.constant 0 : index
    %c0_0 = arith.constant 0 : index
    %c0_1 = arith.constant 0 : index
    %0 = vector.load %arg1[%c0, %c0_0, %c0_1] : memref<1x9x256xf32, #tpu.memory_space<vmem>>, vector<1x9x256xf32>
    %1 = vector.shape_cast %0 : vector<1x9x256xf32> to vector<9x256xf32>
    %c0_2 = arith.constant 0 : index
    %c0_3 = arith.constant 0 : index
    %2 = vector.load %arg2[%c0_2, %c0_3] : memref<48x256xf32, #tpu.memory_space<vmem>>, vector<1x256xf32>
    %c1 = arith.constant 1 : index
    %c0_4 = arith.constant 0 : index
    %3 = vector.load %arg2[%c1, %c0_4] : memref<48x256xf32, #tpu.memory_space<vmem>>, vector<1x256xf32>
    %c2 = arith.constant 2 : index
    %c0_5 = arith.constant 0 : index
    %4 = vector.load %arg2[%c2, %c0_5] : memref<48x256xf32, #tpu.memory_space<vmem>>, vector<1x32xf32>
    %c3 = arith.constant 3 : index
    %c0_6 = arith.constant 0 : index
    %5 = vector.load %arg2[%c3, %c0_6] : memref<48x256xf32, #tpu.memory_space<vmem>>, vector<1x32xf32>
    %c4 = arith.constant 4 : index
    %c0_7 = arith.constant 0 : index
    %6 = vector.load %arg2[%c4, %c0_7] : memref<48x256xf32, #tpu.memory_space<vmem>>, vector<1x32xf32>
    %c5 = arith.constant 5 : index
    %c0_8 = arith.constant 0 : index
    %7 = vector.load %arg2[%c5, %c0_8] : memref<48x256xf32, #tpu.memory_space<vmem>>, vector<1x32xf32>
    %c8 = arith.constant 8 : index
    %c0_9 = arith.constant 0 : index
    %8 = vector.load %arg2[%c8, %c0_9] : memref<48x256xf32, #tpu.memory_space<vmem>>, vector<9x32xf32>
    %cst = arith.constant dense<0.000000e+00> : vector<9xf32>
    %9 = vector.multi_reduction <add>, %1, %cst [1] : vector<9x256xf32> to vector<9xf32>
    %10 = vector.shape_cast %9 : vector<9xf32> to vector<9x1xf32>
    %cst_10 = arith.constant 2.560000e+02 : f32
    %11 = vector.broadcast %cst_10 : f32 to vector<9x1xf32>
    %12 = arith.divf %10, %11 : vector<9x1xf32>
    %13 = vector.broadcast %12 : vector<9x1xf32> to vector<9x256xf32>
    %14 = arith.subf %1, %13 : vector<9x256xf32>
    %15 = arith.mulf %14, %14 : vector<9x256xf32>
    %cst_11 = arith.constant dense<0.000000e+00> : vector<9xf32>
    %16 = vector.multi_reduction <add>, %15, %cst_11 [1] : vector<9x256xf32> to vector<9xf32>
    %17 = vector.shape_cast %16 : vector<9xf32> to vector<9x1xf32>
    %cst_12 = arith.constant 2.560000e+02 : f32
    %18 = vector.broadcast %cst_12 : f32 to vector<9x1xf32>
    %19 = arith.divf %17, %18 : vector<9x1xf32>
    %20 = vector.broadcast %12 : vector<9x1xf32> to vector<9x256xf32>
    %21 = arith.subf %1, %20 : vector<9x256xf32>
    %cst_13 = arith.constant 9.99999974E-6 : f32
    %22 = vector.broadcast %cst_13 : f32 to vector<9x1xf32>
    %23 = arith.addf %19, %22 : vector<9x1xf32>
    %24 = math.rsqrt %23 : vector<9x1xf32>
    %25 = vector.broadcast %24 : vector<9x1xf32> to vector<9x256xf32>
    %26 = arith.mulf %21, %25 : vector<9x256xf32>
    %27 = vector.broadcast %2 : vector<1x256xf32> to vector<9x256xf32>
    %28 = arith.mulf %26, %27 : vector<9x256xf32>
    %29 = vector.broadcast %3 : vector<1x256xf32> to vector<9x256xf32>
    %30 = arith.addf %28, %29 : vector<9x256xf32>
    %c0_14 = arith.constant 0 : index
    %c0_15 = arith.constant 0 : index
    %31 = vector.load %arg3[%c0_14, %c0_15] : memref<672x128xbf16, #tpu.memory_space<vmem>>, vector<256x32xbf16>
    %32 = arith.truncf %30 : vector<9x256xf32> to vector<9x256xbf16>
    %cst_16 = arith.constant dense<0.000000e+00> : vector<9x32xf32>
    %33 = tpu.matmul %32, %31, %cst_16 {dimension_numbers = #tpu.dot_dimension_numbers<[1], [0], [0], [1], [0, 0, 1, 1], [], []>} : vector<9x256xbf16>, vector<256x32xbf16>, vector<9x32xf32> -> vector<9x32xf32>
    %34 = vector.broadcast %4 : vector<1x32xf32> to vector<9x32xf32>
    %35 = arith.addf %33, %34 : vector<9x32xf32>
    %cst_17 = arith.constant dense<0.000000e+00> : vector<9xf32>
    %36 = vector.multi_reduction <add>, %35, %cst_17 [1] : vector<9x32xf32> to vector<9xf32>
    %37 = vector.shape_cast %36 : vector<9xf32> to vector<9x1xf32>
    %cst_18 = arith.constant 3.200000e+01 : f32
    %38 = vector.broadcast %cst_18 : f32 to vector<9x1xf32>
    %39 = arith.divf %37, %38 : vector<9x1xf32>
    %40 = vector.broadcast %39 : vector<9x1xf32> to vector<9x32xf32>
    %41 = arith.subf %35, %40 : vector<9x32xf32>
    %42 = arith.mulf %41, %41 : vector<9x32xf32>
    %cst_19 = arith.constant dense<0.000000e+00> : vector<9xf32>
    %43 = vector.multi_reduction <add>, %42, %cst_19 [1] : vector<9x32xf32> to vector<9xf32>
    %44 = vector.shape_cast %43 : vector<9xf32> to vector<9x1xf32>
    %cst_20 = arith.constant 3.200000e+01 : f32
    %45 = vector.broadcast %cst_20 : f32 to vector<9x1xf32>
    %46 = arith.divf %44, %45 : vector<9x1xf32>
    %47 = vector.broadcast %39 : vector<9x1xf32> to vector<9x32xf32>
    %48 = arith.subf %35, %47 : vector<9x32xf32>
    %cst_21 = arith.constant 9.99999974E-6 : f32
    %49 = vector.broadcast %cst_21 : f32 to vector<9x1xf32>
    %50 = arith.addf %46, %49 : vector<9x1xf32>
    %51 = math.rsqrt %50 : vector<9x1xf32>
    %52 = vector.broadcast %51 : vector<9x1xf32> to vector<9x32xf32>
    %53 = arith.mulf %48, %52 : vector<9x32xf32>
    %54 = vector.broadcast %5 : vector<1x32xf32> to vector<9x32xf32>
    %55 = arith.mulf %53, %54 : vector<9x32xf32>
    %56 = vector.broadcast %6 : vector<1x32xf32> to vector<9x32xf32>
    %57 = arith.addf %55, %56 : vector<9x32xf32>
    %58 = tpu.iota {dimensions = array<i32: 0>} : vector<9x32xi32>
    %c0_i32 = arith.constant 0 : i32
    %59 = vector.broadcast %c0_i32 : i32 to vector<9x32xi32>
    %60 = arith.cmpi eq, %58, %59 : vector<9x32xi32>
    %61 = vector.shape_cast %7 : vector<1x32xf32> to vector<1x32xf32>
    %62 = vector.broadcast %61 : vector<1x32xf32> to vector<9x32xf32>
    %63 = arith.select %60, %62, %57 : vector<9x32xi1>, vector<9x32xf32>
    %64 = arith.addf %63, %8 : vector<9x32xf32>
    %c24 = arith.constant 24 : index
    %c0_22 = arith.constant 0 : index
    %65 = vector.load %arg2[%c24, %c0_22] : memref<48x256xf32, #tpu.memory_space<vmem>>, vector<1x32xf32>
    %c25 = arith.constant 25 : index
    %c0_23 = arith.constant 0 : index
    %66 = vector.load %arg2[%c25, %c0_23] : memref<48x256xf32, #tpu.memory_space<vmem>>, vector<1x32xf32>
    %c26 = arith.constant 26 : index
    %c0_24 = arith.constant 0 : index
    %67 = vector.load %arg2[%c26, %c0_24] : memref<48x256xf32, #tpu.memory_space<vmem>>, vector<1x32xf32>
    %c27 = arith.constant 27 : index
    %c0_25 = arith.constant 0 : index
    %68 = vector.load %arg2[%c27, %c0_25] : memref<48x256xf32, #tpu.memory_space<vmem>>, vector<1x32xf32>
    %c28 = arith.constant 28 : index
    %c0_26 = arith.constant 0 : index
    %69 = vector.load %arg2[%c28, %c0_26] : memref<48x256xf32, #tpu.memory_space<vmem>>, vector<1x32xf32>
    %c29 = arith.constant 29 : index
    %c0_27 = arith.constant 0 : index
    %70 = vector.load %arg2[%c29, %c0_27] : memref<48x256xf32, #tpu.memory_space<vmem>>, vector<1x64xf32>
    %c30 = arith.constant 30 : index
    %c0_28 = arith.constant 0 : index
    %71 = vector.load %arg2[%c30, %c0_28] : memref<48x256xf32, #tpu.memory_space<vmem>>, vector<1x32xf32>
    %cst_29 = arith.constant dense<0.000000e+00> : vector<9xf32>
    %72 = vector.multi_reduction <add>, %64, %cst_29 [1] : vector<9x32xf32> to vector<9xf32>
    %73 = vector.shape_cast %72 : vector<9xf32> to vector<9x1xf32>
    %cst_30 = arith.constant 3.200000e+01 : f32
    %74 = vector.broadcast %cst_30 : f32 to vector<9x1xf32>
    %75 = arith.divf %73, %74 : vector<9x1xf32>
    %76 = vector.broadcast %75 : vector<9x1xf32> to vector<9x32xf32>
    %77 = arith.subf %64, %76 : vector<9x32xf32>
    %78 = arith.mulf %77, %77 : vector<9x32xf32>
    %cst_31 = arith.constant dense<0.000000e+00> : vector<9xf32>
    %79 = vector.multi_reduction <add>, %78, %cst_31 [1] : vector<9x32xf32> to vector<9xf32>
    %80 = vector.shape_cast %79 : vector<9xf32> to vector<9x1xf32>
    %cst_32 = arith.constant 3.200000e+01 : f32
    %81 = vector.broadcast %cst_32 : f32 to vector<9x1xf32>
    %82 = arith.divf %80, %81 : vector<9x1xf32>
    %83 = vector.broadcast %75 : vector<9x1xf32> to vector<9x32xf32>
    %84 = arith.subf %64, %83 : vector<9x32xf32>
    %cst_33 = arith.constant 9.99999974E-6 : f32
    %85 = vector.broadcast %cst_33 : f32 to vector<9x1xf32>
    %86 = arith.addf %82, %85 : vector<9x1xf32>
    %87 = math.rsqrt %86 : vector<9x1xf32>
    %88 = vector.broadcast %87 : vector<9x1xf32> to vector<9x32xf32>
    %89 = arith.mulf %84, %88 : vector<9x32xf32>
    %90 = vector.broadcast %65 : vector<1x32xf32> to vector<9x32xf32>
    %91 = arith.mulf %89, %90 : vector<9x32xf32>
    %92 = vector.broadcast %66 : vector<1x32xf32> to vector<9x32xf32>
    %93 = arith.addf %91, %92 : vector<9x32xf32>
    %94 = arith.truncf %93 : vector<9x32xf32> to vector<9x32xbf16>
    %c0_34 = arith.constant 0 : index
    %c0_35 = arith.constant 0 : index
    %c0_36 = arith.constant 0 : index
    %95 = vector.load %arg4[%c0_34, %c0_35, %c0_36] : memref<24x32x8xbf16, #tpu.memory_space<vmem>>, vector<1x32x8xbf16>
    %96 = vector.shape_cast %95 : vector<1x32x8xbf16> to vector<32x8xbf16>
    %cst_37 = arith.constant dense<0.000000e+00> : vector<9x8xf32>
    %97 = tpu.matmul %94, %96, %cst_37 {dimension_numbers = #tpu.dot_dimension_numbers<[1], [0], [0], [1], [0, 0, 1, 1], [], []>} : vector<9x32xbf16>, vector<32x8xbf16>, vector<9x8xf32> -> vector<9x8xf32>
    %c1_38 = arith.constant 1 : index
    %c0_39 = arith.constant 0 : index
    %c0_40 = arith.constant 0 : index
    %98 = vector.load %arg4[%c1_38, %c0_39, %c0_40] : memref<24x32x8xbf16, #tpu.memory_space<vmem>>, vector<1x32x8xbf16>
    %99 = vector.shape_cast %98 : vector<1x32x8xbf16> to vector<32x8xbf16>
    %cst_41 = arith.constant dense<0.000000e+00> : vector<9x8xf32>
    %100 = tpu.matmul %94, %99, %cst_41 {dimension_numbers = #tpu.dot_dimension_numbers<[1], [0], [0], [1], [0, 0, 1, 1], [], []>} : vector<9x32xbf16>, vector<32x8xbf16>, vector<9x8xf32> -> vector<9x8xf32>
    %c2_42 = arith.constant 2 : index
    %c0_43 = arith.constant 0 : index
    %c0_44 = arith.constant 0 : index
    %101 = vector.load %arg4[%c2_42, %c0_43, %c0_44] : memref<24x32x8xbf16, #tpu.memory_space<vmem>>, vector<1x32x8xbf16>
    %102 = vector.shape_cast %101 : vector<1x32x8xbf16> to vector<32x8xbf16>
    %cst_45 = arith.constant dense<0.000000e+00> : vector<9x8xf32>
    %103 = tpu.matmul %94, %102, %cst_45 {dimension_numbers = #tpu.dot_dimension_numbers<[1], [0], [0], [1], [0, 0, 1, 1], [], []>} : vector<9x32xbf16>, vector<32x8xbf16>, vector<9x8xf32> -> vector<9x8xf32>
    %104 = arith.truncf %97 : vector<9x8xf32> to vector<9x8xbf16>
    %105 = arith.truncf %100 : vector<9x8xf32> to vector<9x8xbf16>
    %cst_46 = arith.constant dense<0.000000e+00> : vector<9x9xf32>
    %106 = tpu.matmul %104, %105, %cst_46 {dimension_numbers = #tpu.dot_dimension_numbers<[1], [1], [0], [0], [0, 0, 1, 0], [], []>} : vector<9x8xbf16>, vector<9x8xbf16>, vector<9x9xf32> -> vector<9x9xf32>
    %cst_47 = arith.constant 0.353553385 : f32
    %107 = vector.broadcast %cst_47 : f32 to vector<9x9xf32>
    %108 = arith.mulf %106, %107 : vector<9x9xf32>
    %cst_48 = arith.constant dense<0xFF800000> : vector<9xf32>
    %109 = vector.multi_reduction <maximumf>, %108, %cst_48 [1] : vector<9x9xf32> to vector<9xf32>
    %110 = vector.shape_cast %109 : vector<9xf32> to vector<9x1xf32>
    %111 = vector.broadcast %110 : vector<9x1xf32> to vector<9x9xf32>
    %112 = arith.subf %108, %111 : vector<9x9xf32>
    %113 = math.exp %112 : vector<9x9xf32>
    %cst_49 = arith.constant dense<0.000000e+00> : vector<9xf32>
    %114 = vector.multi_reduction <add>, %113, %cst_49 [1] : vector<9x9xf32> to vector<9xf32>
    %115 = vector.shape_cast %114 : vector<9xf32> to vector<9x1xf32>
    %116 = tpu.reciprocal %115 {approx = true} : vector<9x1xf32> -> vector<9x1xf32>
    %117 = vector.broadcast %116 : vector<9x1xf32> to vector<9x9xf32>
    %118 = arith.mulf %113, %117 : vector<9x9xf32>
    %119 = arith.truncf %118 : vector<9x9xf32> to vector<9x9xbf16>
    %120 = arith.truncf %103 : vector<9x8xf32> to vector<9x8xbf16>
    %cst_50 = arith.constant dense<0.000000e+00> : vector<9x8xf32>
    %121 = tpu.matmul %119, %120, %cst_50 {dimension_numbers = #tpu.dot_dimension_numbers<[1], [0], [0], [1], [0, 0, 1, 1], [], []>} : vector<9x9xbf16>, vector<9x8xbf16>, vector<9x8xf32> -> vector<9x8xf32>
    %c0_51 = arith.constant 0 : index
    %c0_52 = arith.constant 0 : index
    %c0_53 = arith.constant 0 : index
    %122 = vector.load %arg5[%c0_51, %c0_52, %c0_53] : memref<8x8x32xbf16, #tpu.memory_space<vmem>>, vector<1x8x32xbf16>
    %123 = vector.shape_cast %122 : vector<1x8x32xbf16> to vector<8x32xbf16>
    %124 = arith.truncf %121 : vector<9x8xf32> to vector<9x8xbf16>
    %cst_54 = arith.constant dense<0.000000e+00> : vector<9x32xf32>
    %125 = tpu.matmul %124, %123, %cst_54 {dimension_numbers = #tpu.dot_dimension_numbers<[1], [0], [0], [1], [0, 0, 1, 1], [], []>} : vector<9x8xbf16>, vector<8x32xbf16>, vector<9x32xf32> -> vector<9x32xf32>
    %c3_55 = arith.constant 3 : index
    %c0_56 = arith.constant 0 : index
    %c0_57 = arith.constant 0 : index
    %126 = vector.load %arg4[%c3_55, %c0_56, %c0_57] : memref<24x32x8xbf16, #tpu.memory_space<vmem>>, vector<1x32x8xbf16>
    %127 = vector.shape_cast %126 : vector<1x32x8xbf16> to vector<32x8xbf16>
    %cst_58 = arith.constant dense<0.000000e+00> : vector<9x8xf32>
    %128 = tpu.matmul %94, %127, %cst_58 {dimension_numbers = #tpu.dot_dimension_numbers<[1], [0], [0], [1], [0, 0, 1, 1], [], []>} : vector<9x32xbf16>, vector<32x8xbf16>, vector<9x8xf32> -> vector<9x8xf32>
    %c4_59 = arith.constant 4 : index
    %c0_60 = arith.constant 0 : index
    %c0_61 = arith.constant 0 : index
    %129 = vector.load %arg4[%c4_59, %c0_60, %c0_61] : memref<24x32x8xbf16, #tpu.memory_space<vmem>>, vector<1x32x8xbf16>
    %130 = vector.shape_cast %129 : vector<1x32x8xbf16> to vector<32x8xbf16>
    %cst_62 = arith.constant dense<0.000000e+00> : vector<9x8xf32>
    %131 = tpu.matmul %94, %130, %cst_62 {dimension_numbers = #tpu.dot_dimension_numbers<[1], [0], [0], [1], [0, 0, 1, 1], [], []>} : vector<9x32xbf16>, vector<32x8xbf16>, vector<9x8xf32> -> vector<9x8xf32>
    %c5_63 = arith.constant 5 : index
    %c0_64 = arith.constant 0 : index
    %c0_65 = arith.constant 0 : index
    %132 = vector.load %arg4[%c5_63, %c0_64, %c0_65] : memref<24x32x8xbf16, #tpu.memory_space<vmem>>, vector<1x32x8xbf16>
    %133 = vector.shape_cast %132 : vector<1x32x8xbf16> to vector<32x8xbf16>
    %cst_66 = arith.constant dense<0.000000e+00> : vector<9x8xf32>
    %134 = tpu.matmul %94, %133, %cst_66 {dimension_numbers = #tpu.dot_dimension_numbers<[1], [0], [0], [1], [0, 0, 1, 1], [], []>} : vector<9x32xbf16>, vector<32x8xbf16>, vector<9x8xf32> -> vector<9x8xf32>
    %135 = arith.truncf %128 : vector<9x8xf32> to vector<9x8xbf16>
    %136 = arith.truncf %131 : vector<9x8xf32> to vector<9x8xbf16>
    %cst_67 = arith.constant dense<0.000000e+00> : vector<9x9xf32>
    %137 = tpu.matmul %135, %136, %cst_67 {dimension_numbers = #tpu.dot_dimension_numbers<[1], [1], [0], [0], [0, 0, 1, 0], [], []>} : vector<9x8xbf16>, vector<9x8xbf16>, vector<9x9xf32> -> vector<9x9xf32>
    %cst_68 = arith.constant 0.353553385 : f32
    %138 = vector.broadcast %cst_68 : f32 to vector<9x9xf32>
    %139 = arith.mulf %137, %138 : vector<9x9xf32>
    %cst_69 = arith.constant dense<0xFF800000> : vector<9xf32>
    %140 = vector.multi_reduction <maximumf>, %139, %cst_69 [1] : vector<9x9xf32> to vector<9xf32>
    %141 = vector.shape_cast %140 : vector<9xf32> to vector<9x1xf32>
    %142 = vector.broadcast %141 : vector<9x1xf32> to vector<9x9xf32>
    %143 = arith.subf %139, %142 : vector<9x9xf32>
    %144 = math.exp %143 : vector<9x9xf32>
    %cst_70 = arith.constant dense<0.000000e+00> : vector<9xf32>
    %145 = vector.multi_reduction <add>, %144, %cst_70 [1] : vector<9x9xf32> to vector<9xf32>
    %146 = vector.shape_cast %145 : vector<9xf32> to vector<9x1xf32>
    %147 = tpu.reciprocal %146 {approx = true} : vector<9x1xf32> -> vector<9x1xf32>
    %148 = vector.broadcast %147 : vector<9x1xf32> to vector<9x9xf32>
    %149 = arith.mulf %144, %148 : vector<9x9xf32>
    %150 = arith.truncf %149 : vector<9x9xf32> to vector<9x9xbf16>
    %151 = arith.truncf %134 : vector<9x8xf32> to vector<9x8xbf16>
    %cst_71 = arith.constant dense<0.000000e+00> : vector<9x8xf32>
    %152 = tpu.matmul %150, %151, %cst_71 {dimension_numbers = #tpu.dot_dimension_numbers<[1], [0], [0], [1], [0, 0, 1, 1], [], []>} : vector<9x9xbf16>, vector<9x8xbf16>, vector<9x8xf32> -> vector<9x8xf32>
    %c1_72 = arith.constant 1 : index
    %c0_73 = arith.constant 0 : index
    %c0_74 = arith.constant 0 : index
    %153 = vector.load %arg5[%c1_72, %c0_73, %c0_74] : memref<8x8x32xbf16, #tpu.memory_space<vmem>>, vector<1x8x32xbf16>
    %154 = vector.shape_cast %153 : vector<1x8x32xbf16> to vector<8x32xbf16>
    %155 = arith.truncf %152 : vector<9x8xf32> to vector<9x8xbf16>
    %cst_75 = arith.constant dense<0.000000e+00> : vector<9x32xf32>
    %156 = tpu.matmul %155, %154, %cst_75 {dimension_numbers = #tpu.dot_dimension_numbers<[1], [0], [0], [1], [0, 0, 1, 1], [], []>} : vector<9x8xbf16>, vector<8x32xbf16>, vector<9x32xf32> -> vector<9x32xf32>
    %157 = arith.addf %125, %156 : vector<9x32xf32>
    %c6 = arith.constant 6 : index
    %c0_76 = arith.constant 0 : index
    %c0_77 = arith.constant 0 : index
    %158 = vector.load %arg4[%c6, %c0_76, %c0_77] : memref<24x32x8xbf16, #tpu.memory_space<vmem>>, vector<1x32x8xbf16>
    %159 = vector.shape_cast %158 : vector<1x32x8xbf16> to vector<32x8xbf16>
    %cst_78 = arith.constant dense<0.000000e+00> : vector<9x8xf32>
    %160 = tpu.matmul %94, %159, %cst_78 {dimension_numbers = #tpu.dot_dimension_numbers<[1], [0], [0], [1], [0, 0, 1, 1], [], []>} : vector<9x32xbf16>, vector<32x8xbf16>, vector<9x8xf32> -> vector<9x8xf32>
    %c7 = arith.constant 7 : index
    %c0_79 = arith.constant 0 : index
    %c0_80 = arith.constant 0 : index
    %161 = vector.load %arg4[%c7, %c0_79, %c0_80] : memref<24x32x8xbf16, #tpu.memory_space<vmem>>, vector<1x32x8xbf16>
    %162 = vector.shape_cast %161 : vector<1x32x8xbf16> to vector<32x8xbf16>
    %cst_81 = arith.constant dense<0.000000e+00> : vector<9x8xf32>
    %163 = tpu.matmul %94, %162, %cst_81 {dimension_numbers = #tpu.dot_dimension_numbers<[1], [0], [0], [1], [0, 0, 1, 1], [], []>} : vector<9x32xbf16>, vector<32x8xbf16>, vector<9x8xf32> -> vector<9x8xf32>
    %c8_82 = arith.constant 8 : index
    %c0_83 = arith.constant 0 : index
    %c0_84 = arith.constant 0 : index
    %164 = vector.load %arg4[%c8_82, %c0_83, %c0_84] : memref<24x32x8xbf16, #tpu.memory_space<vmem>>, vector<1x32x8xbf16>
    %165 = vector.shape_cast %164 : vector<1x32x8xbf16> to vector<32x8xbf16>
    %cst_85 = arith.constant dense<0.000000e+00> : vector<9x8xf32>
    %166 = tpu.matmul %94, %165, %cst_85 {dimension_numbers = #tpu.dot_dimension_numbers<[1], [0], [0], [1], [0, 0, 1, 1], [], []>} : vector<9x32xbf16>, vector<32x8xbf16>, vector<9x8xf32> -> vector<9x8xf32>
    %167 = arith.truncf %160 : vector<9x8xf32> to vector<9x8xbf16>
    %168 = arith.truncf %163 : vector<9x8xf32> to vector<9x8xbf16>
    %cst_86 = arith.constant dense<0.000000e+00> : vector<9x9xf32>
    %169 = tpu.matmul %167, %168, %cst_86 {dimension_numbers = #tpu.dot_dimension_numbers<[1], [1], [0], [0], [0, 0, 1, 0], [], []>} : vector<9x8xbf16>, vector<9x8xbf16>, vector<9x9xf32> -> vector<9x9xf32>
    %cst_87 = arith.constant 0.353553385 : f32
    %170 = vector.broadcast %cst_87 : f32 to vector<9x9xf32>
    %171 = arith.mulf %169, %170 : vector<9x9xf32>
    %cst_88 = arith.constant dense<0xFF800000> : vector<9xf32>
    %172 = vector.multi_reduction <maximumf>, %171, %cst_88 [1] : vector<9x9xf32> to vector<9xf32>
    %173 = vector.shape_cast %172 : vector<9xf32> to vector<9x1xf32>
    %174 = vector.broadcast %173 : vector<9x1xf32> to vector<9x9xf32>
    %175 = arith.subf %171, %174 : vector<9x9xf32>
    %176 = math.exp %175 : vector<9x9xf32>
    %cst_89 = arith.constant dense<0.000000e+00> : vector<9xf32>
    %177 = vector.multi_reduction <add>, %176, %cst_89 [1] : vector<9x9xf32> to vector<9xf32>
    %178 = vector.shape_cast %177 : vector<9xf32> to vector<9x1xf32>
    %179 = tpu.reciprocal %178 {approx = true} : vector<9x1xf32> -> vector<9x1xf32>
    %180 = vector.broadcast %179 : vector<9x1xf32> to vector<9x9xf32>
    %181 = arith.mulf %176, %180 : vector<9x9xf32>
    %182 = arith.truncf %181 : vector<9x9xf32> to vector<9x9xbf16>
    %183 = arith.truncf %166 : vector<9x8xf32> to vector<9x8xbf16>
    %cst_90 = arith.constant dense<0.000000e+00> : vector<9x8xf32>
    %184 = tpu.matmul %182, %183, %cst_90 {dimension_numbers = #tpu.dot_dimension_numbers<[1], [0], [0], [1], [0, 0, 1, 1], [], []>} : vector<9x9xbf16>, vector<9x8xbf16>, vector<9x8xf32> -> vector<9x8xf32>
    %c2_91 = arith.constant 2 : index
    %c0_92 = arith.constant 0 : index
    %c0_93 = arith.constant 0 : index
    %185 = vector.load %arg5[%c2_91, %c0_92, %c0_93] : memref<8x8x32xbf16, #tpu.memory_space<vmem>>, vector<1x8x32xbf16>
    %186 = vector.shape_cast %185 : vector<1x8x32xbf16> to vector<8x32xbf16>
    %187 = arith.truncf %184 : vector<9x8xf32> to vector<9x8xbf16>
    %cst_94 = arith.constant dense<0.000000e+00> : vector<9x32xf32>
    %188 = tpu.matmul %187, %186, %cst_94 {dimension_numbers = #tpu.dot_dimension_numbers<[1], [0], [0], [1], [0, 0, 1, 1], [], []>} : vector<9x8xbf16>, vector<8x32xbf16>, vector<9x32xf32> -> vector<9x32xf32>
    %189 = arith.addf %157, %188 : vector<9x32xf32>
    %c9 = arith.constant 9 : index
    %c0_95 = arith.constant 0 : index
    %c0_96 = arith.constant 0 : index
    %190 = vector.load %arg4[%c9, %c0_95, %c0_96] : memref<24x32x8xbf16, #tpu.memory_space<vmem>>, vector<1x32x8xbf16>
    %191 = vector.shape_cast %190 : vector<1x32x8xbf16> to vector<32x8xbf16>
    %cst_97 = arith.constant dense<0.000000e+00> : vector<9x8xf32>
    %192 = tpu.matmul %94, %191, %cst_97 {dimension_numbers = #tpu.dot_dimension_numbers<[1], [0], [0], [1], [0, 0, 1, 1], [], []>} : vector<9x32xbf16>, vector<32x8xbf16>, vector<9x8xf32> -> vector<9x8xf32>
    %c10 = arith.constant 10 : index
    %c0_98 = arith.constant 0 : index
    %c0_99 = arith.constant 0 : index
    %193 = vector.load %arg4[%c10, %c0_98, %c0_99] : memref<24x32x8xbf16, #tpu.memory_space<vmem>>, vector<1x32x8xbf16>
    %194 = vector.shape_cast %193 : vector<1x32x8xbf16> to vector<32x8xbf16>
    %cst_100 = arith.constant dense<0.000000e+00> : vector<9x8xf32>
    %195 = tpu.matmul %94, %194, %cst_100 {dimension_numbers = #tpu.dot_dimension_numbers<[1], [0], [0], [1], [0, 0, 1, 1], [], []>} : vector<9x32xbf16>, vector<32x8xbf16>, vector<9x8xf32> -> vector<9x8xf32>
    %c11 = arith.constant 11 : index
    %c0_101 = arith.constant 0 : index
    %c0_102 = arith.constant 0 : index
    %196 = vector.load %arg4[%c11, %c0_101, %c0_102] : memref<24x32x8xbf16, #tpu.memory_space<vmem>>, vector<1x32x8xbf16>
    %197 = vector.shape_cast %196 : vector<1x32x8xbf16> to vector<32x8xbf16>
    %cst_103 = arith.constant dense<0.000000e+00> : vector<9x8xf32>
    %198 = tpu.matmul %94, %197, %cst_103 {dimension_numbers = #tpu.dot_dimension_numbers<[1], [0], [0], [1], [0, 0, 1, 1], [], []>} : vector<9x32xbf16>, vector<32x8xbf16>, vector<9x8xf32> -> vector<9x8xf32>
    %199 = arith.truncf %192 : vector<9x8xf32> to vector<9x8xbf16>
    %200 = arith.truncf %195 : vector<9x8xf32> to vector<9x8xbf16>
    %cst_104 = arith.constant dense<0.000000e+00> : vector<9x9xf32>
    %201 = tpu.matmul %199, %200, %cst_104 {dimension_numbers = #tpu.dot_dimension_numbers<[1], [1], [0], [0], [0, 0, 1, 0], [], []>} : vector<9x8xbf16>, vector<9x8xbf16>, vector<9x9xf32> -> vector<9x9xf32>
    %cst_105 = arith.constant 0.353553385 : f32
    %202 = vector.broadcast %cst_105 : f32 to vector<9x9xf32>
    %203 = arith.mulf %201, %202 : vector<9x9xf32>
    %cst_106 = arith.constant dense<0xFF800000> : vector<9xf32>
    %204 = vector.multi_reduction <maximumf>, %203, %cst_106 [1] : vector<9x9xf32> to vector<9xf32>
    %205 = vector.shape_cast %204 : vector<9xf32> to vector<9x1xf32>
    %206 = vector.broadcast %205 : vector<9x1xf32> to vector<9x9xf32>
    %207 = arith.subf %203, %206 : vector<9x9xf32>
    %208 = math.exp %207 : vector<9x9xf32>
    %cst_107 = arith.constant dense<0.000000e+00> : vector<9xf32>
    %209 = vector.multi_reduction <add>, %208, %cst_107 [1] : vector<9x9xf32> to vector<9xf32>
    %210 = vector.shape_cast %209 : vector<9xf32> to vector<9x1xf32>
    %211 = tpu.reciprocal %210 {approx = true} : vector<9x1xf32> -> vector<9x1xf32>
    %212 = vector.broadcast %211 : vector<9x1xf32> to vector<9x9xf32>
    %213 = arith.mulf %208, %212 : vector<9x9xf32>
    %214 = arith.truncf %213 : vector<9x9xf32> to vector<9x9xbf16>
    %215 = arith.truncf %198 : vector<9x8xf32> to vector<9x8xbf16>
    %cst_108 = arith.constant dense<0.000000e+00> : vector<9x8xf32>
    %216 = tpu.matmul %214, %215, %cst_108 {dimension_numbers = #tpu.dot_dimension_numbers<[1], [0], [0], [1], [0, 0, 1, 1], [], []>} : vector<9x9xbf16>, vector<9x8xbf16>, vector<9x8xf32> -> vector<9x8xf32>
    %c3_109 = arith.constant 3 : index
    %c0_110 = arith.constant 0 : index
    %c0_111 = arith.constant 0 : index
    %217 = vector.load %arg5[%c3_109, %c0_110, %c0_111] : memref<8x8x32xbf16, #tpu.memory_space<vmem>>, vector<1x8x32xbf16>
    %218 = vector.shape_cast %217 : vector<1x8x32xbf16> to vector<8x32xbf16>
    %219 = arith.truncf %216 : vector<9x8xf32> to vector<9x8xbf16>
    %cst_112 = arith.constant dense<0.000000e+00> : vector<9x32xf32>
    %220 = tpu.matmul %219, %218, %cst_112 {dimension_numbers = #tpu.dot_dimension_numbers<[1], [0], [0], [1], [0, 0, 1, 1], [], []>} : vector<9x8xbf16>, vector<8x32xbf16>, vector<9x32xf32> -> vector<9x32xf32>
    %221 = arith.addf %189, %220 : vector<9x32xf32>
    %222 = arith.addf %64, %221 : vector<9x32xf32>
    %223 = vector.broadcast %67 : vector<1x32xf32> to vector<9x32xf32>
    %224 = arith.addf %222, %223 : vector<9x32xf32>
    %cst_113 = arith.constant dense<0.000000e+00> : vector<9xf32>
    %225 = vector.multi_reduction <add>, %224, %cst_113 [1] : vector<9x32xf32> to vector<9xf32>
    %226 = vector.shape_cast %225 : vector<9xf32> to vector<9x1xf32>
    %cst_114 = arith.constant 3.200000e+01 : f32
    %227 = vector.broadcast %cst_114 : f32 to vector<9x1xf32>
    %228 = arith.divf %226, %227 : vector<9x1xf32>
    %229 = vector.broadcast %228 : vector<9x1xf32> to vector<9x32xf32>
    %230 = arith.subf %224, %229 : vector<9x32xf32>
    %231 = arith.mulf %230, %230 : vector<9x32xf32>
    %cst_115 = arith.constant dense<0.000000e+00> : vector<9xf32>
    %232 = vector.multi_reduction <add>, %231, %cst_115 [1] : vector<9x32xf32> to vector<9xf32>
    %233 = vector.shape_cast %232 : vector<9xf32> to vector<9x1xf32>
    %cst_116 = arith.constant 3.200000e+01 : f32
    %234 = vector.broadcast %cst_116 : f32 to vector<9x1xf32>
    %235 = arith.divf %233, %234 : vector<9x1xf32>
    %236 = vector.broadcast %228 : vector<9x1xf32> to vector<9x32xf32>
    %237 = arith.subf %224, %236 : vector<9x32xf32>
    %cst_117 = arith.constant 9.99999974E-6 : f32
    %238 = vector.broadcast %cst_117 : f32 to vector<9x1xf32>
    %239 = arith.addf %235, %238 : vector<9x1xf32>
    %240 = math.rsqrt %239 : vector<9x1xf32>
    %241 = vector.broadcast %240 : vector<9x1xf32> to vector<9x32xf32>
    %242 = arith.mulf %237, %241 : vector<9x32xf32>
    %243 = vector.broadcast %68 : vector<1x32xf32> to vector<9x32xf32>
    %244 = arith.mulf %242, %243 : vector<9x32xf32>
    %245 = vector.broadcast %69 : vector<1x32xf32> to vector<9x32xf32>
    %246 = arith.addf %244, %245 : vector<9x32xf32>
    %c256 = arith.constant 256 : index
    %c0_118 = arith.constant 0 : index
    %247 = vector.load %arg3[%c256, %c0_118] : memref<672x128xbf16, #tpu.memory_space<vmem>>, vector<32x64xbf16>
    %248 = arith.truncf %246 : vector<9x32xf32> to vector<9x32xbf16>
    %cst_119 = arith.constant dense<0.000000e+00> : vector<9x64xf32>
    %249 = tpu.matmul %248, %247, %cst_119 {dimension_numbers = #tpu.dot_dimension_numbers<[1], [0], [0], [1], [0, 0, 1, 1], [], []>} : vector<9x32xbf16>, vector<32x64xbf16>, vector<9x64xf32> -> vector<9x64xf32>
    %250 = vector.broadcast %70 : vector<1x64xf32> to vector<9x64xf32>
    %251 = arith.addf %249, %250 : vector<9x64xf32>
    %cst_120 = arith.constant 5.000000e-01 : f32
    %252 = vector.broadcast %cst_120 : f32 to vector<9x64xf32>
    %253 = arith.mulf %252, %251 : vector<9x64xf32>
    %cst_121 = arith.constant 4.471500e-02 : f32
    %254 = vector.broadcast %cst_121 : f32 to vector<9x64xf32>
    %255 = arith.mulf %254, %251 : vector<9x64xf32>
    %256 = arith.mulf %255, %251 : vector<9x64xf32>
    %257 = arith.mulf %256, %251 : vector<9x64xf32>
    %258 = arith.addf %251, %257 : vector<9x64xf32>
    %cst_122 = arith.constant 0.797884583 : f32
    %259 = vector.broadcast %cst_122 : f32 to vector<9x64xf32>
    %260 = arith.mulf %259, %258 : vector<9x64xf32>
    %261 = math.tanh %260 : vector<9x64xf32>
    %cst_123 = arith.constant 1.000000e+00 : f32
    %262 = vector.broadcast %cst_123 : f32 to vector<9x64xf32>
    %263 = arith.addf %262, %261 : vector<9x64xf32>
    %264 = arith.mulf %253, %263 : vector<9x64xf32>
    %c288 = arith.constant 288 : index
    %c0_124 = arith.constant 0 : index
    %265 = vector.load %arg3[%c288, %c0_124] : memref<672x128xbf16, #tpu.memory_space<vmem>>, vector<64x32xbf16>
    %266 = arith.truncf %264 : vector<9x64xf32> to vector<9x64xbf16>
    %cst_125 = arith.constant dense<0.000000e+00> : vector<9x32xf32>
    %267 = tpu.matmul %266, %265, %cst_125 {dimension_numbers = #tpu.dot_dimension_numbers<[1], [0], [0], [1], [0, 0, 1, 1], [], []>} : vector<9x64xbf16>, vector<64x32xbf16>, vector<9x32xf32> -> vector<9x32xf32>
    %268 = vector.broadcast %71 : vector<1x32xf32> to vector<9x32xf32>
    %269 = arith.addf %267, %268 : vector<9x32xf32>
    %270 = arith.addf %224, %269 : vector<9x32xf32>
    %c32 = arith.constant 32 : index
    %c0_126 = arith.constant 0 : index
    %271 = vector.load %arg2[%c32, %c0_126] : memref<48x256xf32, #tpu.memory_space<vmem>>, vector<1x32xf32>
    %c33 = arith.constant 33 : index
    %c0_127 = arith.constant 0 : index
    %272 = vector.load %arg2[%c33, %c0_127] : memref<48x256xf32, #tpu.memory_space<vmem>>, vector<1x32xf32>
    %c34 = arith.constant 34 : index
    %c0_128 = arith.constant 0 : index
    %273 = vector.load %arg2[%c34, %c0_128] : memref<48x256xf32, #tpu.memory_space<vmem>>, vector<1x32xf32>
    %c35 = arith.constant 35 : index
    %c0_129 = arith.constant 0 : index
    %274 = vector.load %arg2[%c35, %c0_129] : memref<48x256xf32, #tpu.memory_space<vmem>>, vector<1x32xf32>
    %c36 = arith.constant 36 : index
    %c0_130 = arith.constant 0 : index
    %275 = vector.load %arg2[%c36, %c0_130] : memref<48x256xf32, #tpu.memory_space<vmem>>, vector<1x32xf32>
    %c37 = arith.constant 37 : index
    %c0_131 = arith.constant 0 : index
    %276 = vector.load %arg2[%c37, %c0_131] : memref<48x256xf32, #tpu.memory_space<vmem>>, vector<1x64xf32>
    %c38 = arith.constant 38 : index
    %c0_132 = arith.constant 0 : index
    %277 = vector.load %arg2[%c38, %c0_132] : memref<48x256xf32, #tpu.memory_space<vmem>>, vector<1x32xf32>
    %cst_133 = arith.constant dense<0.000000e+00> : vector<9xf32>
    %278 = vector.multi_reduction <add>, %270, %cst_133 [1] : vector<9x32xf32> to vector<9xf32>
    %279 = vector.shape_cast %278 : vector<9xf32> to vector<9x1xf32>
    %cst_134 = arith.constant 3.200000e+01 : f32
    %280 = vector.broadcast %cst_134 : f32 to vector<9x1xf32>
    %281 = arith.divf %279, %280 : vector<9x1xf32>
    %282 = vector.broadcast %281 : vector<9x1xf32> to vector<9x32xf32>
    %283 = arith.subf %270, %282 : vector<9x32xf32>
    %284 = arith.mulf %283, %283 : vector<9x32xf32>
    %cst_135 = arith.constant dense<0.000000e+00> : vector<9xf32>
    %285 = vector.multi_reduction <add>, %284, %cst_135 [1] : vector<9x32xf32> to vector<9xf32>
    %286 = vector.shape_cast %285 : vector<9xf32> to vector<9x1xf32>
    %cst_136 = arith.constant 3.200000e+01 : f32
    %287 = vector.broadcast %cst_136 : f32 to vector<9x1xf32>
    %288 = arith.divf %286, %287 : vector<9x1xf32>
    %289 = vector.broadcast %281 : vector<9x1xf32> to vector<9x32xf32>
    %290 = arith.subf %270, %289 : vector<9x32xf32>
    %cst_137 = arith.constant 9.99999974E-6 : f32
    %291 = vector.broadcast %cst_137 : f32 to vector<9x1xf32>
    %292 = arith.addf %288, %291 : vector<9x1xf32>
    %293 = math.rsqrt %292 : vector<9x1xf32>
    %294 = vector.broadcast %293 : vector<9x1xf32> to vector<9x32xf32>
    %295 = arith.mulf %290, %294 : vector<9x32xf32>
    %296 = vector.broadcast %271 : vector<1x32xf32> to vector<9x32xf32>
    %297 = arith.mulf %295, %296 : vector<9x32xf32>
    %298 = vector.broadcast %272 : vector<1x32xf32> to vector<9x32xf32>
    %299 = arith.addf %297, %298 : vector<9x32xf32>
    %300 = arith.truncf %299 : vector<9x32xf32> to vector<9x32xbf16>
    %c12 = arith.constant 12 : index
    %c0_138 = arith.constant 0 : index
    %c0_139 = arith.constant 0 : index
    %301 = vector.load %arg4[%c12, %c0_138, %c0_139] : memref<24x32x8xbf16, #tpu.memory_space<vmem>>, vector<1x32x8xbf16>
    %302 = vector.shape_cast %301 : vector<1x32x8xbf16> to vector<32x8xbf16>
    %cst_140 = arith.constant dense<0.000000e+00> : vector<9x8xf32>
    %303 = tpu.matmul %300, %302, %cst_140 {dimension_numbers = #tpu.dot_dimension_numbers<[1], [0], [0], [1], [0, 0, 1, 1], [], []>} : vector<9x32xbf16>, vector<32x8xbf16>, vector<9x8xf32> -> vector<9x8xf32>
    %c13 = arith.constant 13 : index
    %c0_141 = arith.constant 0 : index
    %c0_142 = arith.constant 0 : index
    %304 = vector.load %arg4[%c13, %c0_141, %c0_142] : memref<24x32x8xbf16, #tpu.memory_space<vmem>>, vector<1x32x8xbf16>
    %305 = vector.shape_cast %304 : vector<1x32x8xbf16> to vector<32x8xbf16>
    %cst_143 = arith.constant dense<0.000000e+00> : vector<9x8xf32>
    %306 = tpu.matmul %300, %305, %cst_143 {dimension_numbers = #tpu.dot_dimension_numbers<[1], [0], [0], [1], [0, 0, 1, 1], [], []>} : vector<9x32xbf16>, vector<32x8xbf16>, vector<9x8xf32> -> vector<9x8xf32>
    %c14 = arith.constant 14 : index
    %c0_144 = arith.constant 0 : index
    %c0_145 = arith.constant 0 : index
    %307 = vector.load %arg4[%c14, %c0_144, %c0_145] : memref<24x32x8xbf16, #tpu.memory_space<vmem>>, vector<1x32x8xbf16>
    %308 = vector.shape_cast %307 : vector<1x32x8xbf16> to vector<32x8xbf16>
    %cst_146 = arith.constant dense<0.000000e+00> : vector<9x8xf32>
    %309 = tpu.matmul %300, %308, %cst_146 {dimension_numbers = #tpu.dot_dimension_numbers<[1], [0], [0], [1], [0, 0, 1, 1], [], []>} : vector<9x32xbf16>, vector<32x8xbf16>, vector<9x8xf32> -> vector<9x8xf32>
    %310 = arith.truncf %303 : vector<9x8xf32> to vector<9x8xbf16>
    %311 = arith.truncf %306 : vector<9x8xf32> to vector<9x8xbf16>
    %cst_147 = arith.constant dense<0.000000e+00> : vector<9x9xf32>
    %312 = tpu.matmul %310, %311, %cst_147 {dimension_numbers = #tpu.dot_dimension_numbers<[1], [1], [0], [0], [0, 0, 1, 0], [], []>} : vector<9x8xbf16>, vector<9x8xbf16>, vector<9x9xf32> -> vector<9x9xf32>
    %cst_148 = arith.constant 0.353553385 : f32
    %313 = vector.broadcast %cst_148 : f32 to vector<9x9xf32>
    %314 = arith.mulf %312, %313 : vector<9x9xf32>
    %cst_149 = arith.constant dense<0xFF800000> : vector<9xf32>
    %315 = vector.multi_reduction <maximumf>, %314, %cst_149 [1] : vector<9x9xf32> to vector<9xf32>
    %316 = vector.shape_cast %315 : vector<9xf32> to vector<9x1xf32>
    %317 = vector.broadcast %316 : vector<9x1xf32> to vector<9x9xf32>
    %318 = arith.subf %314, %317 : vector<9x9xf32>
    %319 = math.exp %318 : vector<9x9xf32>
    %cst_150 = arith.constant dense<0.000000e+00> : vector<9xf32>
    %320 = vector.multi_reduction <add>, %319, %cst_150 [1] : vector<9x9xf32> to vector<9xf32>
    %321 = vector.shape_cast %320 : vector<9xf32> to vector<9x1xf32>
    %322 = tpu.reciprocal %321 {approx = true} : vector<9x1xf32> -> vector<9x1xf32>
    %323 = vector.broadcast %322 : vector<9x1xf32> to vector<9x9xf32>
    %324 = arith.mulf %319, %323 : vector<9x9xf32>
    %325 = arith.truncf %324 : vector<9x9xf32> to vector<9x9xbf16>
    %326 = arith.truncf %309 : vector<9x8xf32> to vector<9x8xbf16>
    %cst_151 = arith.constant dense<0.000000e+00> : vector<9x8xf32>
    %327 = tpu.matmul %325, %326, %cst_151 {dimension_numbers = #tpu.dot_dimension_numbers<[1], [0], [0], [1], [0, 0, 1, 1], [], []>} : vector<9x9xbf16>, vector<9x8xbf16>, vector<9x8xf32> -> vector<9x8xf32>
    %c4_152 = arith.constant 4 : index
    %c0_153 = arith.constant 0 : index
    %c0_154 = arith.constant 0 : index
    %328 = vector.load %arg5[%c4_152, %c0_153, %c0_154] : memref<8x8x32xbf16, #tpu.memory_space<vmem>>, vector<1x8x32xbf16>
    %329 = vector.shape_cast %328 : vector<1x8x32xbf16> to vector<8x32xbf16>
    %330 = arith.truncf %327 : vector<9x8xf32> to vector<9x8xbf16>
    %cst_155 = arith.constant dense<0.000000e+00> : vector<9x32xf32>
    %331 = tpu.matmul %330, %329, %cst_155 {dimension_numbers = #tpu.dot_dimension_numbers<[1], [0], [0], [1], [0, 0, 1, 1], [], []>} : vector<9x8xbf16>, vector<8x32xbf16>, vector<9x32xf32> -> vector<9x32xf32>
    %c15 = arith.constant 15 : index
    %c0_156 = arith.constant 0 : index
    %c0_157 = arith.constant 0 : index
    %332 = vector.load %arg4[%c15, %c0_156, %c0_157] : memref<24x32x8xbf16, #tpu.memory_space<vmem>>, vector<1x32x8xbf16>
    %333 = vector.shape_cast %332 : vector<1x32x8xbf16> to vector<32x8xbf16>
    %cst_158 = arith.constant dense<0.000000e+00> : vector<9x8xf32>
    %334 = tpu.matmul %300, %333, %cst_158 {dimension_numbers = #tpu.dot_dimension_numbers<[1], [0], [0], [1], [0, 0, 1, 1], [], []>} : vector<9x32xbf16>, vector<32x8xbf16>, vector<9x8xf32> -> vector<9x8xf32>
    %c16 = arith.constant 16 : index
    %c0_159 = arith.constant 0 : index
    %c0_160 = arith.constant 0 : index
    %335 = vector.load %arg4[%c16, %c0_159, %c0_160] : memref<24x32x8xbf16, #tpu.memory_space<vmem>>, vector<1x32x8xbf16>
    %336 = vector.shape_cast %335 : vector<1x32x8xbf16> to vector<32x8xbf16>
    %cst_161 = arith.constant dense<0.000000e+00> : vector<9x8xf32>
    %337 = tpu.matmul %300, %336, %cst_161 {dimension_numbers = #tpu.dot_dimension_numbers<[1], [0], [0], [1], [0, 0, 1, 1], [], []>} : vector<9x32xbf16>, vector<32x8xbf16>, vector<9x8xf32> -> vector<9x8xf32>
    %c17 = arith.constant 17 : index
    %c0_162 = arith.constant 0 : index
    %c0_163 = arith.constant 0 : index
    %338 = vector.load %arg4[%c17, %c0_162, %c0_163] : memref<24x32x8xbf16, #tpu.memory_space<vmem>>, vector<1x32x8xbf16>
    %339 = vector.shape_cast %338 : vector<1x32x8xbf16> to vector<32x8xbf16>
    %cst_164 = arith.constant dense<0.000000e+00> : vector<9x8xf32>
    %340 = tpu.matmul %300, %339, %cst_164 {dimension_numbers = #tpu.dot_dimension_numbers<[1], [0], [0], [1], [0, 0, 1, 1], [], []>} : vector<9x32xbf16>, vector<32x8xbf16>, vector<9x8xf32> -> vector<9x8xf32>
    %341 = arith.truncf %334 : vector<9x8xf32> to vector<9x8xbf16>
    %342 = arith.truncf %337 : vector<9x8xf32> to vector<9x8xbf16>
    %cst_165 = arith.constant dense<0.000000e+00> : vector<9x9xf32>
    %343 = tpu.matmul %341, %342, %cst_165 {dimension_numbers = #tpu.dot_dimension_numbers<[1], [1], [0], [0], [0, 0, 1, 0], [], []>} : vector<9x8xbf16>, vector<9x8xbf16>, vector<9x9xf32> -> vector<9x9xf32>
    %cst_166 = arith.constant 0.353553385 : f32
    %344 = vector.broadcast %cst_166 : f32 to vector<9x9xf32>
    %345 = arith.mulf %343, %344 : vector<9x9xf32>
    %cst_167 = arith.constant dense<0xFF800000> : vector<9xf32>
    %346 = vector.multi_reduction <maximumf>, %345, %cst_167 [1] : vector<9x9xf32> to vector<9xf32>
    %347 = vector.shape_cast %346 : vector<9xf32> to vector<9x1xf32>
    %348 = vector.broadcast %347 : vector<9x1xf32> to vector<9x9xf32>
    %349 = arith.subf %345, %348 : vector<9x9xf32>
    %350 = math.exp %349 : vector<9x9xf32>
    %cst_168 = arith.constant dense<0.000000e+00> : vector<9xf32>
    %351 = vector.multi_reduction <add>, %350, %cst_168 [1] : vector<9x9xf32> to vector<9xf32>
    %352 = vector.shape_cast %351 : vector<9xf32> to vector<9x1xf32>
    %353 = tpu.reciprocal %352 {approx = true} : vector<9x1xf32> -> vector<9x1xf32>
    %354 = vector.broadcast %353 : vector<9x1xf32> to vector<9x9xf32>
    %355 = arith.mulf %350, %354 : vector<9x9xf32>
    %356 = arith.truncf %355 : vector<9x9xf32> to vector<9x9xbf16>
    %357 = arith.truncf %340 : vector<9x8xf32> to vector<9x8xbf16>
    %cst_169 = arith.constant dense<0.000000e+00> : vector<9x8xf32>
    %358 = tpu.matmul %356, %357, %cst_169 {dimension_numbers = #tpu.dot_dimension_numbers<[1], [0], [0], [1], [0, 0, 1, 1], [], []>} : vector<9x9xbf16>, vector<9x8xbf16>, vector<9x8xf32> -> vector<9x8xf32>
    %c5_170 = arith.constant 5 : index
    %c0_171 = arith.constant 0 : index
    %c0_172 = arith.constant 0 : index
    %359 = vector.load %arg5[%c5_170, %c0_171, %c0_172] : memref<8x8x32xbf16, #tpu.memory_space<vmem>>, vector<1x8x32xbf16>
    %360 = vector.shape_cast %359 : vector<1x8x32xbf16> to vector<8x32xbf16>
    %361 = arith.truncf %358 : vector<9x8xf32> to vector<9x8xbf16>
    %cst_173 = arith.constant dense<0.000000e+00> : vector<9x32xf32>
    %362 = tpu.matmul %361, %360, %cst_173 {dimension_numbers = #tpu.dot_dimension_numbers<[1], [0], [0], [1], [0, 0, 1, 1], [], []>} : vector<9x8xbf16>, vector<8x32xbf16>, vector<9x32xf32> -> vector<9x32xf32>
    %363 = arith.addf %331, %362 : vector<9x32xf32>
    %c18 = arith.constant 18 : index
    %c0_174 = arith.constant 0 : index
    %c0_175 = arith.constant 0 : index
    %364 = vector.load %arg4[%c18, %c0_174, %c0_175] : memref<24x32x8xbf16, #tpu.memory_space<vmem>>, vector<1x32x8xbf16>
    %365 = vector.shape_cast %364 : vector<1x32x8xbf16> to vector<32x8xbf16>
    %cst_176 = arith.constant dense<0.000000e+00> : vector<9x8xf32>
    %366 = tpu.matmul %300, %365, %cst_176 {dimension_numbers = #tpu.dot_dimension_numbers<[1], [0], [0], [1], [0, 0, 1, 1], [], []>} : vector<9x32xbf16>, vector<32x8xbf16>, vector<9x8xf32> -> vector<9x8xf32>
    %c19 = arith.constant 19 : index
    %c0_177 = arith.constant 0 : index
    %c0_178 = arith.constant 0 : index
    %367 = vector.load %arg4[%c19, %c0_177, %c0_178] : memref<24x32x8xbf16, #tpu.memory_space<vmem>>, vector<1x32x8xbf16>
    %368 = vector.shape_cast %367 : vector<1x32x8xbf16> to vector<32x8xbf16>
    %cst_179 = arith.constant dense<0.000000e+00> : vector<9x8xf32>
    %369 = tpu.matmul %300, %368, %cst_179 {dimension_numbers = #tpu.dot_dimension_numbers<[1], [0], [0], [1], [0, 0, 1, 1], [], []>} : vector<9x32xbf16>, vector<32x8xbf16>, vector<9x8xf32> -> vector<9x8xf32>
    %c20 = arith.constant 20 : index
    %c0_180 = arith.constant 0 : index
    %c0_181 = arith.constant 0 : index
    %370 = vector.load %arg4[%c20, %c0_180, %c0_181] : memref<24x32x8xbf16, #tpu.memory_space<vmem>>, vector<1x32x8xbf16>
    %371 = vector.shape_cast %370 : vector<1x32x8xbf16> to vector<32x8xbf16>
    %cst_182 = arith.constant dense<0.000000e+00> : vector<9x8xf32>
    %372 = tpu.matmul %300, %371, %cst_182 {dimension_numbers = #tpu.dot_dimension_numbers<[1], [0], [0], [1], [0, 0, 1, 1], [], []>} : vector<9x32xbf16>, vector<32x8xbf16>, vector<9x8xf32> -> vector<9x8xf32>
    %373 = arith.truncf %366 : vector<9x8xf32> to vector<9x8xbf16>
    %374 = arith.truncf %369 : vector<9x8xf32> to vector<9x8xbf16>
    %cst_183 = arith.constant dense<0.000000e+00> : vector<9x9xf32>
    %375 = tpu.matmul %373, %374, %cst_183 {dimension_numbers = #tpu.dot_dimension_numbers<[1], [1], [0], [0], [0, 0, 1, 0], [], []>} : vector<9x8xbf16>, vector<9x8xbf16>, vector<9x9xf32> -> vector<9x9xf32>
    %cst_184 = arith.constant 0.353553385 : f32
    %376 = vector.broadcast %cst_184 : f32 to vector<9x9xf32>
    %377 = arith.mulf %375, %376 : vector<9x9xf32>
    %cst_185 = arith.constant dense<0xFF800000> : vector<9xf32>
    %378 = vector.multi_reduction <maximumf>, %377, %cst_185 [1] : vector<9x9xf32> to vector<9xf32>
    %379 = vector.shape_cast %378 : vector<9xf32> to vector<9x1xf32>
    %380 = vector.broadcast %379 : vector<9x1xf32> to vector<9x9xf32>
    %381 = arith.subf %377, %380 : vector<9x9xf32>
    %382 = math.exp %381 : vector<9x9xf32>
    %cst_186 = arith.constant dense<0.000000e+00> : vector<9xf32>
    %383 = vector.multi_reduction <add>, %382, %cst_186 [1] : vector<9x9xf32> to vector<9xf32>
    %384 = vector.shape_cast %383 : vector<9xf32> to vector<9x1xf32>
    %385 = tpu.reciprocal %384 {approx = true} : vector<9x1xf32> -> vector<9x1xf32>
    %386 = vector.broadcast %385 : vector<9x1xf32> to vector<9x9xf32>
    %387 = arith.mulf %382, %386 : vector<9x9xf32>
    %388 = arith.truncf %387 : vector<9x9xf32> to vector<9x9xbf16>
    %389 = arith.truncf %372 : vector<9x8xf32> to vector<9x8xbf16>
    %cst_187 = arith.constant dense<0.000000e+00> : vector<9x8xf32>
    %390 = tpu.matmul %388, %389, %cst_187 {dimension_numbers = #tpu.dot_dimension_numbers<[1], [0], [0], [1], [0, 0, 1, 1], [], []>} : vector<9x9xbf16>, vector<9x8xbf16>, vector<9x8xf32> -> vector<9x8xf32>
    %c6_188 = arith.constant 6 : index
    %c0_189 = arith.constant 0 : index
    %c0_190 = arith.constant 0 : index
    %391 = vector.load %arg5[%c6_188, %c0_189, %c0_190] : memref<8x8x32xbf16, #tpu.memory_space<vmem>>, vector<1x8x32xbf16>
    %392 = vector.shape_cast %391 : vector<1x8x32xbf16> to vector<8x32xbf16>
    %393 = arith.truncf %390 : vector<9x8xf32> to vector<9x8xbf16>
    %cst_191 = arith.constant dense<0.000000e+00> : vector<9x32xf32>
    %394 = tpu.matmul %393, %392, %cst_191 {dimension_numbers = #tpu.dot_dimension_numbers<[1], [0], [0], [1], [0, 0, 1, 1], [], []>} : vector<9x8xbf16>, vector<8x32xbf16>, vector<9x32xf32> -> vector<9x32xf32>
    %395 = arith.addf %363, %394 : vector<9x32xf32>
    %c21 = arith.constant 21 : index
    %c0_192 = arith.constant 0 : index
    %c0_193 = arith.constant 0 : index
    %396 = vector.load %arg4[%c21, %c0_192, %c0_193] : memref<24x32x8xbf16, #tpu.memory_space<vmem>>, vector<1x32x8xbf16>
    %397 = vector.shape_cast %396 : vector<1x32x8xbf16> to vector<32x8xbf16>
    %cst_194 = arith.constant dense<0.000000e+00> : vector<9x8xf32>
    %398 = tpu.matmul %300, %397, %cst_194 {dimension_numbers = #tpu.dot_dimension_numbers<[1], [0], [0], [1], [0, 0, 1, 1], [], []>} : vector<9x32xbf16>, vector<32x8xbf16>, vector<9x8xf32> -> vector<9x8xf32>
    %c22 = arith.constant 22 : index
    %c0_195 = arith.constant 0 : index
    %c0_196 = arith.constant 0 : index
    %399 = vector.load %arg4[%c22, %c0_195, %c0_196] : memref<24x32x8xbf16, #tpu.memory_space<vmem>>, vector<1x32x8xbf16>
    %400 = vector.shape_cast %399 : vector<1x32x8xbf16> to vector<32x8xbf16>
    %cst_197 = arith.constant dense<0.000000e+00> : vector<9x8xf32>
    %401 = tpu.matmul %300, %400, %cst_197 {dimension_numbers = #tpu.dot_dimension_numbers<[1], [0], [0], [1], [0, 0, 1, 1], [], []>} : vector<9x32xbf16>, vector<32x8xbf16>, vector<9x8xf32> -> vector<9x8xf32>
    %c23 = arith.constant 23 : index
    %c0_198 = arith.constant 0 : index
    %c0_199 = arith.constant 0 : index
    %402 = vector.load %arg4[%c23, %c0_198, %c0_199] : memref<24x32x8xbf16, #tpu.memory_space<vmem>>, vector<1x32x8xbf16>
    %403 = vector.shape_cast %402 : vector<1x32x8xbf16> to vector<32x8xbf16>
    %cst_200 = arith.constant dense<0.000000e+00> : vector<9x8xf32>
    %404 = tpu.matmul %300, %403, %cst_200 {dimension_numbers = #tpu.dot_dimension_numbers<[1], [0], [0], [1], [0, 0, 1, 1], [], []>} : vector<9x32xbf16>, vector<32x8xbf16>, vector<9x8xf32> -> vector<9x8xf32>
    %405 = arith.truncf %398 : vector<9x8xf32> to vector<9x8xbf16>
    %406 = arith.truncf %401 : vector<9x8xf32> to vector<9x8xbf16>
    %cst_201 = arith.constant dense<0.000000e+00> : vector<9x9xf32>
    %407 = tpu.matmul %405, %406, %cst_201 {dimension_numbers = #tpu.dot_dimension_numbers<[1], [1], [0], [0], [0, 0, 1, 0], [], []>} : vector<9x8xbf16>, vector<9x8xbf16>, vector<9x9xf32> -> vector<9x9xf32>
    %cst_202 = arith.constant 0.353553385 : f32
    %408 = vector.broadcast %cst_202 : f32 to vector<9x9xf32>
    %409 = arith.mulf %407, %408 : vector<9x9xf32>
    %cst_203 = arith.constant dense<0xFF800000> : vector<9xf32>
    %410 = vector.multi_reduction <maximumf>, %409, %cst_203 [1] : vector<9x9xf32> to vector<9xf32>
    %411 = vector.shape_cast %410 : vector<9xf32> to vector<9x1xf32>
    %412 = vector.broadcast %411 : vector<9x1xf32> to vector<9x9xf32>
    %413 = arith.subf %409, %412 : vector<9x9xf32>
    %414 = math.exp %413 : vector<9x9xf32>
    %cst_204 = arith.constant dense<0.000000e+00> : vector<9xf32>
    %415 = vector.multi_reduction <add>, %414, %cst_204 [1] : vector<9x9xf32> to vector<9xf32>
    %416 = vector.shape_cast %415 : vector<9xf32> to vector<9x1xf32>
    %417 = tpu.reciprocal %416 {approx = true} : vector<9x1xf32> -> vector<9x1xf32>
    %418 = vector.broadcast %417 : vector<9x1xf32> to vector<9x9xf32>
    %419 = arith.mulf %414, %418 : vector<9x9xf32>
    %420 = arith.truncf %419 : vector<9x9xf32> to vector<9x9xbf16>
    %421 = arith.truncf %404 : vector<9x8xf32> to vector<9x8xbf16>
    %cst_205 = arith.constant dense<0.000000e+00> : vector<9x8xf32>
    %422 = tpu.matmul %420, %421, %cst_205 {dimension_numbers = #tpu.dot_dimension_numbers<[1], [0], [0], [1], [0, 0, 1, 1], [], []>} : vector<9x9xbf16>, vector<9x8xbf16>, vector<9x8xf32> -> vector<9x8xf32>
    %c7_206 = arith.constant 7 : index
    %c0_207 = arith.constant 0 : index
    %c0_208 = arith.constant 0 : index
    %423 = vector.load %arg5[%c7_206, %c0_207, %c0_208] : memref<8x8x32xbf16, #tpu.memory_space<vmem>>, vector<1x8x32xbf16>
    %424 = vector.shape_cast %423 : vector<1x8x32xbf16> to vector<8x32xbf16>
    %425 = arith.truncf %422 : vector<9x8xf32> to vector<9x8xbf16>
    %cst_209 = arith.constant dense<0.000000e+00> : vector<9x32xf32>
    %426 = tpu.matmul %425, %424, %cst_209 {dimension_numbers = #tpu.dot_dimension_numbers<[1], [0], [0], [1], [0, 0, 1, 1], [], []>} : vector<9x8xbf16>, vector<8x32xbf16>, vector<9x32xf32> -> vector<9x32xf32>
    %427 = arith.addf %395, %426 : vector<9x32xf32>
    %428 = arith.addf %270, %427 : vector<9x32xf32>
    %429 = vector.broadcast %273 : vector<1x32xf32> to vector<9x32xf32>
    %430 = arith.addf %428, %429 : vector<9x32xf32>
    %cst_210 = arith.constant dense<0.000000e+00> : vector<9xf32>
    %431 = vector.multi_reduction <add>, %430, %cst_210 [1] : vector<9x32xf32> to vector<9xf32>
    %432 = vector.shape_cast %431 : vector<9xf32> to vector<9x1xf32>
    %cst_211 = arith.constant 3.200000e+01 : f32
    %433 = vector.broadcast %cst_211 : f32 to vector<9x1xf32>
    %434 = arith.divf %432, %433 : vector<9x1xf32>
    %435 = vector.broadcast %434 : vector<9x1xf32> to vector<9x32xf32>
    %436 = arith.subf %430, %435 : vector<9x32xf32>
    %437 = arith.mulf %436, %436 : vector<9x32xf32>
    %cst_212 = arith.constant dense<0.000000e+00> : vector<9xf32>
    %438 = vector.multi_reduction <add>, %437, %cst_212 [1] : vector<9x32xf32> to vector<9xf32>
    %439 = vector.shape_cast %438 : vector<9xf32> to vector<9x1xf32>
    %cst_213 = arith.constant 3.200000e+01 : f32
    %440 = vector.broadcast %cst_213 : f32 to vector<9x1xf32>
    %441 = arith.divf %439, %440 : vector<9x1xf32>
    %442 = vector.broadcast %434 : vector<9x1xf32> to vector<9x32xf32>
    %443 = arith.subf %430, %442 : vector<9x32xf32>
    %cst_214 = arith.constant 9.99999974E-6 : f32
    %444 = vector.broadcast %cst_214 : f32 to vector<9x1xf32>
    %445 = arith.addf %441, %444 : vector<9x1xf32>
    %446 = math.rsqrt %445 : vector<9x1xf32>
    %447 = vector.broadcast %446 : vector<9x1xf32> to vector<9x32xf32>
    %448 = arith.mulf %443, %447 : vector<9x32xf32>
    %449 = vector.broadcast %274 : vector<1x32xf32> to vector<9x32xf32>
    %450 = arith.mulf %448, %449 : vector<9x32xf32>
    %451 = vector.broadcast %275 : vector<1x32xf32> to vector<9x32xf32>
    %452 = arith.addf %450, %451 : vector<9x32xf32>
    %c352 = arith.constant 352 : index
    %c0_215 = arith.constant 0 : index
    %453 = vector.load %arg3[%c352, %c0_215] : memref<672x128xbf16, #tpu.memory_space<vmem>>, vector<32x64xbf16>
    %454 = arith.truncf %452 : vector<9x32xf32> to vector<9x32xbf16>
    %cst_216 = arith.constant dense<0.000000e+00> : vector<9x64xf32>
    %455 = tpu.matmul %454, %453, %cst_216 {dimension_numbers = #tpu.dot_dimension_numbers<[1], [0], [0], [1], [0, 0, 1, 1], [], []>} : vector<9x32xbf16>, vector<32x64xbf16>, vector<9x64xf32> -> vector<9x64xf32>
    %456 = vector.broadcast %276 : vector<1x64xf32> to vector<9x64xf32>
    %457 = arith.addf %455, %456 : vector<9x64xf32>
    %cst_217 = arith.constant 5.000000e-01 : f32
    %458 = vector.broadcast %cst_217 : f32 to vector<9x64xf32>
    %459 = arith.mulf %458, %457 : vector<9x64xf32>
    %cst_218 = arith.constant 4.471500e-02 : f32
    %460 = vector.broadcast %cst_218 : f32 to vector<9x64xf32>
    %461 = arith.mulf %460, %457 : vector<9x64xf32>
    %462 = arith.mulf %461, %457 : vector<9x64xf32>
    %463 = arith.mulf %462, %457 : vector<9x64xf32>
    %464 = arith.addf %457, %463 : vector<9x64xf32>
    %cst_219 = arith.constant 0.797884583 : f32
    %465 = vector.broadcast %cst_219 : f32 to vector<9x64xf32>
    %466 = arith.mulf %465, %464 : vector<9x64xf32>
    %467 = math.tanh %466 : vector<9x64xf32>
    %cst_220 = arith.constant 1.000000e+00 : f32
    %468 = vector.broadcast %cst_220 : f32 to vector<9x64xf32>
    %469 = arith.addf %468, %467 : vector<9x64xf32>
    %470 = arith.mulf %459, %469 : vector<9x64xf32>
    %c384 = arith.constant 384 : index
    %c0_221 = arith.constant 0 : index
    %471 = vector.load %arg3[%c384, %c0_221] : memref<672x128xbf16, #tpu.memory_space<vmem>>, vector<64x32xbf16>
    %472 = arith.truncf %470 : vector<9x64xf32> to vector<9x64xbf16>
    %cst_222 = arith.constant dense<0.000000e+00> : vector<9x32xf32>
    %473 = tpu.matmul %472, %471, %cst_222 {dimension_numbers = #tpu.dot_dimension_numbers<[1], [0], [0], [1], [0, 0, 1, 1], [], []>} : vector<9x64xbf16>, vector<64x32xbf16>, vector<9x32xf32> -> vector<9x32xf32>
    %474 = vector.broadcast %277 : vector<1x32xf32> to vector<9x32xf32>
    %475 = arith.addf %473, %474 : vector<9x32xf32>
    %476 = arith.addf %430, %475 : vector<9x32xf32>
    %c6_223 = arith.constant 6 : index
    %c0_224 = arith.constant 0 : index
    %477 = vector.load %arg2[%c6_223, %c0_224] : memref<48x256xf32, #tpu.memory_space<vmem>>, vector<1x32xf32>
    %c7_225 = arith.constant 7 : index
    %c0_226 = arith.constant 0 : index
    %478 = vector.load %arg2[%c7_225, %c0_226] : memref<48x256xf32, #tpu.memory_space<vmem>>, vector<1x32xf32>
    %cst_227 = arith.constant dense<0.000000e+00> : vector<9xf32>
    %479 = vector.multi_reduction <add>, %476, %cst_227 [1] : vector<9x32xf32> to vector<9xf32>
    %480 = vector.shape_cast %479 : vector<9xf32> to vector<9x1xf32>
    %cst_228 = arith.constant 3.200000e+01 : f32
    %481 = vector.broadcast %cst_228 : f32 to vector<9x1xf32>
    %482 = arith.divf %480, %481 : vector<9x1xf32>
    %483 = vector.broadcast %482 : vector<9x1xf32> to vector<9x32xf32>
    %484 = arith.subf %476, %483 : vector<9x32xf32>
    %485 = arith.mulf %484, %484 : vector<9x32xf32>
    %cst_229 = arith.constant dense<0.000000e+00> : vector<9xf32>
    %486 = vector.multi_reduction <add>, %485, %cst_229 [1] : vector<9x32xf32> to vector<9xf32>
    %487 = vector.shape_cast %486 : vector<9xf32> to vector<9x1xf32>
    %cst_230 = arith.constant 3.200000e+01 : f32
    %488 = vector.broadcast %cst_230 : f32 to vector<9x1xf32>
    %489 = arith.divf %487, %488 : vector<9x1xf32>
    %490 = vector.broadcast %482 : vector<9x1xf32> to vector<9x32xf32>
    %491 = arith.subf %476, %490 : vector<9x32xf32>
    %cst_231 = arith.constant 9.99999974E-6 : f32
    %492 = vector.broadcast %cst_231 : f32 to vector<9x1xf32>
    %493 = arith.addf %489, %492 : vector<9x1xf32>
    %494 = math.rsqrt %493 : vector<9x1xf32>
    %495 = vector.broadcast %494 : vector<9x1xf32> to vector<9x32xf32>
    %496 = arith.mulf %491, %495 : vector<9x32xf32>
    %497 = vector.broadcast %477 : vector<1x32xf32> to vector<9x32xf32>
    %498 = arith.mulf %496, %497 : vector<9x32xf32>
    %499 = vector.broadcast %478 : vector<1x32xf32> to vector<9x32xf32>
    %500 = arith.addf %498, %499 : vector<9x32xf32>
    %cst_232 = arith.constant dense<0.000000e+00> : vector<32xf32>
    %501 = vector.multi_reduction <add>, %500, %cst_232 [0] : vector<9x32xf32> to vector<32xf32>
    %502 = vector.shape_cast %501 : vector<32xf32> to vector<1x32xf32>
    %cst_233 = arith.constant 9.000000e+00 : f32
    %503 = vector.broadcast %cst_233 : f32 to vector<1x32xf32>
    %504 = arith.divf %502, %503 : vector<1x32xf32>
    %c40 = arith.constant 40 : index
    %c0_234 = arith.constant 0 : index
    %505 = vector.load %arg2[%c40, %c0_234] : memref<48x256xf32, #tpu.memory_space<vmem>>, vector<1x128xf32>
    %c41 = arith.constant 41 : index
    %c0_235 = arith.constant 0 : index
    %506 = vector.load %arg2[%c41, %c0_235] : memref<48x256xf32, #tpu.memory_space<vmem>>, vector<1x64xf32>
    %c42 = arith.constant 42 : index
    %c0_236 = arith.constant 0 : index
    %507 = vector.load %arg2[%c42, %c0_236] : memref<48x256xf32, #tpu.memory_space<vmem>>, vector<1x128xf32>
    %c448 = arith.constant 448 : index
    %c0_237 = arith.constant 0 : index
    %508 = vector.load %arg3[%c448, %c0_237] : memref<672x128xbf16, #tpu.memory_space<vmem>>, vector<32x128xbf16>
    %509 = arith.truncf %504 : vector<1x32xf32> to vector<1x32xbf16>
    %cst_238 = arith.constant dense<0.000000e+00> : vector<1x128xf32>
    %510 = tpu.matmul %509, %508, %cst_238 {dimension_numbers = #tpu.dot_dimension_numbers<[1], [0], [0], [1], [0, 0, 1, 1], [], []>} : vector<1x32xbf16>, vector<32x128xbf16>, vector<1x128xf32> -> vector<1x128xf32>
    %511 = arith.addf %510, %505 : vector<1x128xf32>
    %cst_239 = arith.constant 5.000000e-01 : f32
    %512 = vector.broadcast %cst_239 : f32 to vector<1x128xf32>
    %513 = arith.mulf %512, %511 : vector<1x128xf32>
    %cst_240 = arith.constant 4.471500e-02 : f32
    %514 = vector.broadcast %cst_240 : f32 to vector<1x128xf32>
    %515 = arith.mulf %514, %511 : vector<1x128xf32>
    %516 = arith.mulf %515, %511 : vector<1x128xf32>
    %517 = arith.mulf %516, %511 : vector<1x128xf32>
    %518 = arith.addf %511, %517 : vector<1x128xf32>
    %cst_241 = arith.constant 0.797884583 : f32
    %519 = vector.broadcast %cst_241 : f32 to vector<1x128xf32>
    %520 = arith.mulf %519, %518 : vector<1x128xf32>
    %521 = math.tanh %520 : vector<1x128xf32>
    %cst_242 = arith.constant 1.000000e+00 : f32
    %522 = vector.broadcast %cst_242 : f32 to vector<1x128xf32>
    %523 = arith.addf %522, %521 : vector<1x128xf32>
    %524 = arith.mulf %513, %523 : vector<1x128xf32>
    %c480 = arith.constant 480 : index
    %c0_243 = arith.constant 0 : index
    %525 = vector.load %arg3[%c480, %c0_243] : memref<672x128xbf16, #tpu.memory_space<vmem>>, vector<128x64xbf16>
    %526 = arith.truncf %524 : vector<1x128xf32> to vector<1x128xbf16>
    %cst_244 = arith.constant dense<0.000000e+00> : vector<1x64xf32>
    %527 = tpu.matmul %526, %525, %cst_244 {dimension_numbers = #tpu.dot_dimension_numbers<[1], [0], [0], [1], [0, 0, 1, 1], [], []>} : vector<1x128xbf16>, vector<128x64xbf16>, vector<1x64xf32> -> vector<1x64xf32>
    %528 = arith.addf %527, %506 : vector<1x64xf32>
    %cst_245 = arith.constant 5.000000e-01 : f32
    %529 = vector.broadcast %cst_245 : f32 to vector<1x64xf32>
    %530 = arith.mulf %529, %528 : vector<1x64xf32>
    %cst_246 = arith.constant 4.471500e-02 : f32
    %531 = vector.broadcast %cst_246 : f32 to vector<1x64xf32>
    %532 = arith.mulf %531, %528 : vector<1x64xf32>
    %533 = arith.mulf %532, %528 : vector<1x64xf32>
    %534 = arith.mulf %533, %528 : vector<1x64xf32>
    %535 = arith.addf %528, %534 : vector<1x64xf32>
    %cst_247 = arith.constant 0.797884583 : f32
    %536 = vector.broadcast %cst_247 : f32 to vector<1x64xf32>
    %537 = arith.mulf %536, %535 : vector<1x64xf32>
    %538 = math.tanh %537 : vector<1x64xf32>
    %cst_248 = arith.constant 1.000000e+00 : f32
    %539 = vector.broadcast %cst_248 : f32 to vector<1x64xf32>
    %540 = arith.addf %539, %538 : vector<1x64xf32>
    %541 = arith.mulf %530, %540 : vector<1x64xf32>
    %c608 = arith.constant 608 : index
    %c0_249 = arith.constant 0 : index
    %542 = vector.load %arg3[%c608, %c0_249] : memref<672x128xbf16, #tpu.memory_space<vmem>>, vector<64x128xbf16>
    %543 = arith.truncf %541 : vector<1x64xf32> to vector<1x64xbf16>
    %cst_250 = arith.constant dense<0.000000e+00> : vector<1x128xf32>
    %544 = tpu.matmul %543, %542, %cst_250 {dimension_numbers = #tpu.dot_dimension_numbers<[1], [0], [0], [1], [0, 0, 1, 1], [], []>} : vector<1x64xbf16>, vector<64x128xbf16>, vector<1x128xf32> -> vector<1x128xf32>
    %545 = arith.addf %544, %507 : vector<1x128xf32>
    %c0_251 = arith.constant 0 : index
    %c0_252 = arith.constant 0 : index
    %c0_253 = arith.constant 0 : index
    %546 = vector.load %arg6[%c0_251, %c0_252, %c0_253] : memref<1x1x128xf32, #tpu.memory_space<vmem>>, vector<1x1x128xf32>
    %547 = vector.shape_cast %546 : vector<1x1x128xf32> to vector<1x128xf32>
    %548 = vector.shape_cast %545 : vector<1x128xf32> to vector<1x1x128xf32>
    tpu.vector_store %arg6[%c0_251, %c0_252, %c0_253], %548 {strides = array<i32>} : memref<1x1x128xf32, #tpu.memory_space<vmem>>, vector<1x1x128xf32>,
    return
  }
  func.func @transform_0(%arg0: i32) -> (i32, i32, i32) {
    %c0_i32 = arith.constant 0 : i32
    %c0_i32_0 = arith.constant 0 : i32
    %c0_i32_1 = arith.constant 0 : i32
    return %arg0, %c0_i32, %c0_i32_0 : i32, i32, i32
  }
  func.func @transform_1(%arg0: i32) -> (i32, i32) {
    %c0_i32 = arith.constant 0 : i32
    %c0_i32_0 = arith.constant 0 : i32
    %c0_i32_1 = arith.constant 0 : i32
    return %c0_i32, %c0_i32_0 : i32, i32
  }
  func.func @transform_2(%arg0: i32) -> (i32, i32) {
    %c0_i32 = arith.constant 0 : i32
    %c0_i32_0 = arith.constant 0 : i32
    %c0_i32_1 = arith.constant 0 : i32
    return %c0_i32, %c0_i32_0 : i32, i32
  }
  func.func @transform_3(%arg0: i32) -> (i32, i32, i32) {
    %c0_i32 = arith.constant 0 : i32
    %c0_i32_0 = arith.constant 0 : i32
    %c0_i32_1 = arith.constant 0 : i32
    %c0_i32_2 = arith.constant 0 : i32
    return %c0_i32, %c0_i32_0, %c0_i32_1 : i32, i32, i32
  }
  func.func @transform_4(%arg0: i32) -> (i32, i32, i32) {
    %c0_i32 = arith.constant 0 : i32
    %c0_i32_0 = arith.constant 0 : i32
    %c0_i32_1 = arith.constant 0 : i32
    %c0_i32_2 = arith.constant 0 : i32
    return %c0_i32, %c0_i32_0, %c0_i32_1 : i32, i32, i32
  }
  func.func @transform_5(%arg0: i32) -> (i32, i32, i32) {
    %c0_i32 = arith.constant 0 : i32
    %c0_i32_0 = arith.constant 0 : i32
    %c0_i32_1 = arith.constant 0 : i32
    return %arg0, %c0_i32, %c0_i32_0 : i32, i32, i32
  }
}

</mosaic_0001>

<llo_original>
// kernel: brain_age_forward.1
$region0: #{brain_age_forward.1}
  #allocation0 [shape = 'u32[]', space=smem, size = 0x4, offset = 0x4, fixed_abs, tag = 'smem constant byte address 0x4 - core index']
  #allocation1 [shape = 'u32[144,128]{1,0:T(1,128)}', space=vmem, size = 0x12000, scoped, tag = 'internal scratch']
  %s0 = inlined_call_operand.vmem [shape: f32[2,9,256], index: 0, kind: input, shape index: {}]
  %s1 = inlined_call_operand.vmem [shape: f32[48,256], index: 1, kind: input, shape index: {}]
  %s2 = inlined_call_operand.vmem [shape: bf16[672,128], index: 2, kind: input, shape index: {}]
  %s3 = inlined_call_operand.vmem [shape: bf16[24,32,8], index: 3, kind: input, shape index: {}]
  %s4 = inlined_call_operand.vmem [shape: bf16[8,8,32], index: 4, kind: input, shape index: {}]
  %s5 = inlined_call_operand.vmem [shape: f32[2,1,128], index: 5, kind: output, shape index: {}]
  %s6 = sld [smem:[#allocation0]]
  $region53: #{brain_age_forward.1} parent=0
    _
  %s8 = ssub.s32 1, %s6
  %s9 = scalar_select 0, %s8, %s6
  loop: start=0, step=1, limit=4
  $region2: #{brain_age_forward.1} parent=0 // loop_pre_header
    _
  $region3: #{brain_age_forward.1} parent=0 // loop_header
    %s11 = sphi 0, %s15
    %p12 = scmp.ge.s32.totalorder %s11, 4
    %s21 = sphi 0, %s23
    %s24 = sphi 0, %s21
    %s25 = sphi 0, %s24
    %s41 = sphi 0, %s25
    %s45 = sphi 0, %s45
    %s47 = sphi 0, %s45
    %s48 = sphi 0, %s47
    %s62 = sphi 0, %s48
    %s66 = sphi 0, %s66
    %s68 = sphi 0, %s66
    %s69 = sphi 0, %s68
    %s83 = sphi 0, %s69
    %s87 = sphi 0, %s87
    %s89 = sphi 0, %s87
    %s90 = sphi 0, %s89
    %s104 = sphi 0, %s90
    %s108 = sphi 0, %s108
    %s110 = sphi 0, %s108
    %s111 = sphi 0, %s110
    %s125 = sphi 0, %s111
    %s131 = sphi 0, %s133
    %s134 = sphi 0, %s131
    %s135 = sphi 0, %s134
    %s151 = sphi 0, %s135
  $region4: #{brain_age_forward.1} parent=0 // loop_header_branch
    %14 = sbr.rel (%p12) target = $region8
  $region5: #{brain_age_forward.1} parent=0 // loop_body
    %s16 = ssub.s32 %s11, 1
    %s17 = ssub.s32 %s11, 2
    %s18 = sadd.s32 %s11, 1
    %s19 = ssub.s32 %s11, %s18
    %p20 = scmp.eq.s32.totalorder %s19, 0
    %s22 = sadd.s32 %s21, 1
    %s23 = scalar_select %p20, %s21, %s22
    %p26 = pneg %p20
    %p27 = scmp.eq.s32.totalorder %s11, 1
    %p28 = por %p26, %p27
    %p29 = scmp.ne.s32.totalorder %s21, %s24
    %p30 = scmp.eq.s32.totalorder %s11, 0
    %p31 = por %p29, %p30
    %p32 = scmp.ne.s32.totalorder %s21, %s24
    %p33 = scmp.eq.s32.totalorder %s16, 1
    %p34 = por %p32, %p33
    %p35 = scmp.ne.s32.totalorder %s24, %s25
    %p36 = scmp.eq.s32.totalorder %s16, 0
    %p37 = por %p35, %p36
    %p38 = scmp.ne.s32.totalorder %s24, %s25
    %p39 = scmp.eq.s32.totalorder %s17, 1
    %p40 = por %p38, %p39
    %p42 = scmp.ne.s32.totalorder %s25, %s41
    %p43 = scmp.eq.s32.totalorder %s17, 0
    %p44 = por %p42, %p43
    %s46 = sadd.s32 %s45, 1
    %p49 = scmp.eq.s32.totalorder %s11, 1
    %p50 = scmp.ne.s32.totalorder %s45, %s47
    %p51 = scmp.eq.s32.totalorder %s11, 0
    %p52 = por %p50, %p51
    %p53 = scmp.ne.s32.totalorder %s45, %s47
    %p54 = scmp.eq.s32.totalorder %s16, 1
    %p55 = por %p53, %p54
    %p56 = scmp.ne.s32.totalorder %s47, %s48
    %p57 = scmp.eq.s32.totalorder %s16, 0
    %p58 = por %p56, %p57
    %p59 = scmp.ne.s32.totalorder %s47, %s48
    %p60 = scmp.eq.s32.totalorder %s17, 1
    %p61 = por %p59, %p60
    %p63 = scmp.ne.s32.totalorder %s48, %s62
    %p64 = scmp.eq.s32.totalorder %s17, 0
    %p65 = por %p63, %p64
    %s67 = sadd.s32 %s66, 1
    %p70 = scmp.eq.s32.totalorder %s11, 1
    %p71 = scmp.ne.s32.totalorder %s66, %s68
    %p72 = scmp.eq.s32.totalorder %s11, 0
    %p73 = por %p71, %p72
    %p74 = scmp.ne.s32.totalorder %s66, %s68
    %p75 = scmp.eq.s32.totalorder %s16, 1
    %p76 = por %p74, %p75
    %p77 = scmp.ne.s32.totalorder %s68, %s69
    %p78 = scmp.eq.s32.totalorder %s16, 0
    %p79 = por %p77, %p78
    %p80 = scmp.ne.s32.totalorder %s68, %s69
    %p81 = scmp.eq.s32.totalorder %s17, 1
    %p82 = por %p80, %p81
    %p84 = scmp.ne.s32.totalorder %s69, %s83
    %p85 = scmp.eq.s32.totalorder %s17, 0
    %p86 = por %p84, %p85
    %s88 = sadd.s32 %s87, 1
    %p91 = scmp.eq.s32.totalorder %s11, 1
    %p92 = scmp.ne.s32.totalorder %s87, %s89
    %p93 = scmp.eq.s32.totalorder %s11, 0
    %p94 = por %p92, %p93
    %p95 = scmp.ne.s32.totalorder %s87, %s89
    %p96 = scmp.eq.s32.totalorder %s16, 1
    %p97 = por %p95, %p96
    %p98 = scmp.ne.s32.totalorder %s89, %s90
    %p99 = scmp.eq.s32.totalorder %s16, 0
    %p100 = por %p98, %p99
    %p101 = scmp.ne.s32.totalorder %s89, %s90
    %p102 = scmp.eq.s32.totalorder %s17, 1
    %p103 = por %p101, %p102
    %p105 = scmp.ne.s32.totalorder %s90, %s104
    %p106 = scmp.eq.s32.totalorder %s17, 0
    %p107 = por %p105, %p106
    %s109 = sadd.s32 %s108, 1
    %p112 = scmp.eq.s32.totalorder %s11, 1
    %p113 = scmp.ne.s32.totalorder %s108, %s110
    %p114 = scmp.eq.s32.totalorder %s11, 0
    %p115 = por %p113, %p114
    %p116 = scmp.ne.s32.totalorder %s108, %s110
    %p117 = scmp.eq.s32.totalorder %s16, 1
    %p118 = por %p116, %p117
    %p119 = scmp.ne.s32.totalorder %s110, %s111
    %p120 = scmp.eq.s32.totalorder %s16, 0
    %p121 = por %p119, %p120
    %p122 = scmp.ne.s32.totalorder %s110, %s111
    %p123 = scmp.eq.s32.totalorder %s17, 1
    %p124 = por %p122, %p123
    %p126 = scmp.ne.s32.totalorder %s111, %s125
    %p127 = scmp.eq.s32.totalorder %s17, 0
    %p128 = por %p126, %p127
    %s129 = ssub.s32 %s11, %s18
    %p130 = scmp.eq.s32.totalorder %s129, 0
    %s132 = sadd.s32 %s131, 1
    %s133 = scalar_select %p130, %s131, %s132
    %p136 = pneg %p130
    %p137 = scmp.eq.s32.totalorder %s11, 1
    %p138 = por %p136, %p137
    %p139 = scmp.ne.s32.totalorder %s131, %s134
    %p140 = scmp.eq.s32.totalorder %s11, 0
    %p141 = por %p139, %p140
    %p142 = scmp.ne.s32.totalorder %s131, %s134
    %p143 = scmp.eq.s32.totalorder %s16, 1
    %p144 = por %p142, %p143
    %p145 = scmp.ne.s32.totalorder %s134, %s135
    %p146 = scmp.eq.s32.totalorder %s16, 0
    %p147 = por %p145, %p146
    %p148 = scmp.ne.s32.totalorder %s134, %s135
    %p149 = scmp.eq.s32.totalorder %s17, 1
    %p150 = por %p148, %p149
    %p152 = scmp.ne.s32.totalorder %s135, %s151
    %p153 = scmp.eq.s32.totalorder %s17, 0
    %p154 = por %p152, %p153
    %p155 = scmp.le.s32.totalorder 1, %s11
    %p156 = scmp.lt.s32.totalorder %s11, 3
    %p157 = pnand %p155, %p156
    %p158 = pneg %p157
    // Predicated region
    $region9: #{brain_age_forward.1} parent=5 // pred_check
      _
    $region10: #{brain_age_forward.1} parent=5 // pred_check_branch
      %160 = sbr.rel (%p157) target = $region12
    $region11: #{brain_age_forward.1} parent=5 // pred_region
      %s161 = ssub.s32 %s11, 1
      // Predicated region
      $region13: #{brain_age_forward.1} parent=11 // pred_check
        %p162 = pneg %p58
      $region14: #{brain_age_forward.1} parent=11 // pred_check_branch
        %164 = sbr.rel (%p162) target = $region16
      $region15: #{brain_age_forward.1} parent=11 // pred_region
        _
      $region16: #{brain_age_forward.1} parent=11 // pred_fallthru
        _
      // Predicated region
      $region17: #{brain_age_forward.1} parent=11 // pred_check
        %p165 = pneg %p79
      $region18: #{brain_age_forward.1} parent=11 // pred_check_branch
        %167 = sbr.rel (%p165) target = $region20
      $region19: #{brain_age_forward.1} parent=11 // pred_region
        _
      $region20: #{brain_age_forward.1} parent=11 // pred_fallthru
        _
      // Predicated region
      $region21: #{brain_age_forward.1} parent=11 // pred_check
        %p168 = pneg %p100
      $region22: #{brain_age_forward.1} parent=11 // pred_check_branch
        %170 = sbr.rel (%p168) target = $region24
      $region23: #{brain_age_forward.1} parent=11 // pred_region
        _
      $region24: #{brain_age_forward.1} parent=11 // pred_fallthru
        _
      // Predicated region
      $region25: #{brain_age_forward.1} parent=11 // pred_check
        %p171 = pneg %p121
      $region26: #{brain_age_forward.1} parent=11 // pred_check_branch
        %173 = sbr.rel (%p171) target = $region28
      $region27: #{brain_age_forward.1} parent=11 // pred_region
        _
      $region28: #{brain_age_forward.1} parent=11 // pred_fallthru
        _
    $region12: #{brain_age_forward.1} parent=5 // pred_fallthru
      _
    %p174 = scmp.lt.s32.totalorder %s11, 2
    // Predicated region
    $region29: #{brain_age_forward.1} parent=5 // pred_check
      %p175 = pneg %p174
    $region30: #{brain_age_forward.1} parent=5 // pred_check_branch
      %177 = sbr.rel (%p175) target = $region32
    $region31: #{brain_age_forward.1} parent=5 // pred_region
      // Predicated region
      $region33: #{brain_age_forward.1} parent=31 // pred_check
        %p178 = pneg %p31
      $region34: #{brain_age_forward.1} parent=31 // pred_check_branch
        %180 = sbr.rel (%p178) target = $region36
      $region35: #{brain_age_forward.1} parent=31 // pred_region
        %p181 = scmp.lt.s32.totalorder %s11, 1
        %s182 = scalar_select %p181, %s11, 1
        %s183 = smul.addr %s182, 4
        %s184 = smul.addr %s183, 8
        %s185 = scalar_lea.vmem %s0, %s184
      $region36: #{brain_age_forward.1} parent=31 // pred_fallthru
        _
    $region32: #{brain_age_forward.1} parent=5 // pred_fallthru
      _
    %p186 = scmp.le.s32.totalorder 1, %s11
    %p187 = scmp.lt.s32.totalorder %s11, 3
    %p188 = pnand %p186, %p187
    %p189 = pneg %p188
    // Predicated region
    $region37: #{brain_age_forward.1} parent=5 // pred_check
      _
    $region38: #{brain_age_forward.1} parent=5 // pred_check_branch
      %191 = sbr.rel (%p188) target = $region40
    $region39: #{brain_age_forward.1} parent=5 // pred_region
      %s192 = ssub.s32 %s11, 1
      %p193 = scmp.lt.s32.totalorder %s16, 1
      %s194 = scalar_select %p193, %s16, 1
      %s195 = smul.addr %s194, 4
      %s196 = smul.addr %s195, 8
      %s197 = scalar_lea.vmem %s0, %s196
      %p198 = pneg %p37
      %p199 = pneg %p34
      %p200 = pneg %p58
      %p201 = pneg %p55
      %p202 = pneg %p79
      %p203 = pneg %p76
      %p204 = pneg %p100
      %p205 = pneg %p97
      %p206 = pneg %p121
      %p207 = pneg %p118
      %p208 = pneg %p147
      %p209 = pneg %p144
      %p210 = scmp.lt.s32.totalorder %s16, 1
      %s211 = scalar_select %p210, %s16, 1
      %s212 = scalar_lea.vmem %s5, %s211
      %p213 = scmp.lt.s32.totalorder %s16, 1
      %s214 = scalar_select %p213, %s16, 1
      %s215 = smul.addr %s214, 4
      %s216 = smul.addr %s215, 8
      %s217 = scalar_lea.vmem %s0, %s216
      %p218 = scmp.lt.s32.totalorder %s16, 1
      %s219 = scalar_select %p218, %s16, 1
      %s220 = scalar_lea.vmem %s5, %s219
      %v222 = vld [vmem:[%s217] sm:$0xff]
      %v223 = vld [vmem:[%s217 + $0x8] sm:$0xff]
      %v224 = vld [vmem:[%s217 + $0x10] sm:$0x1]
      %v225 = vld [vmem:[%s217 + $0x18] sm:$0x1]
      %v226 = vld [vmem:[%s1] ss:$8 sm:$0x3]
      %s227 = scalar_lea.vmem %s1, 1
      %v228 = vld [vmem:[%s227] ss:$8 sm:$0x3]
      %v229 = vld [vmem:[%s1 + $0x2] ss:$0 sm:$0xff]
      %v230 = vld [vmem:[%s1 + $0x3] ss:$0 sm:$0xff]
      %v231 = vld [vmem:[%s1 + $0x4] ss:$0 sm:$0xff]
      %v232 = vld [vmem:[%s1 + $0x5] ss:$0 sm:$0xff]
      %v233 = vld [vmem:[%s1 + $0x10] sm:$0xff]
      %v234 = vld [vmem:[%s1 + $0x20] sm:$0x1]
      %v235 = vadd.f32 %v222, %v223
      %236 = vadd.xlane.f32.xlu0 %v235
      %v237 = vpop.xlane.xlu0 %236
      %vm238 = vcmask 1040384
      %v239 = vsel %vm238, %v224, 0.0
      %v240 = vsel %vm238, %v225, 0.0
      %v241 = vadd.f32 %v239, %v240
      %242 = vadd.xlane.f32.xlu0 %v241
      %v243 = vpop.xlane.xlu0 %242
      %v244 = vrcp.pop 256.0
      %v245 = vmul.f32 %v237, %v244
      %v246 = vmul.f32 %v243, %v244
      %v247 = vsub.f32 %v222, %v245
      %v248 = vsub.f32 %v223, %v245
      %v249 = vsub.f32 %v224, %v246
      %v250 = vsub.f32 %v225, %v246
      %v251 = vmul.f32 %v247, %v247
      %v252 = vmul.f32 %v248, %v248
      %v253 = vmul.f32 %v249, %v249
      %v254 = vmul.f32 %v250, %v250
      %v255 = vadd.f32 %v251, %v252
      %256 = vadd.xlane.f32.xlu0 %v255
      %v257 = vpop.xlane.xlu0 %256
      %v258 = vsel %vm238, %v253, 0.0
      %v259 = vsel %vm238, %v254, 0.0
      %v260 = vadd.f32 %v258, %v259
      %261 = vadd.xlane.f32.xlu0 %v260
      %v262 = vpop.xlane.xlu0 %261
      %v263 = vmul.f32 %v257, %v244
      %v264 = vmul.f32 %v262, %v244
      %v265 = vadd.f32 %v263, 1e-05
      %v266 = vadd.f32 %v264, 1e-05
      %v267 = vrsqrt.pop %v265
      %v268 = vrsqrt.pop %v266
      %v269 = vmul.f32 %v247, %v267
      %v270 = vmul.f32 %v248, %v267
      %v271 = vmul.f32 %v249, %v268
      %v272 = vmul.f32 %v250, %v268
      %v274 = vlaneseq
      %v275 = vshrl.u32 %v274, 7
      %v276 = vsub.s32 0, %v275
      %v277 = vrot.slane %v226, %v276
      %v278 = vlaneseq
      %v279 = vshrl.u32 %v278, 7
      %v280 = vsub.s32 1, %v279
      %v281 = vrot.slane %v226, %v280
      %v284 = vmul.f32 %v269, %v277
      %v285 = vmul.f32 %v270, %v281
      %v286 = vmul.f32 %v271, %v277
      %v287 = vmul.f32 %v272, %v281
      %v289 = vlaneseq
      %v290 = vshrl.u32 %v289, 7
      %v291 = vsub.s32 0, %v290
      %v292 = vrot.slane %v228, %v291
      %v293 = vlaneseq
      %v294 = vshrl.u32 %v293, 7
      %v295 = vsub.s32 1, %v294
      %v296 = vrot.slane %v228, %v295
      %v299 = vadd.f32 %v284, %v292
      %v300 = vadd.f32 %v285, %v296
      %v301 = vadd.f32 %v286, %v292
      %v302 = vadd.f32 %v287, %v296
      %v303 = vld [vmem:[%s2] sm:$0xf]
      %v304 = vld [vmem:[%s2 + $0x4] sm:$0xf]
      %v305 = vld [vmem:[%s2 + $0x8] sm:$0xf]
      %v306 = vld [vmem:[%s2 + $0xc] sm:$0xf]
      %v307 = vld [vmem:[%s2 + $0x10] sm:$0xf]
      %v308 = vld [vmem:[%s2 + $0x14] sm:$0xf]
      %v309 = vld [vmem:[%s2 + $0x18] sm:$0xf]
      %v310 = vld [vmem:[%s2 + $0x1c] sm:$0xf]
      %v311 = vld [vmem:[%s2 + $0x20] sm:$0xf]
      %v312 = vld [vmem:[%s2 + $0x24] sm:$0xf]
      %v313 = vld [vmem:[%s2 + $0x28] sm:$0xf]
      %v314 = vld [vmem:[%s2 + $0x2c] sm:$0xf]
      %v315 = vld [vmem:[%s2 + $0x30] sm:$0xf]
      %v316 = vld [vmem:[%s2 + $0x34] sm:$0xf]
      %v317 = vld [vmem:[%s2 + $0x38] sm:$0xf]
      %v318 = vld [vmem:[%s2 + $0x3c] sm:$0xf]
      %v319 = vld [vmem:[%s2 + $0x40] sm:$0xf]
      %v320 = vld [vmem:[%s2 + $0x44] sm:$0xf]
      %v321 = vld [vmem:[%s2 + $0x48] sm:$0xf]
      %v322 = vld [vmem:[%s2 + $0x4c] sm:$0xf]
      %v323 = vld [vmem:[%s2 + $0x50] sm:$0xf]
      %v324 = vld [vmem:[%s2 + $0x54] sm:$0xf]
      %v325 = vld [vmem:[%s2 + $0x58] sm:$0xf]
      %v326 = vld [vmem:[%s2 + $0x5c] sm:$0xf]
      %v327 = vld [vmem:[%s2 + $0x60] sm:$0xf]
      %v328 = vld [vmem:[%s2 + $0x64] sm:$0xf]
      %v329 = vld [vmem:[%s2 + $0x68] sm:$0xf]
      %v330 = vld [vmem:[%s2 + $0x6c] sm:$0xf]
      %v331 = vld [vmem:[%s2 + $0x70] sm:$0xf]
      %v332 = vld [vmem:[%s2 + $0x74] sm:$0xf]
      %v333 = vld [vmem:[%s2 + $0x78] sm:$0xf]
      %v334 = vld [vmem:[%s2 + $0x7c] sm:$0xf]
      %v335 = vpack.c.bf16 %v301, %v299
      %v336 = vpack.c.bf16 %v302, %v300
      %v369 = vunpack.c.l.b16 %v303
      %v370 = vunpack.c.l.b16 %v304
      %v371 = vunpack.c.l.b16 %v305
      %v372 = vunpack.c.l.b16 %v306
      %v373 = vunpack.c.l.b16 %v307
      %v374 = vunpack.c.l.b16 %v308
      %v375 = vunpack.c.l.b16 %v309
      %v376 = vunpack.c.l.b16 %v310
      %v377 = vunpack.c.l.b16 %v311
      %v378 = vunpack.c.l.b16 %v312
      %v379 = vunpack.c.l.b16 %v313
      %v380 = vunpack.c.l.b16 %v314
      %v381 = vunpack.c.l.b16 %v315
      %v382 = vunpack.c.l.b16 %v316
      %v383 = vunpack.c.l.b16 %v317
      %v384 = vunpack.c.l.b16 %v318
      %v385 = vunpack.c.l.b16 %v319
      %v386 = vunpack.c.l.b16 %v320
      %v387 = vunpack.c.l.b16 %v321
      %v388 = vunpack.c.l.b16 %v322
      %v389 = vunpack.c.l.b16 %v323
      %v390 = vunpack.c.l.b16 %v324
      %v391 = vunpack.c.l.b16 %v325
      %v392 = vunpack.c.l.b16 %v326
      %v393 = vunpack.c.l.b16 %v327
      %v394 = vunpack.c.l.b16 %v328
      %v395 = vunpack.c.l.b16 %v329
      %v396 = vunpack.c.l.b16 %v330
      %v397 = vunpack.c.l.b16 %v331
      %v398 = vunpack.c.l.b16 %v332
      %v399 = vunpack.c.l.b16 %v333
      %v400 = vunpack.c.l.b16 %v334
      %v401 = vpack.c.b16 %v370, %v369
      %v402 = vpack.c.b16 %v372, %v371
      %v403 = vpack.c.b16 %v374, %v373
      %v404 = vpack.c.b16 %v376, %v375
      %v405 = vpack.c.b16 %v378, %v377
      %v406 = vpack.c.b16 %v380, %v379
      %v407 = vpack.c.b16 %v382, %v381
      %v408 = vpack.c.b16 %v384, %v383
      %v409 = vpack.c.b16 %v386, %v385
      %v410 = vpack.c.b16 %v388, %v387
      %v411 = vpack.c.b16 %v390, %v389
      %v412 = vpack.c.b16 %v392, %v391
      %v413 = vpack.c.b16 %v394, %v393
      %v414 = vpack.c.b16 %v396, %v395
      %v415 = vpack.c.b16 %v398, %v397
      %v416 = vpack.c.b16 %v400, %v399
      %433 = vmatprep.subr.bf16.mxu0 0
      %434 = vmatpush1.bf16.msra.mxu0 %v401
      %435 = vmatprep.subr.bf16.mxu0 0
      %436 = vmatpush1.bf16.msra.mxu0 %v402
      %437 = vmatprep.subr.bf16.mxu0 0
      %438 = vmatpush1.bf16.msra.mxu0 %v403
      %439 = vmatprep.subr.bf16.mxu0 0
      %440 = vmatpush1.bf16.msra.mxu0 %v404
      %441 = vmatprep.subr.bf16.mxu0 0
      %442 = vmatpush1.bf16.msra.mxu0 %v405
      %443 = vmatprep.subr.bf16.mxu0 0
      %444 = vmatpush1.bf16.msra.mxu0 %v406
      %445 = vmatprep.subr.bf16.mxu0 0
      %446 = vmatpush1.bf16.msra.mxu0 %v407
      %447 = vmatprep.subr.bf16.mxu0 0
      %448 = vmatpush1.bf16.msra.mxu0 %v408
      %449 = vmatprep.subr.bf16.mxu0 0
      %450 = vmatpush1.bf16.msra.mxu0 %v409
      %451 = vmatprep.subr.bf16.mxu0 0
      %452 = vmatpush1.bf16.msra.mxu0 %v410
      %453 = vmatprep.subr.bf16.mxu0 0
      %454 = vmatpush1.bf16.msra.mxu0 %v411
      %455 = vmatprep.subr.bf16.mxu0 0
      %456 = vmatpush1.bf16.msra.mxu0 %v412
      %457 = vmatprep.subr.bf16.mxu0 0
      %458 = vmatpush1.bf16.msra.mxu0 %v413
      %459 = vmatprep.subr.bf16.mxu0 0
      %460 = vmatpush1.bf16.msra.mxu0 %v414
      %461 = vmatprep.subr.bf16.mxu0 0
      %462 = vmatpush1.bf16.msra.mxu0 %v415
      %463 = vmatprep.subr.bf16.mxu0 0
      %464 = vmatpush1.bf16.msra.mxu0 %v416
      %465 = vmatprep.mubr.bf16.mxu0 %v336
      %466 = vmatmul.mubr.bf16.gmra.mrb[0].mxu0 %v335
      %v467 = vpop.f32.mrb[0].mxu0
      %v468 = vadd.f32 %v229, %v467
      %v469 = vpop.f32.mrb[0].mxu0
      %v470 = vpop.f32.mrb[0].mxu0
      %v471 = vadd.f32 %v229, %v470
      %v472 = vpop.f32.mrb[0].mxu0
      %473 = vdwg.mxu0
      %vm474 = vcmask 261120
      %v475 = vsel %vm474, %v468, 0.0
      %476 = vadd.xlane.f32.xlu0 %v475
      %v477 = vpop.xlane.xlu0 %476
      %vm478 = vcmask 253952
      %v479 = vsel %vm478, %v471, 0.0
      %480 = vadd.xlane.f32.xlu0 %v479
      %v481 = vpop.xlane.xlu0 %480
      %v482 = vrcp.pop 32.0
      %v483 = vmul.f32 %v477, %v482
      %v484 = vmul.f32 %v481, %v482
      %v485 = vsub.f32 %v468, %v483
      %v486 = vsub.f32 %v471, %v484
      %v487 = vmul.f32 %v485, %v485
      %v488 = vmul.f32 %v486, %v486
      %v489 = vsel %vm474, %v487, 0.0
      %490 = vadd.xlane.f32.xlu0 %v489
      %v491 = vpop.xlane.xlu0 %490
      %v492 = vsel %vm478, %v488, 0.0
      %493 = vadd.xlane.f32.xlu0 %v492
      %v494 = vpop.xlane.xlu0 %493
      %v495 = vmul.f32 %v491, %v482
      %v496 = vmul.f32 %v494, %v482
      %v497 = vadd.f32 %v495, 1e-05
      %v498 = vadd.f32 %v496, 1e-05
      %v499 = vrsqrt.pop %v497
      %v500 = vrsqrt.pop %v498
      %v501 = vmul.f32 %v485, %v499
      %v502 = vmul.f32 %v486, %v500
      %v503 = vmul.f32 %v501, %v230
      %v504 = vmul.f32 %v502, %v230
      %v505 = vadd.f32 %v503, %v231
      %v506 = vadd.f32 %v504, %v231
      %v507 = vlaneseq
      %v508 = vshrl.u32 %v507, 7
      %v509 = vadd.s32 %v508, 8
      %vm510 = vcmp.eq.s32.totalorder %v508, 0
      %vm511 = vcmp.eq.s32.totalorder %v509, 0
      %v512 = vsel %vm510, %v232, %v505
      %v513 = vsel %vm511, %v232, %v506
      %v514 = vadd.f32 %v512, %v233
      %v515 = vadd.f32 %v513, %v234
      %v516 = vld [vmem:[%s1 + $0x30] ss:$0 sm:$0xff]
      %v517 = vld [vmem:[%s1 + $0x31] ss:$0 sm:$0xff]
      %v518 = vld [vmem:[%s1 + $0x32] ss:$0 sm:$0xff]
      %v519 = vld [vmem:[%s1 + $0x33] ss:$0 sm:$0xff]
      %v520 = vld [vmem:[%s1 + $0x34] ss:$0 sm:$0xff]
      %v521 = vld [vmem:[%s1 + $0x35] ss:$0 sm:$0xff]
      %v522 = vld [vmem:[%s1 + $0x36] ss:$0 sm:$0xff]
      %v523 = vsel %vm474, %v514, 0.0
      %524 = vadd.xlane.f32.xlu0 %v523
      %v525 = vpop.xlane.xlu0 %524
      %v526 = vsel %vm478, %v515, 0.0
      %527 = vadd.xlane.f32.xlu0 %v526
      %v528 = vpop.xlane.xlu0 %527
      %v529 = vmul.f32 %v525, %v482
      %v530 = vmul.f32 %v528, %v482
      %v531 = vsub.f32 %v514, %v529
      %v532 = vsub.f32 %v515, %v530
      %v533 = vmul.f32 %v531, %v531
      %v534 = vmul.f32 %v532, %v532
      %v535 = vsel %vm474, %v533, 0.0
      %536 = vadd.xlane.f32.xlu0 %v535
      %v537 = vpop.xlane.xlu0 %536
      %v538 = vsel %vm478, %v534, 0.0
      %539 = vadd.xlane.f32.xlu0 %v538
      %v540 = vpop.xlane.xlu0 %539
      %v541 = vmul.f32 %v537, %v482
      %v542 = vmul.f32 %v540, %v482
      %v543 = vadd.f32 %v541, 1e-05
      %v544 = vadd.f32 %v542, 1e-05
      %v545 = vrsqrt.pop %v543
      %v546 = vrsqrt.pop %v544
      %v547 = vmul.f32 %v531, %v545
      %v548 = vmul.f32 %v532, %v546
      %v549 = vmul.f32 %v547, %v516
      %v550 = vmul.f32 %v548, %v516
      %v551 = vadd.f32 %v549, %v517
      %v552 = vadd.f32 %v550, %v517
      %v553 = vpack.c.bf16 %v552, %v551
      %v554 = vld [vmem:[%s3] sm:$0xf]
      %v555 = vld [vmem:[%s3 + $0x4] sm:$0xf]
      %v556 = vld [vmem:[%s3 + $0x8] sm:$0xf]
      %v557 = vld [vmem:[%s3 + $0xc] sm:$0xf]
      %v562 = vunpack.c.l.b16 %v554
      %v563 = vunpack.c.l.b16 %v555
      %v564 = vunpack.c.l.b16 %v556
      %v565 = vunpack.c.l.b16 %v557
      %v566 = vpack.c.b16 %v563, %v562
      %v567 = vpack.c.b16 %v565, %v564
      %v571 = vsel %vm474, %v553, 0
      %573 = vmatprep.subr.bf16.mxu0 0
      %574 = vmatpush1.bf16.msra.mxu0 %v566
      %575 = vmatprep.subr.bf16.mxu0 0
      %576 = vmatpush1.bf16.msra.mxu0 %v567
      %577 = vmatprep.subr.bf16.mxu0 0
      %578 = vmatpush1.bf16.msra.mxu0 0
      %579 = vmatprep.subr.bf16.mxu0 0
      %580 = vmatpush1.bf16.msra.mxu0 0
      %581 = vmatprep.subr.bf16.mxu0 0
      %582 = vmatpush1.bf16.msra.mxu0 0
      %583 = vmatprep.subr.bf16.mxu0 0
      %584 = vmatpush1.bf16.msra.mxu0 0
      %585 = vmatprep.subr.bf16.mxu0 0
      %586 = vmatpush1.bf16.msra.mxu0 0
      %587 = vmatprep.subr.bf16.mxu0 0
      %588 = vmatpush1.bf16.msra.mxu0 0
      %589 = vmatprep.subr.bf16.mxu0 0
      %590 = vmatpush1.bf16.msra.mxu0 0
      %591 = vmatprep.subr.bf16.mxu0 0
      %592 = vmatpush1.bf16.msra.mxu0 0
      %593 = vmatprep.subr.bf16.mxu0 0
      %594 = vmatpush1.bf16.msra.mxu0 0
      %595 = vmatprep.subr.bf16.mxu0 0
      %596 = vmatpush1.bf16.msra.mxu0 0
      %597 = vmatprep.subr.bf16.mxu0 0
      %598 = vmatpush1.bf16.msra.mxu0 0
      %599 = vmatprep.subr.bf16.mxu0 0
      %600 = vmatpush1.bf16.msra.mxu0 0
      %601 = vmatprep.subr.bf16.mxu0 0
      %602 = vmatpush1.bf16.msra.mxu0 0
      %603 = vmatprep.subr.bf16.mxu0 0
      %604 = vmatpush1.bf16.msra.mxu0 0
      %605 = vmatprep.mubr.bf16.mxu0 0
      %606 = vmatmul.mubr.bf16.gmra.mrb[0].mxu0 %v571
      %v607 = vpop.f32.mrb[0].mxu0
      %v608 = vadd.f32 0.0, %v607
      %v609 = vpop.f32.mrb[0].mxu0
      %v610 = vpop.f32.mrb[0].mxu0
      %v611 = vadd.f32 0.0, %v610
      %v612 = vpop.f32.mrb[0].mxu0
      %613 = vdwg.mxu0
      %s614 = scalar_lea.vmem %s3, 16
      %v615 = vld [vmem:[%s614] sm:$0xf]
      %v616 = vld [vmem:[%s614 + $0x4] sm:$0xf]
      %v617 = vld [vmem:[%s614 + $0x8] sm:$0xf]
      %v618 = vld [vmem:[%s614 + $0xc] sm:$0xf]
      %v623 = vunpack.c.l.b16 %v615
      %v624 = vunpack.c.l.b16 %v616
      %v625 = vunpack.c.l.b16 %v617
      %v626 = vunpack.c.l.b16 %v618
      %v627 = vpack.c.b16 %v624, %v623
      %v628 = vpack.c.b16 %v626, %v625
      %631 = vmatprep.subr.bf16.mxu0 0
      %632 = vmatpush1.bf16.msra.mxu0 %v627
      %633 = vmatprep.subr.bf16.mxu0 0
      %634 = vmatpush1.bf16.msra.mxu0 %v628
      %635 = vmatprep.subr.bf16.mxu0 0
      %636 = vmatpush1.bf16.msra.mxu0 0
      %637 = vmatprep.subr.bf16.mxu0 0
      %638 = vmatpush1.bf16.msra.mxu0 0
      %639 = vmatprep.subr.bf16.mxu0 0
      %640 = vmatpush1.bf16.msra.mxu0 0
      %641 = vmatprep.subr.bf16.mxu0 0
      %642 = vmatpush1.bf16.msra.mxu0 0
      %643 = vmatprep.subr.bf16.mxu0 0
      %644 = vmatpush1.bf16.msra.mxu0 0
      %645 = vmatprep.subr.bf16.mxu0 0
      %646 = vmatpush1.bf16.msra.mxu0 0
      %647 = vmatprep.subr.bf16.mxu0 0
      %648 = vmatpush1.bf16.msra.mxu0 0
      %649 = vmatprep.subr.bf16.mxu0 0
      %650 = vmatpush1.bf16.msra.mxu0 0
      %651 = vmatprep.subr.bf16.mxu0 0
      %652 = vmatpush1.bf16.msra.mxu0 0
      %653 = vmatprep.subr.bf16.mxu0 0
      %654 = vmatpush1.bf16.msra.mxu0 0
      %655 = vmatprep.subr.bf16.mxu0 0
      %656 = vmatpush1.bf16.msra.mxu0 0
      %657 = vmatprep.subr.bf16.mxu0 0
      %658 = vmatpush1.bf16.msra.mxu0 0
      %659 = vmatprep.subr.bf16.mxu0 0
      %660 = vmatpush1.bf16.msra.mxu0 0
      %661 = vmatprep.subr.bf16.mxu0 0
      %662 = vmatpush1.bf16.msra.mxu0 0
      %663 = vmatprep.mubr.bf16.mxu0 0
      %664 = vmatmul.mubr.bf16.gmra.mrb[0].mxu0 %v571
      %v665 = vpop.f32.mrb[0].mxu0
      %v666 = vadd.f32 0.0, %v665
      %v667 = vpop.f32.mrb[0].mxu0
      %v668 = vpop.f32.mrb[0].mxu0
      %v669 = vadd.f32 0.0, %v668
      %v670 = vpop.f32.mrb[0].mxu0
      %671 = vdwg.mxu0
      %s672 = scalar_lea.vmem %s3, 32
      %v673 = vld [vmem:[%s672] sm:$0xf]
      %v674 = vld [vmem:[%s672 + $0x4] sm:$0xf]
      %v675 = vld [vmem:[%s672 + $0x8] sm:$0xf]
      %v676 = vld [vmem:[%s672 + $0xc] sm:$0xf]
      %v681 = vunpack.c.l.b16 %v673
      %v682 = vunpack.c.l.b16 %v674
      %v683 = vunpack.c.l.b16 %v675
      %v684 = vunpack.c.l.b16 %v676
      %v685 = vpack.c.b16 %v682, %v681
      %v686 = vpack.c.b16 %v684, %v683
      %689 = vmatprep.subr.bf16.mxu0 0
      %690 = vmatpush1.bf16.msra.mxu0 %v685
      %691 = vmatprep.subr.bf16.mxu0 0
      %692 = vmatpush1.bf16.msra.mxu0 %v686
      %693 = vmatprep.subr.bf16.mxu0 0
      %694 = vmatpush1.bf16.msra.mxu0 0
      %695 = vmatprep.subr.bf16.mxu0 0
      %696 = vmatpush1.bf16.msra.mxu0 0
      %697 = vmatprep.subr.bf16.mxu0 0
      %698 = vmatpush1.bf16.msra.mxu0 0
      %699 = vmatprep.subr.bf16.mxu0 0
      %700 = vmatpush1.bf16.msra.mxu0 0
      %701 = vmatprep.subr.bf16.mxu0 0
      %702 = vmatpush1.bf16.msra.mxu0 0
      %703 = vmatprep.subr.bf16.mxu0 0
      %704 = vmatpush1.bf16.msra.mxu0 0
      %705 = vmatprep.subr.bf16.mxu0 0
      %706 = vmatpush1.bf16.msra.mxu0 0
      %707 = vmatprep.subr.bf16.mxu0 0
      %708 = vmatpush1.bf16.msra.mxu0 0
      %709 = vmatprep.subr.bf16.mxu0 0
      %710 = vmatpush1.bf16.msra.mxu0 0
      %711 = vmatprep.subr.bf16.mxu0 0
      %712 = vmatpush1.bf16.msra.mxu0 0
      %713 = vmatprep.subr.bf16.mxu0 0
      %714 = vmatpush1.bf16.msra.mxu0 0
      %715 = vmatprep.subr.bf16.mxu0 0
      %716 = vmatpush1.bf16.msra.mxu0 0
      %717 = vmatprep.subr.bf16.mxu0 0
      %718 = vmatpush1.bf16.msra.mxu0 0
      %719 = vmatprep.subr.bf16.mxu0 0
      %720 = vmatpush1.bf16.msra.mxu0 0
      %721 = vmatprep.mubr.bf16.mxu0 0
      %722 = vmatmul.mubr.bf16.gmra.mrb[0].mxu0 %v571
      %v723 = vpop.f32.mrb[0].mxu0
      %v724 = vadd.f32 0.0, %v723
      %v725 = vpop.f32.mrb[0].mxu0
      %v726 = vpop.f32.mrb[0].mxu0
      %v727 = vadd.f32 0.0, %v726
      %v728 = vpop.f32.mrb[0].mxu0
      %729 = vdwg.mxu0
      %v730 = vpack.c.bf16 %v611, %v608
      %v731 = vpack.c.bf16 %v669, %v666
      %vm732 = vcmask 64512
      %v734 = vsel %vm732, %v730, 0
      %v737 = vsel %vm732, %v731, 0
      %739 = vmatprep.subr.bf16.mxu0 0
      %740 = vmatpush1.bf16.xpose.msra.mxu0 %v737
      %741 = vmatprep.subr.bf16.mxu0 0
      %742 = vmatpush1.bf16.xpose.msra.mxu0 0
      %743 = vmatprep.subr.bf16.mxu0 0
      %744 = vmatpush1.bf16.xpose.msra.mxu0 0
      %745 = vmatprep.subr.bf16.mxu0 0
      %746 = vmatpush1.bf16.xpose.msra.mxu0 0
      %747 = vmatprep.subr.bf16.mxu0 0
      %748 = vmatpush1.bf16.xpose.msra.mxu0 0
      %749 = vmatprep.subr.bf16.mxu0 0
      %750 = vmatpush1.bf16.xpose.msra.mxu0 0
      %751 = vmatprep.subr.bf16.mxu0 0
      %752 = vmatpush1.bf16.xpose.msra.mxu0 0
      %753 = vmatprep.subr.bf16.mxu0 0
      %754 = vmatpush1.bf16.xpose.msra.mxu0 0
      %755 = vmatprep.subr.bf16.mxu0 0
      %756 = vmatpush1.bf16.xpose.msra.mxu0 0
      %757 = vmatprep.subr.bf16.mxu0 0
      %758 = vmatpush1.bf16.xpose.msra.mxu0 0
      %759 = vmatprep.subr.bf16.mxu0 0
      %760 = vmatpush1.bf16.xpose.msra.mxu0 0
      %761 = vmatprep.subr.bf16.mxu0 0
      %762 = vmatpush1.bf16.xpose.msra.mxu0 0
      %763 = vmatprep.subr.bf16.mxu0 0
      %764 = vmatpush1.bf16.xpose.msra.mxu0 0
      %765 = vmatprep.subr.bf16.mxu0 0
      %766 = vmatpush1.bf16.xpose.msra.mxu0 0
      %767 = vmatprep.subr.bf16.mxu0 0
      %768 = vmatpush1.bf16.xpose.msra.mxu0 0
      %769 = vmatprep.subr.bf16.mxu0 0
      %770 = vmatpush1.bf16.xpose.msra.mxu0 0
      %771 = vmatprep.mubr.bf16.mxu0 0
      %772 = vmatmul.mubr.bf16.gmra.mrb[0].mxu0 %v734
      %v773 = vpop.f32.mrb[0].mxu0
      %v774 = vadd.f32 0.0, %v773
      %v775 = vpop.f32.mrb[0].mxu0
      %v776 = vpop.f32.mrb[0].mxu0
      %v777 = vadd.f32 0.0, %v776
      %v778 = vpop.f32.mrb[0].mxu0
      %779 = vdwg.mxu0
      %v780 = vmul.f32 %v774, 0.35355338
      %v781 = vmul.f32 %v777, 0.35355338
      %vm782 = vcmask 72704
      %v783 = vsel %vm782, %v780, -inf
      %784 = vmax.xlane.f32.xlu0 %v783
      %v785 = vpop.xlane.xlu0 %784
      %vm786 = vcmask 65536
      %v787 = vsel %vm786, %v781, -inf
      %788 = vmax.xlane.f32.xlu0 %v787
      %v789 = vpop.xlane.xlu0 %788
      %v790 = vsub.f32 %v780, %v785
      %v791 = vsub.f32 %v781, %v789
      %v792 = vmul.f32 %v790, 1.442695
      %v793 = vpow.pop %v792
      %v794 = vmul.f32 %v791, 1.442695
      %v795 = vpow.pop %v794
      %v796 = vsel %vm782, %v793, 0.0
      %797 = vadd.xlane.f32.xlu0 %v796
      %v798 = vpop.xlane.xlu0 %797
      %v799 = vsel %vm786, %v795, 0.0
      %800 = vadd.xlane.f32.xlu0 %v799
      %v801 = vpop.xlane.xlu0 %800
      %v802 = vrcp.pop %v798
      %v803 = vrcp.pop %v801
      %v804 = vmul.f32 %v793, %v802
      %v805 = vmul.f32 %v795, %v803
      %v806 = vpack.c.bf16 %v805, %v804
      %v807 = vpack.c.bf16 %v727, %v724
      %v809 = vsel %vm782, %v806, 0
      %vm811 = vcmask 1043456
      %vm812 = vcmask 1044480
      %v813 = vsel %vm811, 4294967295, 65535
      %v814 = vsel %vm812, %v813, 0
      %v816 = vand.u32 %v807, %v814
      %818 = vmatprep.subr.bf16.mxu0 0
      %819 = vmatpush1.bf16.msra.mxu0 %v816
      %820 = vmatprep.subr.bf16.mxu0 0
      %821 = vmatpush1.bf16.msra.mxu0 0
      %822 = vmatprep.subr.bf16.mxu0 0
      %823 = vmatpush1.bf16.msra.mxu0 0
      %824 = vmatprep.subr.bf16.mxu0 0
      %825 = vmatpush1.bf16.msra.mxu0 0
      %826 = vmatprep.subr.bf16.mxu0 0
      %827 = vmatpush1.bf16.msra.mxu0 0
      %828 = vmatprep.subr.bf16.mxu0 0
      %829 = vmatpush1.bf16.msra.mxu0 0
      %830 = vmatprep.subr.bf16.mxu0 0
      %831 = vmatpush1.bf16.msra.mxu0 0
      %832 = vmatprep.subr.bf16.mxu0 0
      %833 = vmatpush1.bf16.msra.mxu0 0
      %834 = vmatprep.subr.bf16.mxu0 0
      %835 = vmatpush1.bf16.msra.mxu0 0
      %836 = vmatprep.subr.bf16.mxu0 0
      %837 = vmatpush1.bf16.msra.mxu0 0
      %838 = vmatprep.subr.bf16.mxu0 0
      %839 = vmatpush1.bf16.msra.mxu0 0
      %840 = vmatprep.subr.bf16.mxu0 0
      %841 = vmatpush1.bf16.msra.mxu0 0
      %842 = vmatprep.subr.bf16.mxu0 0
      %843 = vmatpush1.bf16.msra.mxu0 0
      %844 = vmatprep.subr.bf16.mxu0 0
      %845 = vmatpush1.bf16.msra.mxu0 0
      %846 = vmatprep.subr.bf16.mxu0 0
      %847 = vmatpush1.bf16.msra.mxu0 0
      %848 = vmatprep.subr.bf16.mxu0 0
      %849 = vmatpush1.bf16.msra.mxu0 0
      %850 = vmatprep.mubr.bf16.mxu0 0
      %851 = vmatmul.mubr.bf16.gmra.mrb[0].mxu0 %v809
      %v852 = vpop.f32.mrb[0].mxu0
      %v853 = vadd.f32 0.0, %v852
      %v854 = vpop.f32.mrb[0].mxu0
      %v855 = vpop.f32.mrb[0].mxu0
      %v856 = vadd.f32 0.0, %v855
      %v857 = vpop.f32.mrb[0].mxu0
      %858 = vdwg.mxu0
      %v859 = vld [vmem:[%s4] sm:$0xf]
      %v860 = vpack.c.bf16 %v856, %v853
      %s861 = scalar_lea.vmem %s3, 48
      %v862 = vld [vmem:[%s861] sm:$0xf]
      %v863 = vld [vmem:[%s861 + $0x4] sm:$0xf]
      %v864 = vld [vmem:[%s861 + $0x8] sm:$0xf]
      %v865 = vld [vmem:[%s861 + $0xc] sm:$0xf]
      %v870 = vunpack.c.l.b16 %v862
      %v871 = vunpack.c.l.b16 %v863
      %v872 = vunpack.c.l.b16 %v864
      %v873 = vunpack.c.l.b16 %v865
      %v874 = vpack.c.b16 %v871, %v870
      %v875 = vpack.c.b16 %v873, %v872
      %878 = vmatprep.subr.bf16.mxu0 0
      %879 = vmatpush1.bf16.msra.mxu0 %v874
      %880 = vmatprep.subr.bf16.mxu0 0
      %881 = vmatpush1.bf16.msra.mxu0 %v875
      %882 = vmatprep.subr.bf16.mxu0 0
      %883 = vmatpush1.bf16.msra.mxu0 0
      %884 = vmatprep.subr.bf16.mxu0 0
      %885 = vmatpush1.bf16.msra.mxu0 0
      %886 = vmatprep.subr.bf16.mxu0 0
      %887 = vmatpush1.bf16.msra.mxu0 0
      %888 = vmatprep.subr.bf16.mxu0 0
      %889 = vmatpush1.bf16.msra.mxu0 0
      %890 = vmatprep.subr.bf16.mxu0 0
      %891 = vmatpush1.bf16.msra.mxu0 0
      %892 = vmatprep.subr.bf16.mxu0 0
      %893 = vmatpush1.bf16.msra.mxu0 0
      %894 = vmatprep.subr.bf16.mxu0 0
      %895 = vmatpush1.bf16.msra.mxu0 0
      %896 = vmatprep.subr.bf16.mxu0 0
      %897 = vmatpush1.bf16.msra.mxu0 0
      %898 = vmatprep.subr.bf16.mxu0 0
      %899 = vmatpush1.bf16.msra.mxu0 0
      %900 = vmatprep.subr.bf16.mxu0 0
      %901 = vmatpush1.bf16.msra.mxu0 0
      %902 = vmatprep.subr.bf16.mxu0 0
      %903 = vmatpush1.bf16.msra.mxu0 0
      %904 = vmatprep.subr.bf16.mxu0 0
      %905 = vmatpush1.bf16.msra.mxu0 0
      %906 = vmatprep.subr.bf16.mxu0 0
      %907 = vmatpush1.bf16.msra.mxu0 0
      %908 = vmatprep.subr.bf16.mxu0 0
      %909 = vmatpush1.bf16.msra.mxu0 0
      %910 = vmatprep.mubr.bf16.mxu0 0
      %911 = vmatmul.mubr.bf16.gmra.mrb[0].mxu0 %v571
      %v912 = vpop.f32.mrb[0].mxu0
      %v913 = vadd.f32 0.0, %v912
      %v914 = vpop.f32.mrb[0].mxu0
      %v915 = vpop.f32.mrb[0].mxu0
      %v916 = vadd.f32 0.0, %v915
      %v917 = vpop.f32.mrb[0].mxu0
      %918 = vdwg.mxu0
      %s919 = scalar_lea.vmem %s3, 64
      %v920 = vld [vmem:[%s919] sm:$0xf]
      %v921 = vld [vmem:[%s919 + $0x4] sm:$0xf]
      %v922 = vld [vmem:[%s919 + $0x8] sm:$0xf]
      %v923 = vld [vmem:[%s919 + $0xc] sm:$0xf]
      %v928 = vunpack.c.l.b16 %v920
      %v929 = vunpack.c.l.b16 %v921
      %v930 = vunpack.c.l.b16 %v922
      %v931 = vunpack.c.l.b16 %v923
      %v932 = vpack.c.b16 %v929, %v928
      %v933 = vpack.c.b16 %v931, %v930
      %936 = vmatprep.subr.bf16.mxu0 0
      %937 = vmatpush1.bf16.msra.mxu0 %v932
      %938 = vmatprep.subr.bf16.mxu0 0
      %939 = vmatpush1.bf16.msra.mxu0 %v933
      %940 = vmatprep.subr.bf16.mxu0 0
      %941 = vmatpush1.bf16.msra.mxu0 0
      %942 = vmatprep.subr.bf16.mxu0 0
      %943 = vmatpush1.bf16.msra.mxu0 0
      %944 = vmatprep.subr.bf16.mxu0 0
      %945 = vmatpush1.bf16.msra.mxu0 0
      %946 = vmatprep.subr.bf16.mxu0 0
      %947 = vmatpush1.bf16.msra.mxu0 0
      %948 = vmatprep.subr.bf16.mxu0 0
      %949 = vmatpush1.bf16.msra.mxu0 0
      %950 = vmatprep.subr.bf16.mxu0 0
      %951 = vmatpush1.bf16.msra.mxu0 0
      %952 = vmatprep.subr.bf16.mxu0 0
      %953 = vmatpush1.bf16.msra.mxu0 0
      %954 = vmatprep.subr.bf16.mxu0 0
      %955 = vmatpush1.bf16.msra.mxu0 0
      %956 = vmatprep.subr.bf16.mxu0 0
      %957 = vmatpush1.bf16.msra.mxu0 0
      %958 = vmatprep.subr.bf16.mxu0 0
      %959 = vmatpush1.bf16.msra.mxu0 0
      %960 = vmatprep.subr.bf16.mxu0 0
      %961 = vmatpush1.bf16.msra.mxu0 0
      %962 = vmatprep.subr.bf16.mxu0 0
      %963 = vmatpush1.bf16.msra.mxu0 0
      %964 = vmatprep.subr.bf16.mxu0 0
      %965 = vmatpush1.bf16.msra.mxu0 0
      %966 = vmatprep.subr.bf16.mxu0 0
      %967 = vmatpush1.bf16.msra.mxu0 0
      %968 = vmatprep.mubr.bf16.mxu0 0
      %969 = vmatmul.mubr.bf16.gmra.mrb[0].mxu0 %v571
      %v970 = vpop.f32.mrb[0].mxu0
      %v971 = vadd.f32 0.0, %v970
      %v972 = vpop.f32.mrb[0].mxu0
      %v973 = vpop.f32.mrb[0].mxu0
      %v974 = vadd.f32 0.0, %v973
      %v975 = vpop.f32.mrb[0].mxu0
      %976 = vdwg.mxu0
      %s977 = scalar_lea.vmem %s3, 80
      %v978 = vld [vmem:[%s977] sm:$0xf]
      %v979 = vld [vmem:[%s977 + $0x4] sm:$0xf]
      %v980 = vld [vmem:[%s977 + $0x8] sm:$0xf]
      %v981 = vld [vmem:[%s977 + $0xc] sm:$0xf]
      %v986 = vunpack.c.l.b16 %v978
      %v987 = vunpack.c.l.b16 %v979
      %v988 = vunpack.c.l.b16 %v980
      %v989 = vunpack.c.l.b16 %v981
      %v990 = vpack.c.b16 %v987, %v986
      %v991 = vpack.c.b16 %v989, %v988
      %994 = vmatprep.subr.bf16.mxu0 0
      %995 = vmatpush1.bf16.msra.mxu0 %v990
      %996 = vmatprep.subr.bf16.mxu0 0
      %997 = vmatpush1.bf16.msra.mxu0 %v991
      %998 = vmatprep.subr.bf16.mxu0 0
      %999 = vmatpush1.bf16.msra.mxu0 0
      %1000 = vmatprep.subr.bf16.mxu0 0
      %1001 = vmatpush1.bf16.msra.mxu0 0
      %1002 = vmatprep.subr.bf16.mxu0 0
      %1003 = vmatpush1.bf16.msra.mxu0 0
      %1004 = vmatprep.subr.bf16.mxu0 0
      %1005 = vmatpush1.bf16.msra.mxu0 0
      %1006 = vmatprep.subr.bf16.mxu0 0
      %1007 = vmatpush1.bf16.msra.mxu0 0
      %1008 = vmatprep.subr.bf16.mxu0 0
      %1009 = vmatpush1.bf16.msra.mxu0 0
      %1010 = vmatprep.subr.bf16.mxu0 0
      %1011 = vmatpush1.bf16.msra.mxu0 0
      %1012 = vmatprep.subr.bf16.mxu0 0
      %1013 = vmatpush1.bf16.msra.mxu0 0
      %1014 = vmatprep.subr.bf16.mxu0 0
      %1015 = vmatpush1.bf16.msra.mxu0 0
      %1016 = vmatprep.subr.bf16.mxu0 0
      %1017 = vmatpush1.bf16.msra.mxu0 0
      %1018 = vmatprep.subr.bf16.mxu0 0
      %1019 = vmatpush1.bf16.msra.mxu0 0
      %1020 = vmatprep.subr.bf16.mxu0 0
      %1021 = vmatpush1.bf16.msra.mxu0 0
      %1022 = vmatprep.subr.bf16.mxu0 0
      %1023 = vmatpush1.bf16.msra.mxu0 0
      %1024 = vmatprep.subr.bf16.mxu0 0
      %1025 = vmatpush1.bf16.msra.mxu0 0
      %1026 = vmatprep.mubr.bf16.mxu0 0
      %1027 = vmatmul.mubr.bf16.gmra.mrb[0].mxu0 %v571
      %v1028 = vpop.f32.mrb[0].mxu0
      %v1029 = vadd.f32 0.0, %v1028
      %v1030 = vpop.f32.mrb[0].mxu0
      %v1031 = vpop.f32.mrb[0].mxu0
      %v1032 = vadd.f32 0.0, %v1031
      %v1033 = vpop.f32.mrb[0].mxu0
      %1034 = vdwg.mxu0
      %v1035 = vpack.c.bf16 %v916, %v913
      %v1036 = vpack.c.bf16 %v974, %v971
      %v1038 = vsel %vm732, %v1035, 0
      %v1041 = vsel %vm732, %v1036, 0
      %1043 = vmatprep.subr.bf16.mxu0 0
      %1044 = vmatpush1.bf16.xpose.msra.mxu0 %v1041
      %1045 = vmatprep.subr.bf16.mxu0 0
      %1046 = vmatpush1.bf16.xpose.msra.mxu0 0
      %1047 = vmatprep.subr.bf16.mxu0 0
      %1048 = vmatpush1.bf16.xpose.msra.mxu0 0
      %1049 = vmatprep.subr.bf16.mxu0 0
      %1050 = vmatpush1.bf16.xpose.msra.mxu0 0
      %1051 = vmatprep.subr.bf16.mxu0 0
      %1052 = vmatpush1.bf16.xpose.msra.mxu0 0
      %1053 = vmatprep.subr.bf16.mxu0 0
      %1054 = vmatpush1.bf16.xpose.msra.mxu0 0
      %1055 = vmatprep.subr.bf16.mxu0 0
      %1056 = vmatpush1.bf16.xpose.msra.mxu0 0
      %1057 = vmatprep.subr.bf16.mxu0 0
      %1058 = vmatpush1.bf16.xpose.msra.mxu0 0
      %1059 = vmatprep.subr.bf16.mxu0 0
      %1060 = vmatpush1.bf16.xpose.msra.mxu0 0
      %1061 = vmatprep.subr.bf16.mxu0 0
      %1062 = vmatpush1.bf16.xpose.msra.mxu0 0
      %1063 = vmatprep.subr.bf16.mxu0 0
      %1064 = vmatpush1.bf16.xpose.msra.mxu0 0
      %1065 = vmatprep.subr.bf16.mxu0 0
      %1066 = vmatpush1.bf16.xpose.msra.mxu0 0
      %1067 = vmatprep.subr.bf16.mxu0 0
      %1068 = vmatpush1.bf16.xpose.msra.mxu0 0
      %1069 = vmatprep.subr.bf16.mxu0 0
      %1070 = vmatpush1.bf16.xpose.msra.mxu0 0
      %1071 = vmatprep.subr.bf16.mxu0 0
      %1072 = vmatpush1.bf16.xpose.msra.mxu0 0
      %1073 = vmatprep.subr.bf16.mxu0 0
      %1074 = vmatpush1.bf16.xpose.msra.mxu0 0
      %1075 = vmatprep.mubr.bf16.mxu0 0
      %1076 = vmatmul.mubr.bf16.gmra.mrb[0].mxu0 %v1038
      %v1077 = vpop.f32.mrb[0].mxu0
      %v1078 = vadd.f32 0.0, %v1077
      %v1079 = vpop.f32.mrb[0].mxu0
      %v1080 = vpop.f32.mrb[0].mxu0
      %v1081 = vadd.f32 0.0, %v1080
      %v1082 = vpop.f32.mrb[0].mxu0
      %1083 = vdwg.mxu0
      %v1084 = vmul.f32 %v1078, 0.35355338
      %v1085 = vmul.f32 %v1081, 0.35355338
      %v1086 = vsel %vm782, %v1084, -inf
      %1087 = vmax.xlane.f32.xlu0 %v1086
      %v1088 = vpop.xlane.xlu0 %1087
      %v1089 = vsel %vm786, %v1085, -inf
      %1090 = vmax.xlane.f32.xlu0 %v1089
      %v1091 = vpop.xlane.xlu0 %1090
      %v1092 = vsub.f32 %v1084, %v1088
      %v1093 = vsub.f32 %v1085, %v1091
      %v1094 = vmul.f32 %v1092, 1.442695
      %v1095 = vpow.pop %v1094
      %v1096 = vmul.f32 %v1093, 1.442695
      %v1097 = vpow.pop %v1096
      %v1098 = vsel %vm782, %v1095, 0.0
      %1099 = vadd.xlane.f32.xlu0 %v1098
      %v1100 = vpop.xlane.xlu0 %1099
      %v1101 = vsel %vm786, %v1097, 0.0
      %1102 = vadd.xlane.f32.xlu0 %v1101
      %v1103 = vpop.xlane.xlu0 %1102
      %v1104 = vrcp.pop %v1100
      %v1105 = vrcp.pop %v1103
      %v1106 = vmul.f32 %v1095, %v1104
      %v1107 = vmul.f32 %v1097, %v1105
      %v1108 = vpack.c.bf16 %v1107, %v1106
      %v1109 = vpack.c.bf16 %v1032, %v1029
      %v1111 = vsel %vm782, %v1108, 0
      %v1114 = vand.u32 %v1109, %v814
      %1116 = vmatprep.subr.bf16.mxu0 0
      %1117 = vmatpush1.bf16.msra.mxu0 %v1114
      %1118 = vmatprep.subr.bf16.mxu0 0
      %1119 = vmatpush1.bf16.msra.mxu0 0
      %1120 = vmatprep.subr.bf16.mxu0 0
      %1121 = vmatpush1.bf16.msra.mxu0 0
      %1122 = vmatprep.subr.bf16.mxu0 0
      %1123 = vmatpush1.bf16.msra.mxu0 0
      %1124 = vmatprep.subr.bf16.mxu0 0
      %1125 = vmatpush1.bf16.msra.mxu0 0
      %1126 = vmatprep.subr.bf16.mxu0 0
      %1127 = vmatpush1.bf16.msra.mxu0 0
      %1128 = vmatprep.subr.bf16.mxu0 0
      %1129 = vmatpush1.bf16.msra.mxu0 0
      %1130 = vmatprep.subr.bf16.mxu0 0
      %1131 = vmatpush1.bf16.msra.mxu0 0
      %1132 = vmatprep.subr.bf16.mxu0 0
      %1133 = vmatpush1.bf16.msra.mxu0 0
      %1134 = vmatprep.subr.bf16.mxu0 0
      %1135 = vmatpush1.bf16.msra.mxu0 0
      %1136 = vmatprep.subr.bf16.mxu0 0
      %1137 = vmatpush1.bf16.msra.mxu0 0
      %1138 = vmatprep.subr.bf16.mxu0 0
      %1139 = vmatpush1.bf16.msra.mxu0 0
      %1140 = vmatprep.subr.bf16.mxu0 0
      %1141 = vmatpush1.bf16.msra.mxu0 0
      %1142 = vmatprep.subr.bf16.mxu0 0
      %1143 = vmatpush1.bf16.msra.mxu0 0
      %1144 = vmatprep.subr.bf16.mxu0 0
      %1145 = vmatpush1.bf16.msra.mxu0 0
      %1146 = vmatprep.subr.bf16.mxu0 0
      %1147 = vmatpush1.bf16.msra.mxu0 0
      %1148 = vmatprep.mubr.bf16.mxu0 0
      %1149 = vmatmul.mubr.bf16.gmra.mrb[0].mxu0 %v1111
      %v1150 = vpop.f32.mrb[0].mxu0
      %v1151 = vadd.f32 0.0, %v1150
      %v1152 = vpop.f32.mrb[0].mxu0
      %v1153 = vpop.f32.mrb[0].mxu0
      %v1154 = vadd.f32 0.0, %v1153
      %v1155 = vpop.f32.mrb[0].mxu0
      %1156 = vdwg.mxu0
      %s1157 = scalar_lea.vmem %s4, 4
      %v1158 = vld [vmem:[%s1157] sm:$0xf]
      %v1159 = vpack.c.bf16 %v1154, %v1151
      %v1161 = vsel %vm732, %v1159, 0
      %v1164 = vsel %vm811, %v1158, 0
      %1166 = vmatprep.subr.bf16.mxu0 0
      %1167 = vmatpush1.bf16.msra.mxu0 %v1164
      %1168 = vmatprep.subr.bf16.mxu0 0
      %1169 = vmatpush1.bf16.msra.mxu0 0
      %1170 = vmatprep.subr.bf16.mxu0 0
      %1171 = vmatpush1.bf16.msra.mxu0 0
      %1172 = vmatprep.subr.bf16.mxu0 0
      %1173 = vmatpush1.bf16.msra.mxu0 0
      %1174 = vmatprep.subr.bf16.mxu0 0
      %1175 = vmatpush1.bf16.msra.mxu0 0
      %1176 = vmatprep.subr.bf16.mxu0 0
      %1177 = vmatpush1.bf16.msra.mxu0 0
      %1178 = vmatprep.subr.bf16.mxu0 0
      %1179 = vmatpush1.bf16.msra.mxu0 0
      %1180 = vmatprep.subr.bf16.mxu0 0
      %1181 = vmatpush1.bf16.msra.mxu0 0
      %1182 = vmatprep.subr.bf16.mxu0 0
      %1183 = vmatpush1.bf16.msra.mxu0 0
      %1184 = vmatprep.subr.bf16.mxu0 0
      %1185 = vmatpush1.bf16.msra.mxu0 0
      %1186 = vmatprep.subr.bf16.mxu0 0
      %1187 = vmatpush1.bf16.msra.mxu0 0
      %1188 = vmatprep.subr.bf16.mxu0 0
      %1189 = vmatpush1.bf16.msra.mxu0 0
      %1190 = vmatprep.subr.bf16.mxu0 0
      %1191 = vmatpush1.bf16.msra.mxu0 0
      %1192 = vmatprep.subr.bf16.mxu0 0
      %1193 = vmatpush1.bf16.msra.mxu0 0
      %1194 = vmatprep.subr.bf16.mxu0 0
      %1195 = vmatpush1.bf16.msra.mxu0 0
      %1196 = vmatprep.subr.bf16.mxu0 0
      %1197 = vmatpush1.bf16.msra.mxu0 0
      %1198 = vmatprep.mubr.bf16.mxu0 0
      %1199 = vmatmul.mubr.bf16.gmra.mrb[0].mxu0 %v1161
      %v1200 = vpop.f32.mrb[0].mxu0
      %v1201 = vadd.f32 0.0, %v1200
      %v1202 = vpop.f32.mrb[0].mxu0
      %v1203 = vpop.f32.mrb[0].mxu0
      %v1204 = vadd.f32 0.0, %v1203
      %v1205 = vpop.f32.mrb[0].mxu0
      %1206 = vdwg.mxu0
      %v1208 = vsel %vm732, %v860, 0
      %v1211 = vsel %vm811, %v859, 0
      %1213 = vmatprep.subr.bf16.mxu0 0
      %1214 = vmatpush1.bf16.msra.mxu0 %v1211
      %1215 = vmatprep.subr.bf16.mxu0 0
      %1216 = vmatpush1.bf16.msra.mxu0 0
      %1217 = vmatprep.subr.bf16.mxu0 0
      %1218 = vmatpush1.bf16.msra.mxu0 0
      %1219 = vmatprep.subr.bf16.mxu0 0
      %1220 = vmatpush1.bf16.msra.mxu0 0
      %1221 = vmatprep.subr.bf16.mxu0 0
      %1222 = vmatpush1.bf16.msra.mxu0 0
      %1223 = vmatprep.subr.bf16.mxu0 0
      %1224 = vmatpush1.bf16.msra.mxu0 0
      %1225 = vmatprep.subr.bf16.mxu0 0
      %1226 = vmatpush1.bf16.msra.mxu0 0
      %1227 = vmatprep.subr.bf16.mxu0 0
      %1228 = vmatpush1.bf16.msra.mxu0 0
      %1229 = vmatprep.subr.bf16.mxu0 0
      %1230 = vmatpush1.bf16.msra.mxu0 0
      %1231 = vmatprep.subr.bf16.mxu0 0
      %1232 = vmatpush1.bf16.msra.mxu0 0
      %1233 = vmatprep.subr.bf16.mxu0 0
      %1234 = vmatpush1.bf16.msra.mxu0 0
      %1235 = vmatprep.subr.bf16.mxu0 0
      %1236 = vmatpush1.bf16.msra.mxu0 0
      %1237 = vmatprep.subr.bf16.mxu0 0
      %1238 = vmatpush1.bf16.msra.mxu0 0
      %1239 = vmatprep.subr.bf16.mxu0 0
      %1240 = vmatpush1.bf16.msra.mxu0 0
      %1241 = vmatprep.subr.bf16.mxu0 0
      %1242 = vmatpush1.bf16.msra.mxu0 0
      %1243 = vmatprep.subr.bf16.mxu0 0
      %1244 = vmatpush1.bf16.msra.mxu0 0
      %1245 = vmatprep.mubr.bf16.mxu0 0
      %1246 = vmatmul.mubr.bf16.gmra.mrb[0].mxu0 %v1208
      %v1247 = vpop.f32.mrb[0].mxu0
      %v1248 = vadd.f32 %v1201, %v1247
      %v1249 = vpop.f32.mrb[0].mxu0
      %v1250 = vpop.f32.mrb[0].mxu0
      %v1251 = vadd.f32 %v1204, %v1250
      %v1252 = vpop.f32.mrb[0].mxu0
      %1253 = vdwg.mxu0
      %s1254 = scalar_lea.vmem %s3, 96
      %v1255 = vld [vmem:[%s1254] sm:$0xf]
      %v1256 = vld [vmem:[%s1254 + $0x4] sm:$0xf]
      %v1257 = vld [vmem:[%s1254 + $0x8] sm:$0xf]
      %v1258 = vld [vmem:[%s1254 + $0xc] sm:$0xf]
      %v1263 = vunpack.c.l.b16 %v1255
      %v1264 = vunpack.c.l.b16 %v1256
      %v1265 = vunpack.c.l.b16 %v1257
      %v1266 = vunpack.c.l.b16 %v1258
      %v1267 = vpack.c.b16 %v1264, %v1263
      %v1268 = vpack.c.b16 %v1266, %v1265
      %1271 = vmatprep.subr.bf16.mxu0 0
      %1272 = vmatpush1.bf16.msra.mxu0 %v1267
      %1273 = vmatprep.subr.bf16.mxu0 0
      %1274 = vmatpush1.bf16.msra.mxu0 %v1268
      %1275 = vmatprep.subr.bf16.mxu0 0
      %1276 = vmatpush1.bf16.msra.mxu0 0
      %1277 = vmatprep.subr.bf16.mxu0 0
      %1278 = vmatpush1.bf16.msra.mxu0 0
      %1279 = vmatprep.subr.bf16.mxu0 0
      %1280 = vmatpush1.bf16.msra.mxu0 0
      %1281 = vmatprep.subr.bf16.mxu0 0
      %1282 = vmatpush1.bf16.msra.mxu0 0
      %1283 = vmatprep.subr.bf16.mxu0 0
      %1284 = vmatpush1.bf16.msra.mxu0 0
      %1285 = vmatprep.subr.bf16.mxu0 0
      %1286 = vmatpush1.bf16.msra.mxu0 0
      %1287 = vmatprep.subr.bf16.mxu0 0
      %1288 = vmatpush1.bf16.msra.mxu0 0
      %1289 = vmatprep.subr.bf16.mxu0 0
      %1290 = vmatpush1.bf16.msra.mxu0 0
      %1291 = vmatprep.subr.bf16.mxu0 0
      %1292 = vmatpush1.bf16.msra.mxu0 0
      %1293 = vmatprep.subr.bf16.mxu0 0
      %1294 = vmatpush1.bf16.msra.mxu0 0
      %1295 = vmatprep.subr.bf16.mxu0 0
      %1296 = vmatpush1.bf16.msra.mxu0 0
      %1297 = vmatprep.subr.bf16.mxu0 0
      %1298 = vmatpush1.bf16.msra.mxu0 0
      %1299 = vmatprep.subr.bf16.mxu0 0
      %1300 = vmatpush1.bf16.msra.mxu0 0
      %1301 = vmatprep.subr.bf16.mxu0 0
      %1302 = vmatpush1.bf16.msra.mxu0 0
      %1303 = vmatprep.mubr.bf16.mxu0 0
      %1304 = vmatmul.mubr.bf16.gmra.mrb[0].mxu0 %v571
      %v1305 = vpop.f32.mrb[0].mxu0
      %v1306 = vadd.f32 0.0, %v1305
      %v1307 = vpop.f32.mrb[0].mxu0
      %v1308 = vpop.f32.mrb[0].mxu0
      %v1309 = vadd.f32 0.0, %v1308
      %v1310 = vpop.f32.mrb[0].mxu0
      %1311 = vdwg.mxu0
      %s1312 = scalar_lea.vmem %s3, 112
      %v1313 = vld [vmem:[%s1312] sm:$0xf]
      %v1314 = vld [vmem:[%s1312 + $0x4] sm:$0xf]
      %v1315 = vld [vmem:[%s1312 + $0x8] sm:$0xf]
      %v1316 = vld [vmem:[%s1312 + $0xc] sm:$0xf]
      %v1321 = vunpack.c.l.b16 %v1313
      %v1322 = vunpack.c.l.b16 %v1314
      %v1323 = vunpack.c.l.b16 %v1315
      %v1324 = vunpack.c.l.b16 %v1316
      %v1325 = vpack.c.b16 %v1322, %v1321
      %v1326 = vpack.c.b16 %v1324, %v1323
      %1329 = vmatprep.subr.bf16.mxu0 0
      %1330 = vmatpush1.bf16.msra.mxu0 %v1325
      %1331 = vmatprep.subr.bf16.mxu0 0
      %1332 = vmatpush1.bf16.msra.mxu0 %v1326
      %1333 = vmatprep.subr.bf16.mxu0 0
      %1334 = vmatpush1.bf16.msra.mxu0 0
      %1335 = vmatprep.subr.bf16.mxu0 0
      %1336 = vmatpush1.bf16.msra.mxu0 0
      %1337 = vmatprep.subr.bf16.mxu0 0
      %1338 = vmatpush1.bf16.msra.mxu0 0
      %1339 = vmatprep.subr.bf16.mxu0 0
      %1340 = vmatpush1.bf16.msra.mxu0 0
      %1341 = vmatprep.subr.bf16.mxu0 0
      %1342 = vmatpush1.bf16.msra.mxu0 0
      %1343 = vmatprep.subr.bf16.mxu0 0
      %1344 = vmatpush1.bf16.msra.mxu0 0
      %1345 = vmatprep.subr.bf16.mxu0 0
      %1346 = vmatpush1.bf16.msra.mxu0 0
      %1347 = vmatprep.subr.bf16.mxu0 0
      %1348 = vmatpush1.bf16.msra.mxu0 0
      %1349 = vmatprep.subr.bf16.mxu0 0
      %1350 = vmatpush1.bf16.msra.mxu0 0
      %1351 = vmatprep.subr.bf16.mxu0 0
      %1352 = vmatpush1.bf16.msra.mxu0 0
      %1353 = vmatprep.subr.bf16.mxu0 0
      %1354 = vmatpush1.bf16.msra.mxu0 0
      %1355 = vmatprep.subr.bf16.mxu0 0
      %1356 = vmatpush1.bf16.msra.mxu0 0
      %1357 = vmatprep.subr.bf16.mxu0 0
      %1358 = vmatpush1.bf16.msra.mxu0 0
      %1359 = vmatprep.subr.bf16.mxu0 0
      %1360 = vmatpush1.bf16.msra.mxu0 0
      %1361 = vmatprep.mubr.bf16.mxu0 0
      %1362 = vmatmul.mubr.bf16.gmra.mrb[0].mxu0 %v571
      %v1363 = vpop.f32.mrb[0].mxu0
      %v1364 = vadd.f32 0.0, %v1363
      %v1365 = vpop.f32.mrb[0].mxu0
      %v1366 = vpop.f32.mrb[0].mxu0
      %v1367 = vadd.f32 0.0, %v1366
      %v1368 = vpop.f32.mrb[0].mxu0
      %1369 = vdwg.mxu0
      %s1370 = scalar_lea.vmem %s3, 128
      %v1371 = vld [vmem:[%s1370] sm:$0xf]
      %v1372 = vld [vmem:[%s1370 + $0x4] sm:$0xf]
      %v1373 = vld [vmem:[%s1370 + $0x8] sm:$0xf]
      %v1374 = vld [vmem:[%s1370 + $0xc] sm:$0xf]
      %v1379 = vunpack.c.l.b16 %v1371
      %v1380 = vunpack.c.l.b16 %v1372
      %v1381 = vunpack.c.l.b16 %v1373
      %v1382 = vunpack.c.l.b16 %v1374
      %v1383 = vpack.c.b16 %v1380, %v1379
      %v1384 = vpack.c.b16 %v1382, %v1381
      %1387 = vmatprep.subr.bf16.mxu0 0
      %1388 = vmatpush1.bf16.msra.mxu0 %v1383
      %1389 = vmatprep.subr.bf16.mxu0 0
      %1390 = vmatpush1.bf16.msra.mxu0 %v1384
      %1391 = vmatprep.subr.bf16.mxu0 0
      %1392 = vmatpush1.bf16.msra.mxu0 0
      %1393 = vmatprep.subr.bf16.mxu0 0
      %1394 = vmatpush1.bf16.msra.mxu0 0
      %1395 = vmatprep.subr.bf16.mxu0 0
      %1396 = vmatpush1.bf16.msra.mxu0 0
      %1397 = vmatprep.subr.bf16.mxu0 0
      %1398 = vmatpush1.bf16.msra.mxu0 0
      %1399 = vmatprep.subr.bf16.mxu0 0
      %1400 = vmatpush1.bf16.msra.mxu0 0
      %1401 = vmatprep.subr.bf16.mxu0 0
      %1402 = vmatpush1.bf16.msra.mxu0 0
      %1403 = vmatprep.subr.bf16.mxu0 0
      %1404 = vmatpush1.bf16.msra.mxu0 0
      %1405 = vmatprep.subr.bf16.mxu0 0
      %1406 = vmatpush1.bf16.msra.mxu0 0
      %1407 = vmatprep.subr.bf16.mxu0 0
      %1408 = vmatpush1.bf16.msra.mxu0 0
      %1409 = vmatprep.subr.bf16.mxu0 0
      %1410 = vmatpush1.bf16.msra.mxu0 0
      %1411 = vmatprep.subr.bf16.mxu0 0
      %1412 = vmatpush1.bf16.msra.mxu0 0
      %1413 = vmatprep.subr.bf16.mxu0 0
      %1414 = vmatpush1.bf16.msra.mxu0 0
      %1415 = vmatprep.subr.bf16.mxu0 0
      %1416 = vmatpush1.bf16.msra.mxu0 0
      %1417 = vmatprep.subr.bf16.mxu0 0
      %1418 = vmatpush1.bf16.msra.mxu0 0
      %1419 = vmatprep.mubr.bf16.mxu0 0
      %1420 = vmatmul.mubr.bf16.gmra.mrb[0].mxu0 %v571
      %v1421 = vpop.f32.mrb[0].mxu0
      %v1422 = vadd.f32 0.0, %v1421
      %v1423 = vpop.f32.mrb[0].mxu0
      %v1424 = vpop.f32.mrb[0].mxu0
      %v1425 = vadd.f32 0.0, %v1424
      %v1426 = vpop.f32.mrb[0].mxu0
      %1427 = vdwg.mxu0
      %v1428 = vpack.c.bf16 %v1309, %v1306
      %v1429 = vpack.c.bf16 %v1367, %v1364
      %v1431 = vsel %vm732, %v1428, 0
      %v1434 = vsel %vm732, %v1429, 0
      %1436 = vmatprep.subr.bf16.mxu0 0
      %1437 = vmatpush1.bf16.xpose.msra.mxu0 %v1434
      %1438 = vmatprep.subr.bf16.mxu0 0
      %1439 = vmatpush1.bf16.xpose.msra.mxu0 0
      %1440 = vmatprep.subr.bf16.mxu0 0
      %1441 = vmatpush1.bf16.xpose.msra.mxu0 0
      %1442 = vmatprep.subr.bf16.mxu0 0
      %1443 = vmatpush1.bf16.xpose.msra.mxu0 0
      %1444 = vmatprep.subr.bf16.mxu0 0
      %1445 = vmatpush1.bf16.xpose.msra.mxu0 0
      %1446 = vmatprep.subr.bf16.mxu0 0
      %1447 = vmatpush1.bf16.xpose.msra.mxu0 0
      %1448 = vmatprep.subr.bf16.mxu0 0
      %1449 = vmatpush1.bf16.xpose.msra.mxu0 0
      %1450 = vmatprep.subr.bf16.mxu0 0
      %1451 = vmatpush1.bf16.xpose.msra.mxu0 0
      %1452 = vmatprep.subr.bf16.mxu0 0
      %1453 = vmatpush1.bf16.xpose.msra.mxu0 0
      %1454 = vmatprep.subr.bf16.mxu0 0
      %1455 = vmatpush1.bf16.xpose.msra.mxu0 0
      %1456 = vmatprep.subr.bf16.mxu0 0
      %1457 = vmatpush1.bf16.xpose.msra.mxu0 0
      %1458 = vmatprep.subr.bf16.mxu0 0
      %1459 = vmatpush1.bf16.xpose.msra.mxu0 0
      %1460 = vmatprep.subr.bf16.mxu0 0
      %1461 = vmatpush1.bf16.xpose.msra.mxu0 0
      %1462 = vmatprep.subr.bf16.mxu0 0
      %1463 = vmatpush1.bf16.xpose.msra.mxu0 0
      %1464 = vmatprep.subr.bf16.mxu0 0
      %1465 = vmatpush1.bf16.xpose.msra.mxu0 0
      %1466 = vmatprep.subr.bf16.mxu0 0
      %1467 = vmatpush1.bf16.xpose.msra.mxu0 0
      %1468 = vmatprep.mubr.bf16.mxu0 0
      %1469 = vmatmul.mubr.bf16.gmra.mrb[0].mxu0 %v1431
      %v1470 = vpop.f32.mrb[0].mxu0
      %v1471 = vadd.f32 0.0, %v1470
      %v1472 = vpop.f32.mrb[0].mxu0
      %v1473 = vpop.f32.mrb[0].mxu0
      %v1474 = vadd.f32 0.0, %v1473
      %v1475 = vpop.f32.mrb[0].mxu0
      %1476 = vdwg.mxu0
      %v1477 = vmul.f32 %v1471, 0.35355338
      %v1478 = vmul.f32 %v1474, 0.35355338
      %v1479 = vsel %vm782, %v1477, -inf
      %1480 = vmax.xlane.f32.xlu0 %v1479
      %v1481 = vpop.xlane.xlu0 %1480
      %v1482 = vsel %vm786, %v1478, -inf
      %1483 = vmax.xlane.f32.xlu0 %v1482
      %v1484 = vpop.xlane.xlu0 %1483
      %v1485 = vsub.f32 %v1477, %v1481
      %v1486 = vsub.f32 %v1478, %v1484
      %v1487 = vmul.f32 %v1485, 1.442695
      %v1488 = vpow.pop %v1487
      %v1489 = vmul.f32 %v1486, 1.442695
      %v1490 = vpow.pop %v1489
      %v1491 = vsel %vm782, %v1488, 0.0
      %1492 = vadd.xlane.f32.xlu0 %v1491
      %v1493 = vpop.xlane.xlu0 %1492
      %v1494 = vsel %vm786, %v1490, 0.0
      %1495 = vadd.xlane.f32.xlu0 %v1494
      %v1496 = vpop.xlane.xlu0 %1495
      %v1497 = vrcp.pop %v1493
      %v1498 = vrcp.pop %v1496
      %v1499 = vmul.f32 %v1488, %v1497
      %v1500 = vmul.f32 %v1490, %v1498
      %v1501 = vpack.c.bf16 %v1500, %v1499
      %v1502 = vpack.c.bf16 %v1425, %v1422
      %v1504 = vsel %vm782, %v1501, 0
      %v1507 = vand.u32 %v1502, %v814
      %1509 = vmatprep.subr.bf16.mxu0 0
      %1510 = vmatpush1.bf16.msra.mxu0 %v1507
      %1511 = vmatprep.subr.bf16.mxu0 0
      %1512 = vmatpush1.bf16.msra.mxu0 0
      %1513 = vmatprep.subr.bf16.mxu0 0
      %1514 = vmatpush1.bf16.msra.mxu0 0
      %1515 = vmatprep.subr.bf16.mxu0 0
      %1516 = vmatpush1.bf16.msra.mxu0 0
      %1517 = vmatprep.subr.bf16.mxu0 0
      %1518 = vmatpush1.bf16.msra.mxu0 0
      %1519 = vmatprep.subr.bf16.mxu0 0
      %1520 = vmatpush1.bf16.msra.mxu0 0
      %1521 = vmatprep.subr.bf16.mxu0 0
      %1522 = vmatpush1.bf16.msra.mxu0 0
      %1523 = vmatprep.subr.bf16.mxu0 0
      %1524 = vmatpush1.bf16.msra.mxu0 0
      %1525 = vmatprep.subr.bf16.mxu0 0
      %1526 = vmatpush1.bf16.msra.mxu0 0
      %1527 = vmatprep.subr.bf16.mxu0 0
      %1528 = vmatpush1.bf16.msra.mxu0 0
      %1529 = vmatprep.subr.bf16.mxu0 0
      %1530 = vmatpush1.bf16.msra.mxu0 0
      %1531 = vmatprep.subr.bf16.mxu0 0
      %1532 = vmatpush1.bf16.msra.mxu0 0
      %1533 = vmatprep.subr.bf16.mxu0 0
      %1534 = vmatpush1.bf16.msra.mxu0 0
      %1535 = vmatprep.subr.bf16.mxu0 0
      %1536 = vmatpush1.bf16.msra.mxu0 0
      %1537 = vmatprep.subr.bf16.mxu0 0
      %1538 = vmatpush1.bf16.msra.mxu0 0
      %1539 = vmatprep.subr.bf16.mxu0 0
      %1540 = vmatpush1.bf16.msra.mxu0 0
      %1541 = vmatprep.mubr.bf16.mxu0 0
      %1542 = vmatmul.mubr.bf16.gmra.mrb[0].mxu0 %v1504
      %v1543 = vpop.f32.mrb[0].mxu0
      %v1544 = vadd.f32 0.0, %v1543
      %v1545 = vpop.f32.mrb[0].mxu0
      %v1546 = vpop.f32.mrb[0].mxu0
      %v1547 = vadd.f32 0.0, %v1546
      %v1548 = vpop.f32.mrb[0].mxu0
      %1549 = vdwg.mxu0
      %s1550 = scalar_lea.vmem %s4, 8
      %v1551 = vld [vmem:[%s1550] sm:$0xf]
      %v1552 = vpack.c.bf16 %v1547, %v1544
      %v1554 = vsel %vm732, %v1552, 0
      %v1557 = vsel %vm811, %v1551, 0
      %1559 = vmatprep.subr.bf16.mxu0 0
      %1560 = vmatpush1.bf16.msra.mxu0 %v1557
      %1561 = vmatprep.subr.bf16.mxu0 0
      %1562 = vmatpush1.bf16.msra.mxu0 0
      %1563 = vmatprep.subr.bf16.mxu0 0
      %1564 = vmatpush1.bf16.msra.mxu0 0
      %1565 = vmatprep.subr.bf16.mxu0 0
      %1566 = vmatpush1.bf16.msra.mxu0 0
      %1567 = vmatprep.subr.bf16.mxu0 0
      %1568 = vmatpush1.bf16.msra.mxu0 0
      %1569 = vmatprep.subr.bf16.mxu0 0
      %1570 = vmatpush1.bf16.msra.mxu0 0
      %1571 = vmatprep.subr.bf16.mxu0 0
      %1572 = vmatpush1.bf16.msra.mxu0 0
      %1573 = vmatprep.subr.bf16.mxu0 0
      %1574 = vmatpush1.bf16.msra.mxu0 0
      %1575 = vmatprep.subr.bf16.mxu0 0
      %1576 = vmatpush1.bf16.msra.mxu0 0
      %1577 = vmatprep.subr.bf16.mxu0 0
      %1578 = vmatpush1.bf16.msra.mxu0 0
      %1579 = vmatprep.subr.bf16.mxu0 0
      %1580 = vmatpush1.bf16.msra.mxu0 0
      %1581 = vmatprep.subr.bf16.mxu0 0
      %1582 = vmatpush1.bf16.msra.mxu0 0
      %1583 = vmatprep.subr.bf16.mxu0 0
      %1584 = vmatpush1.bf16.msra.mxu0 0
      %1585 = vmatprep.subr.bf16.mxu0 0
      %1586 = vmatpush1.bf16.msra.mxu0 0
      %1587 = vmatprep.subr.bf16.mxu0 0
      %1588 = vmatpush1.bf16.msra.mxu0 0
      %1589 = vmatprep.subr.bf16.mxu0 0
      %1590 = vmatpush1.bf16.msra.mxu0 0
      %1591 = vmatprep.mubr.bf16.mxu0 0
      %1592 = vmatmul.mubr.bf16.gmra.mrb[0].mxu0 %v1554
      %v1593 = vpop.f32.mrb[0].mxu0
      %v1594 = vadd.f32 0.0, %v1593
      %v1595 = vpop.f32.mrb[0].mxu0
      %v1596 = vpop.f32.mrb[0].mxu0
      %v1597 = vadd.f32 0.0, %v1596
      %v1598 = vpop.f32.mrb[0].mxu0
      %1599 = vdwg.mxu0
      %v1600 = vadd.f32 %v1248, %v1594
      %v1601 = vadd.f32 %v1251, %v1597
      %s1602 = scalar_lea.vmem %s3, 144
      %v1603 = vld [vmem:[%s1602] sm:$0xf]
      %v1604 = vld [vmem:[%s1602 + $0x4] sm:$0xf]
      %v1605 = vld [vmem:[%s1602 + $0x8] sm:$0xf]
      %v1606 = vld [vmem:[%s1602 + $0xc] sm:$0xf]
      %v1611 = vunpack.c.l.b16 %v1603
      %v1612 = vunpack.c.l.b16 %v1604
      %v1613 = vunpack.c.l.b16 %v1605
      %v1614 = vunpack.c.l.b16 %v1606
      %v1615 = vpack.c.b16 %v1612, %v1611
      %v1616 = vpack.c.b16 %v1614, %v1613
      %1619 = vmatprep.subr.bf16.mxu0 0
      %1620 = vmatpush1.bf16.msra.mxu0 %v1615
      %1621 = vmatprep.subr.bf16.mxu0 0
      %1622 = vmatpush1.bf16.msra.mxu0 %v1616
      %1623 = vmatprep.subr.bf16.mxu0 0
      %1624 = vmatpush1.bf16.msra.mxu0 0
      %1625 = vmatprep.subr.bf16.mxu0 0
      %1626 = vmatpush1.bf16.msra.mxu0 0
      %1627 = vmatprep.subr.bf16.mxu0 0
      %1628 = vmatpush1.bf16.msra.mxu0 0
      %1629 = vmatprep.subr.bf16.mxu0 0
      %1630 = vmatpush1.bf16.msra.mxu0 0
      %1631 = vmatprep.subr.bf16.mxu0 0
      %1632 = vmatpush1.bf16.msra.mxu0 0
      %1633 = vmatprep.subr.bf16.mxu0 0
      %1634 = vmatpush1.bf16.msra.mxu0 0
      %1635 = vmatprep.subr.bf16.mxu0 0
      %1636 = vmatpush1.bf16.msra.mxu0 0
      %1637 = vmatprep.subr.bf16.mxu0 0
      %1638 = vmatpush1.bf16.msra.mxu0 0
      %1639 = vmatprep.subr.bf16.mxu0 0
      %1640 = vmatpush1.bf16.msra.mxu0 0
      %1641 = vmatprep.subr.bf16.mxu0 0
      %1642 = vmatpush1.bf16.msra.mxu0 0
      %1643 = vmatprep.subr.bf16.mxu0 0
      %1644 = vmatpush1.bf16.msra.mxu0 0
      %1645 = vmatprep.subr.bf16.mxu0 0
      %1646 = vmatpush1.bf16.msra.mxu0 0
      %1647 = vmatprep.subr.bf16.mxu0 0
      %1648 = vmatpush1.bf16.msra.mxu0 0
      %1649 = vmatprep.subr.bf16.mxu0 0
      %1650 = vmatpush1.bf16.msra.mxu0 0
      %1651 = vmatprep.mubr.bf16.mxu0 0
      %1652 = vmatmul.mubr.bf16.gmra.mrb[0].mxu0 %v571
      %v1653 = vpop.f32.mrb[0].mxu0
      %v1654 = vadd.f32 0.0, %v1653
      %v1655 = vpop.f32.mrb[0].mxu0
      %v1656 = vpop.f32.mrb[0].mxu0
      %v1657 = vadd.f32 0.0, %v1656
      %v1658 = vpop.f32.mrb[0].mxu0
      %1659 = vdwg.mxu0
      %s1660 = scalar_lea.vmem %s3, 160
      %v1661 = vld [vmem:[%s1660] sm:$0xf]
      %v1662 = vld [vmem:[%s1660 + $0x4] sm:$0xf]
      %v1663 = vld [vmem:[%s1660 + $0x8] sm:$0xf]
      %v1664 = vld [vmem:[%s1660 + $0xc] sm:$0xf]
      %v1669 = vunpack.c.l.b16 %v1661
      %v1670 = vunpack.c.l.b16 %v1662
      %v1671 = vunpack.c.l.b16 %v1663
      %v1672 = vunpack.c.l.b16 %v1664
      %v1673 = vpack.c.b16 %v1670, %v1669
      %v1674 = vpack.c.b16 %v1672, %v1671
      %1677 = vmatprep.subr.bf16.mxu0 0
      %1678 = vmatpush1.bf16.msra.mxu0 %v1673
      %1679 = vmatprep.subr.bf16.mxu0 0
      %1680 = vmatpush1.bf16.msra.mxu0 %v1674
      %1681 = vmatprep.subr.bf16.mxu0 0
      %1682 = vmatpush1.bf16.msra.mxu0 0
      %1683 = vmatprep.subr.bf16.mxu0 0
      %1684 = vmatpush1.bf16.msra.mxu0 0
      %1685 = vmatprep.subr.bf16.mxu0 0
      %1686 = vmatpush1.bf16.msra.mxu0 0
      %1687 = vmatprep.subr.bf16.mxu0 0
      %1688 = vmatpush1.bf16.msra.mxu0 0
      %1689 = vmatprep.subr.bf16.mxu0 0
      %1690 = vmatpush1.bf16.msra.mxu0 0
      %1691 = vmatprep.subr.bf16.mxu0 0
      %1692 = vmatpush1.bf16.msra.mxu0 0
      %1693 = vmatprep.subr.bf16.mxu0 0
      %1694 = vmatpush1.bf16.msra.mxu0 0
      %1695 = vmatprep.subr.bf16.mxu0 0
      %1696 = vmatpush1.bf16.msra.mxu0 0
      %1697 = vmatprep.subr.bf16.mxu0 0
      %1698 = vmatpush1.bf16.msra.mxu0 0
      %1699 = vmatprep.subr.bf16.mxu0 0
      %1700 = vmatpush1.bf16.msra.mxu0 0
      %1701 = vmatprep.subr.bf16.mxu0 0
      %1702 = vmatpush1.bf16.msra.mxu0 0
      %1703 = vmatprep.subr.bf16.mxu0 0
      %1704 = vmatpush1.bf16.msra.mxu0 0
      %1705 = vmatprep.subr.bf16.mxu0 0
      %1706 = vmatpush1.bf16.msra.mxu0 0
      %1707 = vmatprep.subr.bf16.mxu0 0
      %1708 = vmatpush1.bf16.msra.mxu0 0
      %1709 = vmatprep.mubr.bf16.mxu0 0
      %1710 = vmatmul.mubr.bf16.gmra.mrb[0].mxu0 %v571
      %v1711 = vpop.f32.mrb[0].mxu0
      %v1712 = vadd.f32 0.0, %v1711
      %v1713 = vpop.f32.mrb[0].mxu0
      %v1714 = vpop.f32.mrb[0].mxu0
      %v1715 = vadd.f32 0.0, %v1714
      %v1716 = vpop.f32.mrb[0].mxu0
      %1717 = vdwg.mxu0
      %s1718 = scalar_lea.vmem %s3, 176
      %v1719 = vld [vmem:[%s1718] sm:$0xf]
      %v1720 = vld [vmem:[%s1718 + $0x4] sm:$0xf]
      %v1721 = vld [vmem:[%s1718 + $0x8] sm:$0xf]
      %v1722 = vld [vmem:[%s1718 + $0xc] sm:$0xf]
      %v1727 = vunpack.c.l.b16 %v1719
      %v1728 = vunpack.c.l.b16 %v1720
      %v1729 = vunpack.c.l.b16 %v1721
      %v1730 = vunpack.c.l.b16 %v1722
      %v1731 = vpack.c.b16 %v1728, %v1727
      %v1732 = vpack.c.b16 %v1730, %v1729
      %1735 = vmatprep.subr.bf16.mxu0 0
      %1736 = vmatpush1.bf16.msra.mxu0 %v1731
      %1737 = vmatprep.subr.bf16.mxu0 0
      %1738 = vmatpush1.bf16.msra.mxu0 %v1732
      %1739 = vmatprep.subr.bf16.mxu0 0
      %1740 = vmatpush1.bf16.msra.mxu0 0
      %1741 = vmatprep.subr.bf16.mxu0 0
      %1742 = vmatpush1.bf16.msra.mxu0 0
      %1743 = vmatprep.subr.bf16.mxu0 0
      %1744 = vmatpush1.bf16.msra.mxu0 0
      %1745 = vmatprep.subr.bf16.mxu0 0
      %1746 = vmatpush1.bf16.msra.mxu0 0
      %1747 = vmatprep.subr.bf16.mxu0 0
      %1748 = vmatpush1.bf16.msra.mxu0 0
      %1749 = vmatprep.subr.bf16.mxu0 0
      %1750 = vmatpush1.bf16.msra.mxu0 0
      %1751 = vmatprep.subr.bf16.mxu0 0
      %1752 = vmatpush1.bf16.msra.mxu0 0
      %1753 = vmatprep.subr.bf16.mxu0 0
      %1754 = vmatpush1.bf16.msra.mxu0 0
      %1755 = vmatprep.subr.bf16.mxu0 0
      %1756 = vmatpush1.bf16.msra.mxu0 0
      %1757 = vmatprep.subr.bf16.mxu0 0
      %1758 = vmatpush1.bf16.msra.mxu0 0
      %1759 = vmatprep.subr.bf16.mxu0 0
      %1760 = vmatpush1.bf16.msra.mxu0 0
      %1761 = vmatprep.subr.bf16.mxu0 0
      %1762 = vmatpush1.bf16.msra.mxu0 0
      %1763 = vmatprep.subr.bf16.mxu0 0
      %1764 = vmatpush1.bf16.msra.mxu0 0
      %1765 = vmatprep.subr.bf16.mxu0 0
      %1766 = vmatpush1.bf16.msra.mxu0 0
      %1767 = vmatprep.mubr.bf16.mxu0 0
      %1768 = vmatmul.mubr.bf16.gmra.mrb[0].mxu0 %v571
      %v1769 = vpop.f32.mrb[0].mxu0
      %v1770 = vadd.f32 0.0, %v1769
      %v1771 = vpop.f32.mrb[0].mxu0
      %v1772 = vpop.f32.mrb[0].mxu0
      %v1773 = vadd.f32 0.0, %v1772
      %v1774 = vpop.f32.mrb[0].mxu0
      %1775 = vdwg.mxu0
      %v1776 = vpack.c.bf16 %v1657, %v1654
      %v1777 = vpack.c.bf16 %v1715, %v1712
      %v1779 = vsel %vm732, %v1776, 0
      %v1782 = vsel %vm732, %v1777, 0
      %1784 = vmatprep.subr.bf16.mxu0 0
      %1785 = vmatpush1.bf16.xpose.msra.mxu0 %v1782
      %1786 = vmatprep.subr.bf16.mxu0 0
      %1787 = vmatpush1.bf16.xpose.msra.mxu0 0
      %1788 = vmatprep.subr.bf16.mxu0 0
      %1789 = vmatpush1.bf16.xpose.msra.mxu0 0
      %1790 = vmatprep.subr.bf16.mxu0 0
      %1791 = vmatpush1.bf16.xpose.msra.mxu0 0
      %1792 = vmatprep.subr.bf16.mxu0 0
      %1793 = vmatpush1.bf16.xpose.msra.mxu0 0
      %1794 = vmatprep.subr.bf16.mxu0 0
      %1795 = vmatpush1.bf16.xpose.msra.mxu0 0
      %1796 = vmatprep.subr.bf16.mxu0 0
      %1797 = vmatpush1.bf16.xpose.msra.mxu0 0
      %1798 = vmatprep.subr.bf16.mxu0 0
      %1799 = vmatpush1.bf16.xpose.msra.mxu0 0
      %1800 = vmatprep.subr.bf16.mxu0 0
      %1801 = vmatpush1.bf16.xpose.msra.mxu0 0
      %1802 = vmatprep.subr.bf16.mxu0 0
      %1803 = vmatpush1.bf16.xpose.msra.mxu0 0
      %1804 = vmatprep.subr.bf16.mxu0 0
      %1805 = vmatpush1.bf16.xpose.msra.mxu0 0
      %1806 = vmatprep.subr.bf16.mxu0 0
      %1807 = vmatpush1.bf16.xpose.msra.mxu0 0
      %1808 = vmatprep.subr.bf16.mxu0 0
      %1809 = vmatpush1.bf16.xpose.msra.mxu0 0
      %1810 = vmatprep.subr.bf16.mxu0 0
      %1811 = vmatpush1.bf16.xpose.msra.mxu0 0
      %1812 = vmatprep.subr.bf16.mxu0 0
      %1813 = vmatpush1.bf16.xpose.msra.mxu0 0
      %1814 = vmatprep.subr.bf16.mxu0 0
      %1815 = vmatpush1.bf16.xpose.msra.mxu0 0
      %1816 = vmatprep.mubr.bf16.mxu0 0
      %1817 = vmatmul.mubr.bf16.gmra.mrb[0].mxu0 %v1779
      %v1818 = vpop.f32.mrb[0].mxu0
      %v1819 = vadd.f32 0.0, %v1818
      %v1820 = vpop.f32.mrb[0].mxu0
      %v1821 = vpop.f32.mrb[0].mxu0
      %v1822 = vadd.f32 0.0, %v1821
      %v1823 = vpop.f32.mrb[0].mxu0
      %1824 = vdwg.mxu0
      %v1825 = vmul.f32 %v1819, 0.35355338
      %v1826 = vmul.f32 %v1822, 0.35355338
      %v1827 = vsel %vm782, %v1825, -inf
      %1828 = vmax.xlane.f32.xlu0 %v1827
      %v1829 = vpop.xlane.xlu0 %1828
      %v1830 = vsel %vm786, %v1826, -inf
      %1831 = vmax.xlane.f32.xlu0 %v1830
      %v1832 = vpop.xlane.xlu0 %1831
      %v1833 = vsub.f32 %v1825, %v1829
      %v1834 = vsub.f32 %v1826, %v1832
      %v1835 = vmul.f32 %v1833, 1.442695
      %v1836 = vpow.pop %v1835
      %v1837 = vmul.f32 %v1834, 1.442695
      %v1838 = vpow.pop %v1837
      %v1839 = vsel %vm782, %v1836, 0.0
      %1840 = vadd.xlane.f32.xlu0 %v1839
      %v1841 = vpop.xlane.xlu0 %1840
      %v1842 = vsel %vm786, %v1838, 0.0
      %1843 = vadd.xlane.f32.xlu0 %v1842
      %v1844 = vpop.xlane.xlu0 %1843
      %v1845 = vrcp.pop %v1841
      %v1846 = vrcp.pop %v1844
      %v1847 = vmul.f32 %v1836, %v1845
      %v1848 = vmul.f32 %v1838, %v1846
      %v1849 = vpack.c.bf16 %v1848, %v1847
      %v1850 = vpack.c.bf16 %v1773, %v1770
      %v1852 = vsel %vm782, %v1849, 0
      %v1855 = vand.u32 %v1850, %v814
      %1857 = vmatprep.subr.bf16.mxu0 0
      %1858 = vmatpush1.bf16.msra.mxu0 %v1855
      %1859 = vmatprep.subr.bf16.mxu0 0
      %1860 = vmatpush1.bf16.msra.mxu0 0
      %1861 = vmatprep.subr.bf16.mxu0 0
      %1862 = vmatpush1.bf16.msra.mxu0 0
      %1863 = vmatprep.subr.bf16.mxu0 0
      %1864 = vmatpush1.bf16.msra.mxu0 0
      %1865 = vmatprep.subr.bf16.mxu0 0
      %1866 = vmatpush1.bf16.msra.mxu0 0
      %1867 = vmatprep.subr.bf16.mxu0 0
      %1868 = vmatpush1.bf16.msra.mxu0 0
      %1869 = vmatprep.subr.bf16.mxu0 0
      %1870 = vmatpush1.bf16.msra.mxu0 0
      %1871 = vmatprep.subr.bf16.mxu0 0
      %1872 = vmatpush1.bf16.msra.mxu0 0
      %1873 = vmatprep.subr.bf16.mxu0 0
      %1874 = vmatpush1.bf16.msra.mxu0 0
      %1875 = vmatprep.subr.bf16.mxu0 0
      %1876 = vmatpush1.bf16.msra.mxu0 0
      %1877 = vmatprep.subr.bf16.mxu0 0
      %1878 = vmatpush1.bf16.msra.mxu0 0
      %1879 = vmatprep.subr.bf16.mxu0 0
      %1880 = vmatpush1.bf16.msra.mxu0 0
      %1881 = vmatprep.subr.bf16.mxu0 0
      %1882 = vmatpush1.bf16.msra.mxu0 0
      %1883 = vmatprep.subr.bf16.mxu0 0
      %1884 = vmatpush1.bf16.msra.mxu0 0
      %1885 = vmatprep.subr.bf16.mxu0 0
      %1886 = vmatpush1.bf16.msra.mxu0 0
      %1887 = vmatprep.subr.bf16.mxu0 0
      %1888 = vmatpush1.bf16.msra.mxu0 0
      %1889 = vmatprep.mubr.bf16.mxu0 0
      %1890 = vmatmul.mubr.bf16.gmra.mrb[0].mxu0 %v1852
      %v1891 = vpop.f32.mrb[0].mxu0
      %v1892 = vadd.f32 0.0, %v1891
      %v1893 = vpop.f32.mrb[0].mxu0
      %v1894 = vpop.f32.mrb[0].mxu0
      %v1895 = vadd.f32 0.0, %v1894
      %v1896 = vpop.f32.mrb[0].mxu0
      %1897 = vdwg.mxu0
      %s1898 = scalar_lea.vmem %s4, 12
      %v1899 = vld [vmem:[%s1898] sm:$0xf]
      %v1900 = vpack.c.bf16 %v1895, %v1892
      %v1902 = vsel %vm732, %v1900, 0
      %v1905 = vsel %vm811, %v1899, 0
      %1907 = vmatprep.subr.bf16.mxu0 0
      %1908 = vmatpush1.bf16.msra.mxu0 %v1905
      %1909 = vmatprep.subr.bf16.mxu0 0
      %1910 = vmatpush1.bf16.msra.mxu0 0
      %1911 = vmatprep.subr.bf16.mxu0 0
      %1912 = vmatpush1.bf16.msra.mxu0 0
      %1913 = vmatprep.subr.bf16.mxu0 0
      %1914 = vmatpush1.bf16.msra.mxu0 0
      %1915 = vmatprep.subr.bf16.mxu0 0
      %1916 = vmatpush1.bf16.msra.mxu0 0
      %1917 = vmatprep.subr.bf16.mxu0 0
      %1918 = vmatpush1.bf16.msra.mxu0 0
      %1919 = vmatprep.subr.bf16.mxu0 0
      %1920 = vmatpush1.bf16.msra.mxu0 0
      %1921 = vmatprep.subr.bf16.mxu0 0
      %1922 = vmatpush1.bf16.msra.mxu0 0
      %1923 = vmatprep.subr.bf16.mxu0 0
      %1924 = vmatpush1.bf16.msra.mxu0 0
      %1925 = vmatprep.subr.bf16.mxu0 0
      %1926 = vmatpush1.bf16.msra.mxu0 0
      %1927 = vmatprep.subr.bf16.mxu0 0
      %1928 = vmatpush1.bf16.msra.mxu0 0
      %1929 = vmatprep.subr.bf16.mxu0 0
      %1930 = vmatpush1.bf16.msra.mxu0 0
      %1931 = vmatprep.subr.bf16.mxu0 0
      %1932 = vmatpush1.bf16.msra.mxu0 0
      %1933 = vmatprep.subr.bf16.mxu0 0
      %1934 = vmatpush1.bf16.msra.mxu0 0
      %1935 = vmatprep.subr.bf16.mxu0 0
      %1936 = vmatpush1.bf16.msra.mxu0 0
      %1937 = vmatprep.subr.bf16.mxu0 0
      %1938 = vmatpush1.bf16.msra.mxu0 0
      %1939 = vmatprep.mubr.bf16.mxu0 0
      %1940 = vmatmul.mubr.bf16.gmra.mrb[0].mxu0 %v1902
      %v1941 = vpop.f32.mrb[0].mxu0
      %v1942 = vadd.f32 0.0, %v1941
      %v1943 = vpop.f32.mrb[0].mxu0
      %v1944 = vpop.f32.mrb[0].mxu0
      %v1945 = vadd.f32 0.0, %v1944
      %v1946 = vpop.f32.mrb[0].mxu0
      %1947 = vdwg.mxu0
      %v1948 = vadd.f32 %v1600, %v1942
      %v1949 = vadd.f32 %v1601, %v1945
      %v1950 = vadd.f32 %v514, %v1948
      %v1951 = vadd.f32 %v515, %v1949
      %v1952 = vadd.f32 %v1950, %v518
      %v1953 = vadd.f32 %v1951, %v518
      %v1954 = vsel %vm474, %v1952, 0.0
      %1955 = vadd.xlane.f32.xlu0 %v1954
      %v1956 = vpop.xlane.xlu0 %1955
      %v1957 = vsel %vm478, %v1953, 0.0
      %1958 = vadd.xlane.f32.xlu0 %v1957
      %v1959 = vpop.xlane.xlu0 %1958
      %v1960 = vmul.f32 %v1956, %v482
      %v1961 = vmul.f32 %v1959, %v482
      %v1962 = vsub.f32 %v1952, %v1960
      %v1963 = vsub.f32 %v1953, %v1961
      %v1964 = vmul.f32 %v1962, %v1962
      %v1965 = vmul.f32 %v1963, %v1963
      %v1966 = vsel %vm474, %v1964, 0.0
      %1967 = vadd.xlane.f32.xlu0 %v1966
      %v1968 = vpop.xlane.xlu0 %1967
      %v1969 = vsel %vm478, %v1965, 0.0
      %1970 = vadd.xlane.f32.xlu0 %v1969
      %v1971 = vpop.xlane.xlu0 %1970
      %v1972 = vmul.f32 %v1968, %v482
      %v1973 = vmul.f32 %v1971, %v482
      %v1974 = vadd.f32 %v1972, 1e-05
      %v1975 = vadd.f32 %v1973, 1e-05
      %v1976 = vrsqrt.pop %v1974
      %v1977 = vrsqrt.pop %v1975
      %v1978 = vmul.f32 %v1962, %v1976
      %v1979 = vmul.f32 %v1963, %v1977
      %v1980 = vmul.f32 %v1978, %v519
      %v1981 = vmul.f32 %v1979, %v519
      %v1982 = vadd.f32 %v1980, %v520
      %v1983 = vadd.f32 %v1981, %v520
      %v1984 = vld [vmem:[%s2 + $0x80] sm:$0xf]
      %v1985 = vld [vmem:[%s2 + $0x84] sm:$0xf]
      %v1986 = vld [vmem:[%s2 + $0x88] sm:$0xf]
      %v1987 = vld [vmem:[%s2 + $0x8c] sm:$0xf]
      %v1988 = vpack.c.bf16 %v1983, %v1982
      %v1993 = vunpack.c.l.b16 %v1984
      %v1994 = vunpack.c.l.b16 %v1985
      %v1995 = vunpack.c.l.b16 %v1986
      %v1996 = vunpack.c.l.b16 %v1987
      %v1997 = vpack.c.b16 %v1994, %v1993
      %v1998 = vpack.c.b16 %v1996, %v1995
      %v2002 = vsel %vm474, %v1988, 0
      %2004 = vmatprep.subr.bf16.mxu0 0
      %2005 = vmatpush1.bf16.msra.mxu0 %v1997
      %2006 = vmatprep.subr.bf16.mxu0 0
      %2007 = vmatpush1.bf16.msra.mxu0 %v1998
      %2008 = vmatprep.subr.bf16.mxu0 0
      %2009 = vmatpush1.bf16.msra.mxu0 0
      %2010 = vmatprep.subr.bf16.mxu0 0
      %2011 = vmatpush1.bf16.msra.mxu0 0
      %2012 = vmatprep.subr.bf16.mxu0 0
      %2013 = vmatpush1.bf16.msra.mxu0 0
      %2014 = vmatprep.subr.bf16.mxu0 0
      %2015 = vmatpush1.bf16.msra.mxu0 0
      %2016 = vmatprep.subr.bf16.mxu0 0
      %2017 = vmatpush1.bf16.msra.mxu0 0
      %2018 = vmatprep.subr.bf16.mxu0 0
      %2019 = vmatpush1.bf16.msra.mxu0 0
      %2020 = vmatprep.subr.bf16.mxu0 0
      %2021 = vmatpush1.bf16.msra.mxu0 0
      %2022 = vmatprep.subr.bf16.mxu0 0
      %2023 = vmatpush1.bf16.msra.mxu0 0
      %2024 = vmatprep.subr.bf16.mxu0 0
      %2025 = vmatpush1.bf16.msra.mxu0 0
      %2026 = vmatprep.subr.bf16.mxu0 0
      %2027 = vmatpush1.bf16.msra.mxu0 0
      %2028 = vmatprep.subr.bf16.mxu0 0
      %2029 = vmatpush1.bf16.msra.mxu0 0
      %2030 = vmatprep.subr.bf16.mxu0 0
      %2031 = vmatpush1.bf16.msra.mxu0 0
      %2032 = vmatprep.subr.bf16.mxu0 0
      %2033 = vmatpush1.bf16.msra.mxu0 0
      %2034 = vmatprep.subr.bf16.mxu0 0
      %2035 = vmatpush1.bf16.msra.mxu0 0
      %2036 = vmatprep.mubr.bf16.mxu0 0
      %2037 = vmatmul.mubr.bf16.gmra.mrb[0].mxu0 %v2002
      %v2038 = vpop.f32.mrb[0].mxu0
      %v2039 = vadd.f32 %v521, %v2038
      %v2040 = vpop.f32.mrb[0].mxu0
      %v2041 = vpop.f32.mrb[0].mxu0
      %v2042 = vadd.f32 %v521, %v2041
      %v2043 = vpop.f32.mrb[0].mxu0
      %2044 = vdwg.mxu0
      %v2045 = vmul.f32 %v2039, 0.5
      %v2046 = vmul.f32 %v2042, 0.5
      %v2047 = vmul.f32 %v2039, 0.044715
      %v2048 = vmul.f32 %v2042, 0.044715
      %v2049 = vmul.f32 %v2047, %v2039
      %v2050 = vmul.f32 %v2048, %v2042
      %v2051 = vmul.f32 %v2049, %v2039
      %v2052 = vmul.f32 %v2050, %v2042
      %v2053 = vadd.f32 %v2039, %v2051
      %v2054 = vadd.f32 %v2042, %v2052
      %v2055 = vmul.f32 %v2053, 0.7978846
      %v2056 = vmul.f32 %v2054, 0.7978846
      %v2057 = vtanh.pop %v2055
      %v2058 = vtanh.pop %v2056
      %v2059 = vadd.f32 %v2057, 1.0
      %v2060 = vadd.f32 %v2058, 1.0
      %v2061 = vmul.f32 %v2045, %v2059
      %v2062 = vmul.f32 %v2046, %v2060
      %v2063 = vld [vmem:[%s2 + $0x90] sm:$0xf]
      %v2064 = vld [vmem:[%s2 + $0x94] sm:$0xf]
      %v2065 = vld [vmem:[%s2 + $0x98] sm:$0xf]
      %v2066 = vld [vmem:[%s2 + $0x9c] sm:$0xf]
      %v2067 = vld [vmem:[%s2 + $0xa0] sm:$0xf]
      %v2068 = vld [vmem:[%s2 + $0xa4] sm:$0xf]
      %v2069 = vld [vmem:[%s2 + $0xa8] sm:$0xf]
      %v2070 = vld [vmem:[%s2 + $0xac] sm:$0xf]
      %v2071 = vpack.c.bf16 %v2062, %v2061
      %v2080 = vunpack.c.l.b16 %v2063
      %v2081 = vunpack.c.l.b16 %v2064
      %v2082 = vunpack.c.l.b16 %v2065
      %v2083 = vunpack.c.l.b16 %v2066
      %v2084 = vunpack.c.l.b16 %v2067
      %v2085 = vunpack.c.l.b16 %v2068
      %v2086 = vunpack.c.l.b16 %v2069
      %v2087 = vunpack.c.l.b16 %v2070
      %v2088 = vpack.c.b16 %v2081, %v2080
      %v2089 = vpack.c.b16 %v2083, %v2082
      %v2090 = vpack.c.b16 %v2085, %v2084
      %v2091 = vpack.c.b16 %v2087, %v2086
      %vm2096 = vcmask 523264
      %v2098 = vsel %vm2096, %v2071, 0
      %2100 = vmatprep.subr.bf16.mxu0 0
      %2101 = vmatpush1.bf16.msra.mxu0 %v2088
      %2102 = vmatprep.subr.bf16.mxu0 0
      %2103 = vmatpush1.bf16.msra.mxu0 %v2089
      %2104 = vmatprep.subr.bf16.mxu0 0
      %2105 = vmatpush1.bf16.msra.mxu0 %v2090
      %2106 = vmatprep.subr.bf16.mxu0 0
      %2107 = vmatpush1.bf16.msra.mxu0 %v2091
      %2108 = vmatprep.subr.bf16.mxu0 0
      %2109 = vmatpush1.bf16.msra.mxu0 0
      %2110 = vmatprep.subr.bf16.mxu0 0
      %2111 = vmatpush1.bf16.msra.mxu0 0
      %2112 = vmatprep.subr.bf16.mxu0 0
      %2113 = vmatpush1.bf16.msra.mxu0 0
      %2114 = vmatprep.subr.bf16.mxu0 0
      %2115 = vmatpush1.bf16.msra.mxu0 0
      %2116 = vmatprep.subr.bf16.mxu0 0
      %2117 = vmatpush1.bf16.msra.mxu0 0
      %2118 = vmatprep.subr.bf16.mxu0 0
      %2119 = vmatpush1.bf16.msra.mxu0 0
      %2120 = vmatprep.subr.bf16.mxu0 0
      %2121 = vmatpush1.bf16.msra.mxu0 0
      %2122 = vmatprep.subr.bf16.mxu0 0
      %2123 = vmatpush1.bf16.msra.mxu0 0
      %2124 = vmatprep.subr.bf16.mxu0 0
      %2125 = vmatpush1.bf16.msra.mxu0 0
      %2126 = vmatprep.subr.bf16.mxu0 0
      %2127 = vmatpush1.bf16.msra.mxu0 0
      %2128 = vmatprep.subr.bf16.mxu0 0
      %2129 = vmatpush1.bf16.msra.mxu0 0
      %2130 = vmatprep.subr.bf16.mxu0 0
      %2131 = vmatpush1.bf16.msra.mxu0 0
      %2132 = vmatprep.mubr.bf16.mxu0 0
      %2133 = vmatmul.mubr.bf16.gmra.mrb[0].mxu0 %v2098
      %v2134 = vpop.f32.mrb[0].mxu0
      %v2135 = vadd.f32 %v522, %v2134
      %v2136 = vpop.f32.mrb[0].mxu0
      %v2137 = vpop.f32.mrb[0].mxu0
      %v2138 = vadd.f32 %v522, %v2137
      %v2139 = vpop.f32.mrb[0].mxu0
      %2140 = vdwg.mxu0
      %v2141 = vadd.f32 %v1952, %v2135
      %v2142 = vadd.f32 %v1953, %v2138
      %v2143 = vld [vmem:[%s1 + $0x40] ss:$0 sm:$0xff]
      %v2144 = vld [vmem:[%s1 + $0x41] ss:$0 sm:$0xff]
      %v2145 = vld [vmem:[%s1 + $0x42] ss:$0 sm:$0xff]
      %v2146 = vld [vmem:[%s1 + $0x43] ss:$0 sm:$0xff]
      %v2147 = vld [vmem:[%s1 + $0x44] ss:$0 sm:$0xff]
      %v2148 = vld [vmem:[%s1 + $0x45] ss:$0 sm:$0xff]
      %v2149 = vld [vmem:[%s1 + $0x46] ss:$0 sm:$0xff]
      %v2150 = vsel %vm474, %v2141, 0.0
      %2151 = vadd.xlane.f32.xlu0 %v2150
      %v2152 = vpop.xlane.xlu0 %2151
      %v2153 = vsel %vm478, %v2142, 0.0
      %2154 = vadd.xlane.f32.xlu0 %v2153
      %v2155 = vpop.xlane.xlu0 %2154
      %v2156 = vmul.f32 %v2152, %v482
      %v2157 = vmul.f32 %v2155, %v482
      %v2158 = vsub.f32 %v2141, %v2156
      %v2159 = vsub.f32 %v2142, %v2157
      %v2160 = vmul.f32 %v2158, %v2158
      %v2161 = vmul.f32 %v2159, %v2159
      %v2162 = vsel %vm474, %v2160, 0.0
      %2163 = vadd.xlane.f32.xlu0 %v2162
      %v2164 = vpop.xlane.xlu0 %2163
      %v2165 = vsel %vm478, %v2161, 0.0
      %2166 = vadd.xlane.f32.xlu0 %v2165
      %v2167 = vpop.xlane.xlu0 %2166
      %v2168 = vmul.f32 %v2164, %v482
      %v2169 = vmul.f32 %v2167, %v482
      %v2170 = vadd.f32 %v2168, 1e-05
      %v2171 = vadd.f32 %v2169, 1e-05
      %v2172 = vrsqrt.pop %v2170
      %v2173 = vrsqrt.pop %v2171
      %v2174 = vmul.f32 %v2158, %v2172
      %v2175 = vmul.f32 %v2159, %v2173
      %v2176 = vmul.f32 %v2174, %v2143
      %v2177 = vmul.f32 %v2175, %v2143
      %v2178 = vadd.f32 %v2176, %v2144
      %v2179 = vadd.f32 %v2177, %v2144
      %v2180 = vpack.c.bf16 %v2179, %v2178
      %s2181 = scalar_lea.vmem %s3, 192
      %v2182 = vld [vmem:[%s2181] sm:$0xf]
      %v2183 = vld [vmem:[%s2181 + $0x4] sm:$0xf]
      %v2184 = vld [vmem:[%s2181 + $0x8] sm:$0xf]
      %v2185 = vld [vmem:[%s2181 + $0xc] sm:$0xf]
      %v2190 = vunpack.c.l.b16 %v2182
      %v2191 = vunpack.c.l.b16 %v2183
      %v2192 = vunpack.c.l.b16 %v2184
      %v2193 = vunpack.c.l.b16 %v2185
      %v2194 = vpack.c.b16 %v2191, %v2190
      %v2195 = vpack.c.b16 %v2193, %v2192
      %v2199 = vsel %vm474, %v2180, 0
      %2201 = vmatprep.subr.bf16.mxu0 0
      %2202 = vmatpush1.bf16.msra.mxu0 %v2194
      %2203 = vmatprep.subr.bf16.mxu0 0
      %2204 = vmatpush1.bf16.msra.mxu0 %v2195
      %2205 = vmatprep.subr.bf16.mxu0 0
      %2206 = vmatpush1.bf16.msra.mxu0 0
      %2207 = vmatprep.subr.bf16.mxu0 0
      %2208 = vmatpush1.bf16.msra.mxu0 0
      %2209 = vmatprep.subr.bf16.mxu0 0
      %2210 = vmatpush1.bf16.msra.mxu0 0
      %2211 = vmatprep.subr.bf16.mxu0 0
      %2212 = vmatpush1.bf16.msra.mxu0 0
      %2213 = vmatprep.subr.bf16.mxu0 0
      %2214 = vmatpush1.bf16.msra.mxu0 0
      %2215 = vmatprep.subr.bf16.mxu0 0
      %2216 = vmatpush1.bf16.msra.mxu0 0
      %2217 = vmatprep.subr.bf16.mxu0 0
      %2218 = vmatpush1.bf16.msra.mxu0 0
      %2219 = vmatprep.subr.bf16.mxu0 0
      %2220 = vmatpush1.bf16.msra.mxu0 0
      %2221 = vmatprep.subr.bf16.mxu0 0
      %2222 = vmatpush1.bf16.msra.mxu0 0
      %2223 = vmatprep.subr.bf16.mxu0 0
      %2224 = vmatpush1.bf16.msra.mxu0 0
      %2225 = vmatprep.subr.bf16.mxu0 0
      %2226 = vmatpush1.bf16.msra.mxu0 0
      %2227 = vmatprep.subr.bf16.mxu0 0
      %2228 = vmatpush1.bf16.msra.mxu0 0
      %2229 = vmatprep.subr.bf16.mxu0 0
      %2230 = vmatpush1.bf16.msra.mxu0 0
      %2231 = vmatprep.subr.bf16.mxu0 0
      %2232 = vmatpush1.bf16.msra.mxu0 0
      %2233 = vmatprep.mubr.bf16.mxu0 0
      %2234 = vmatmul.mubr.bf16.gmra.mrb[0].mxu0 %v2199
      %v2235 = vpop.f32.mrb[0].mxu0
      %v2236 = vadd.f32 0.0, %v2235
      %v2237 = vpop.f32.mrb[0].mxu0
      %v2238 = vpop.f32.mrb[0].mxu0
      %v2239 = vadd.f32 0.0, %v2238
      %v2240 = vpop.f32.mrb[0].mxu0
      %2241 = vdwg.mxu0
      %s2242 = scalar_lea.vmem %s3, 208
      %v2243 = vld [vmem:[%s2242] sm:$0xf]
      %v2244 = vld [vmem:[%s2242 + $0x4] sm:$0xf]
      %v2245 = vld [vmem:[%s2242 + $0x8] sm:$0xf]
      %v2246 = vld [vmem:[%s2242 + $0xc] sm:$0xf]
      %v2251 = vunpack.c.l.b16 %v2243
      %v2252 = vunpack.c.l.b16 %v2244
      %v2253 = vunpack.c.l.b16 %v2245
      %v2254 = vunpack.c.l.b16 %v2246
      %v2255 = vpack.c.b16 %v2252, %v2251
      %v2256 = vpack.c.b16 %v2254, %v2253
      %2259 = vmatprep.subr.bf16.mxu0 0
      %2260 = vmatpush1.bf16.msra.mxu0 %v2255
      %2261 = vmatprep.subr.bf16.mxu0 0
      %2262 = vmatpush1.bf16.msra.mxu0 %v2256
      %2263 = vmatprep.subr.bf16.mxu0 0
      %2264 = vmatpush1.bf16.msra.mxu0 0
      %2265 = vmatprep.subr.bf16.mxu0 0
      %2266 = vmatpush1.bf16.msra.mxu0 0
      %2267 = vmatprep.subr.bf16.mxu0 0
      %2268 = vmatpush1.bf16.msra.mxu0 0
      %2269 = vmatprep.subr.bf16.mxu0 0
      %2270 = vmatpush1.bf16.msra.mxu0 0
      %2271 = vmatprep.subr.bf16.mxu0 0
      %2272 = vmatpush1.bf16.msra.mxu0 0
      %2273 = vmatprep.subr.bf16.mxu0 0
      %2274 = vmatpush1.bf16.msra.mxu0 0
      %2275 = vmatprep.subr.bf16.mxu0 0
      %2276 = vmatpush1.bf16.msra.mxu0 0
      %2277 = vmatprep.subr.bf16.mxu0 0
      %2278 = vmatpush1.bf16.msra.mxu0 0
      %2279 = vmatprep.subr.bf16.mxu0 0
      %2280 = vmatpush1.bf16.msra.mxu0 0
      %2281 = vmatprep.subr.bf16.mxu0 0
      %2282 = vmatpush1.bf16.msra.mxu0 0
      %2283 = vmatprep.subr.bf16.mxu0 0
      %2284 = vmatpush1.bf16.msra.mxu0 0
      %2285 = vmatprep.subr.bf16.mxu0 0
      %2286 = vmatpush1.bf16.msra.mxu0 0
      %2287 = vmatprep.subr.bf16.mxu0 0
      %2288 = vmatpush1.bf16.msra.mxu0 0
      %2289 = vmatprep.subr.bf16.mxu0 0
      %2290 = vmatpush1.bf16.msra.mxu0 0
      %2291 = vmatprep.mubr.bf16.mxu0 0
      %2292 = vmatmul.mubr.bf16.gmra.mrb[0].mxu0 %v2199
      %v2293 = vpop.f32.mrb[0].mxu0
      %v2294 = vadd.f32 0.0, %v2293
      %v2295 = vpop.f32.mrb[0].mxu0
      %v2296 = vpop.f32.mrb[0].mxu0
      %v2297 = vadd.f32 0.0, %v2296
      %v2298 = vpop.f32.mrb[0].mxu0
      %2299 = vdwg.mxu0
      %s2300 = scalar_lea.vmem %s3, 224
      %v2301 = vld [vmem:[%s2300] sm:$0xf]
      %v2302 = vld [vmem:[%s2300 + $0x4] sm:$0xf]
      %v2303 = vld [vmem:[%s2300 + $0x8] sm:$0xf]
      %v2304 = vld [vmem:[%s2300 + $0xc] sm:$0xf]
      %v2309 = vunpack.c.l.b16 %v2301
      %v2310 = vunpack.c.l.b16 %v2302
      %v2311 = vunpack.c.l.b16 %v2303
      %v2312 = vunpack.c.l.b16 %v2304
      %v2313 = vpack.c.b16 %v2310, %v2309
      %v2314 = vpack.c.b16 %v2312, %v2311
      %2317 = vmatprep.subr.bf16.mxu0 0
      %2318 = vmatpush1.bf16.msra.mxu0 %v2313
      %2319 = vmatprep.subr.bf16.mxu0 0
      %2320 = vmatpush1.bf16.msra.mxu0 %v2314
      %2321 = vmatprep.subr.bf16.mxu0 0
      %2322 = vmatpush1.bf16.msra.mxu0 0
      %2323 = vmatprep.subr.bf16.mxu0 0
      %2324 = vmatpush1.bf16.msra.mxu0 0
      %2325 = vmatprep.subr.bf16.mxu0 0
      %2326 = vmatpush1.bf16.msra.mxu0 0
      %2327 = vmatprep.subr.bf16.mxu0 0
      %2328 = vmatpush1.bf16.msra.mxu0 0
      %2329 = vmatprep.subr.bf16.mxu0 0
      %2330 = vmatpush1.bf16.msra.mxu0 0
      %2331 = vmatprep.subr.bf16.mxu0 0
      %2332 = vmatpush1.bf16.msra.mxu0 0
      %2333 = vmatprep.subr.bf16.mxu0 0
      %2334 = vmatpush1.bf16.msra.mxu0 0
      %2335 = vmatprep.subr.bf16.mxu0 0
      %2336 = vmatpush1.bf16.msra.mxu0 0
      %2337 = vmatprep.subr.bf16.mxu0 0
      %2338 = vmatpush1.bf16.msra.mxu0 0
      %2339 = vmatprep.subr.bf16.mxu0 0
      %2340 = vmatpush1.bf16.msra.mxu0 0
      %2341 = vmatprep.subr.bf16.mxu0 0
      %2342 = vmatpush1.bf16.msra.mxu0 0
      %2343 = vmatprep.subr.bf16.mxu0 0
      %2344 = vmatpush1.bf16.msra.mxu0 0
      %2345 = vmatprep.subr.bf16.mxu0 0
      %2346 = vmatpush1.bf16.msra.mxu0 0
      %2347 = vmatprep.subr.bf16.mxu0 0
      %2348 = vmatpush1.bf16.msra.mxu0 0
      %2349 = vmatprep.mubr.bf16.mxu0 0
      %2350 = vmatmul.mubr.bf16.gmra.mrb[0].mxu0 %v2199
      %v2351 = vpop.f32.mrb[0].mxu0
      %v2352 = vadd.f32 0.0, %v2351
      %v2353 = vpop.f32.mrb[0].mxu0
      %v2354 = vpop.f32.mrb[0].mxu0
      %v2355 = vadd.f32 0.0, %v2354
      %v2356 = vpop.f32.mrb[0].mxu0
      %2357 = vdwg.mxu0
      %v2358 = vpack.c.bf16 %v2239, %v2236
      %v2359 = vpack.c.bf16 %v2297, %v2294
      %v2361 = vsel %vm732, %v2358, 0
      %v2364 = vsel %vm732, %v2359, 0
      %2366 = vmatprep.subr.bf16.mxu0 0
      %2367 = vmatpush1.bf16.xpose.msra.mxu0 %v2364
      %2368 = vmatprep.subr.bf16.mxu0 0
      %2369 = vmatpush1.bf16.xpose.msra.mxu0 0
      %2370 = vmatprep.subr.bf16.mxu0 0
      %2371 = vmatpush1.bf16.xpose.msra.mxu0 0
      %2372 = vmatprep.subr.bf16.mxu0 0
      %2373 = vmatpush1.bf16.xpose.msra.mxu0 0
      %2374 = vmatprep.subr.bf16.mxu0 0
      %2375 = vmatpush1.bf16.xpose.msra.mxu0 0
      %2376 = vmatprep.subr.bf16.mxu0 0
      %2377 = vmatpush1.bf16.xpose.msra.mxu0 0
      %2378 = vmatprep.subr.bf16.mxu0 0
      %2379 = vmatpush1.bf16.xpose.msra.mxu0 0
      %2380 = vmatprep.subr.bf16.mxu0 0
      %2381 = vmatpush1.bf16.xpose.msra.mxu0 0
      %2382 = vmatprep.subr.bf16.mxu0 0
      %2383 = vmatpush1.bf16.xpose.msra.mxu0 0
      %2384 = vmatprep.subr.bf16.mxu0 0
      %2385 = vmatpush1.bf16.xpose.msra.mxu0 0
      %2386 = vmatprep.subr.bf16.mxu0 0
      %2387 = vmatpush1.bf16.xpose.msra.mxu0 0
      %2388 = vmatprep.subr.bf16.mxu0 0
      %2389 = vmatpush1.bf16.xpose.msra.mxu0 0
      %2390 = vmatprep.subr.bf16.mxu0 0
      %2391 = vmatpush1.bf16.xpose.msra.mxu0 0
      %2392 = vmatprep.subr.bf16.mxu0 0
      %2393 = vmatpush1.bf16.xpose.msra.mxu0 0
      %2394 = vmatprep.subr.bf16.mxu0 0
      %2395 = vmatpush1.bf16.xpose.msra.mxu0 0
      %2396 = vmatprep.subr.bf16.mxu0 0
      %2397 = vmatpush1.bf16.xpose.msra.mxu0 0
      %2398 = vmatprep.mubr.bf16.mxu0 0
      %2399 = vmatmul.mubr.bf16.gmra.mrb[0].mxu0 %v2361
      %v2400 = vpop.f32.mrb[0].mxu0
      %v2401 = vadd.f32 0.0, %v2400
      %v2402 = vpop.f32.mrb[0].mxu0
      %v2403 = vpop.f32.mrb[0].mxu0
      %v2404 = vadd.f32 0.0, %v2403
      %v2405 = vpop.f32.mrb[0].mxu0
      %2406 = vdwg.mxu0
      %v2407 = vmul.f32 %v2401, 0.35355338
      %v2408 = vmul.f32 %v2404, 0.35355338
      %v2409 = vsel %vm782, %v2407, -inf
      %2410 = vmax.xlane.f32.xlu0 %v2409
      %v2411 = vpop.xlane.xlu0 %2410
      %v2412 = vsel %vm786, %v2408, -inf
      %2413 = vmax.xlane.f32.xlu0 %v2412
      %v2414 = vpop.xlane.xlu0 %2413
      %v2415 = vsub.f32 %v2407, %v2411
      %v2416 = vsub.f32 %v2408, %v2414
      %v2417 = vmul.f32 %v2415, 1.442695
      %v2418 = vpow.pop %v2417
      %v2419 = vmul.f32 %v2416, 1.442695
      %v2420 = vpow.pop %v2419
      %v2421 = vsel %vm782, %v2418, 0.0
      %2422 = vadd.xlane.f32.xlu0 %v2421
      %v2423 = vpop.xlane.xlu0 %2422
      %v2424 = vsel %vm786, %v2420, 0.0
      %2425 = vadd.xlane.f32.xlu0 %v2424
      %v2426 = vpop.xlane.xlu0 %2425
      %v2427 = vrcp.pop %v2423
      %v2428 = vrcp.pop %v2426
      %v2429 = vmul.f32 %v2418, %v2427
      %v2430 = vmul.f32 %v2420, %v2428
      %v2431 = vpack.c.bf16 %v2430, %v2429
      %v2432 = vpack.c.bf16 %v2355, %v2352
      %v2434 = vsel %vm782, %v2431, 0
      %v2437 = vand.u32 %v2432, %v814
      %2439 = vmatprep.subr.bf16.mxu0 0
      %2440 = vmatpush1.bf16.msra.mxu0 %v2437
      %2441 = vmatprep.subr.bf16.mxu0 0
      %2442 = vmatpush1.bf16.msra.mxu0 0
      %2443 = vmatprep.subr.bf16.mxu0 0
      %2444 = vmatpush1.bf16.msra.mxu0 0
      %2445 = vmatprep.subr.bf16.mxu0 0
      %2446 = vmatpush1.bf16.msra.mxu0 0
      %2447 = vmatprep.subr.bf16.mxu0 0
      %2448 = vmatpush1.bf16.msra.mxu0 0
      %2449 = vmatprep.subr.bf16.mxu0 0
      %2450 = vmatpush1.bf16.msra.mxu0 0
      %2451 = vmatprep.subr.bf16.mxu0 0
      %2452 = vmatpush1.bf16.msra.mxu0 0
      %2453 = vmatprep.subr.bf16.mxu0 0
      %2454 = vmatpush1.bf16.msra.mxu0 0
      %2455 = vmatprep.subr.bf16.mxu0 0
      %2456 = vmatpush1.bf16.msra.mxu0 0
      %2457 = vmatprep.subr.bf16.mxu0 0
      %2458 = vmatpush1.bf16.msra.mxu0 0
      %2459 = vmatprep.subr.bf16.mxu0 0
      %2460 = vmatpush1.bf16.msra.mxu0 0
      %2461 = vmatprep.subr.bf16.mxu0 0
      %2462 = vmatpush1.bf16.msra.mxu0 0
      %2463 = vmatprep.subr.bf16.mxu0 0
      %2464 = vmatpush1.bf16.msra.mxu0 0
      %2465 = vmatprep.subr.bf16.mxu0 0
      %2466 = vmatpush1.bf16.msra.mxu0 0
      %2467 = vmatprep.subr.bf16.mxu0 0
      %2468 = vmatpush1.bf16.msra.mxu0 0
      %2469 = vmatprep.subr.bf16.mxu0 0
      %2470 = vmatpush1.bf16.msra.mxu0 0
      %2471 = vmatprep.mubr.bf16.mxu0 0
      %2472 = vmatmul.mubr.bf16.gmra.mrb[0].mxu0 %v2434
      %v2473 = vpop.f32.mrb[0].mxu0
      %v2474 = vadd.f32 0.0, %v2473
      %v2475 = vpop.f32.mrb[0].mxu0
      %v2476 = vpop.f32.mrb[0].mxu0
      %v2477 = vadd.f32 0.0, %v2476
      %v2478 = vpop.f32.mrb[0].mxu0
      %2479 = vdwg.mxu0
      %s2480 = scalar_lea.vmem %s4, 16
      %v2481 = vld [vmem:[%s2480] sm:$0xf]
      %v2482 = vpack.c.bf16 %v2477, %v2474
      %s2483 = scalar_lea.vmem %s3, 240
      %v2484 = vld [vmem:[%s2483] sm:$0xf]
      %v2485 = vld [vmem:[%s2483 + $0x4] sm:$0xf]
      %v2486 = vld [vmem:[%s2483 + $0x8] sm:$0xf]
      %v2487 = vld [vmem:[%s2483 + $0xc] sm:$0xf]
      %v2492 = vunpack.c.l.b16 %v2484
      %v2493 = vunpack.c.l.b16 %v2485
      %v2494 = vunpack.c.l.b16 %v2486
      %v2495 = vunpack.c.l.b16 %v2487
      %v2496 = vpack.c.b16 %v2493, %v2492
      %v2497 = vpack.c.b16 %v2495, %v2494
      %2500 = vmatprep.subr.bf16.mxu0 0
      %2501 = vmatpush1.bf16.msra.mxu0 %v2496
      %2502 = vmatprep.subr.bf16.mxu0 0
      %2503 = vmatpush1.bf16.msra.mxu0 %v2497
      %2504 = vmatprep.subr.bf16.mxu0 0
      %2505 = vmatpush1.bf16.msra.mxu0 0
      %2506 = vmatprep.subr.bf16.mxu0 0
      %2507 = vmatpush1.bf16.msra.mxu0 0
      %2508 = vmatprep.subr.bf16.mxu0 0
      %2509 = vmatpush1.bf16.msra.mxu0 0
      %2510 = vmatprep.subr.bf16.mxu0 0
      %2511 = vmatpush1.bf16.msra.mxu0 0
      %2512 = vmatprep.subr.bf16.mxu0 0
      %2513 = vmatpush1.bf16.msra.mxu0 0
      %2514 = vmatprep.subr.bf16.mxu0 0
      %2515 = vmatpush1.bf16.msra.mxu0 0
      %2516 = vmatprep.subr.bf16.mxu0 0
      %2517 = vmatpush1.bf16.msra.mxu0 0
      %2518 = vmatprep.subr.bf16.mxu0 0
      %2519 = vmatpush1.bf16.msra.mxu0 0
      %2520 = vmatprep.subr.bf16.mxu0 0
      %2521 = vmatpush1.bf16.msra.mxu0 0
      %2522 = vmatprep.subr.bf16.mxu0 0
      %2523 = vmatpush1.bf16.msra.mxu0 0
      %2524 = vmatprep.subr.bf16.mxu0 0
      %2525 = vmatpush1.bf16.msra.mxu0 0
      %2526 = vmatprep.subr.bf16.mxu0 0
      %2527 = vmatpush1.bf16.msra.mxu0 0
      %2528 = vmatprep.subr.bf16.mxu0 0
      %2529 = vmatpush1.bf16.msra.mxu0 0
      %2530 = vmatprep.subr.bf16.mxu0 0
      %2531 = vmatpush1.bf16.msra.mxu0 0
      %2532 = vmatprep.mubr.bf16.mxu0 0
      %2533 = vmatmul.mubr.bf16.gmra.mrb[0].mxu0 %v2199
      %v2534 = vpop.f32.mrb[0].mxu0
      %v2535 = vadd.f32 0.0, %v2534
      %v2536 = vpop.f32.mrb[0].mxu0
      %v2537 = vpop.f32.mrb[0].mxu0
      %v2538 = vadd.f32 0.0, %v2537
      %v2539 = vpop.f32.mrb[0].mxu0
      %2540 = vdwg.mxu0
      %s2541 = scalar_lea.vmem %s3, 256
      %v2542 = vld [vmem:[%s2541] sm:$0xf]
      %v2543 = vld [vmem:[%s2541 + $0x4] sm:$0xf]
      %v2544 = vld [vmem:[%s2541 + $0x8] sm:$0xf]
      %v2545 = vld [vmem:[%s2541 + $0xc] sm:$0xf]
      %v2550 = vunpack.c.l.b16 %v2542
      %v2551 = vunpack.c.l.b16 %v2543
      %v2552 = vunpack.c.l.b16 %v2544
      %v2553 = vunpack.c.l.b16 %v2545
      %v2554 = vpack.c.b16 %v2551, %v2550
      %v2555 = vpack.c.b16 %v2553, %v2552
      %2558 = vmatprep.subr.bf16.mxu0 0
      %2559 = vmatpush1.bf16.msra.mxu0 %v2554
      %2560 = vmatprep.subr.bf16.mxu0 0
      %2561 = vmatpush1.bf16.msra.mxu0 %v2555
      %2562 = vmatprep.subr.bf16.mxu0 0
      %2563 = vmatpush1.bf16.msra.mxu0 0
      %2564 = vmatprep.subr.bf16.mxu0 0
      %2565 = vmatpush1.bf16.msra.mxu0 0
      %2566 = vmatprep.subr.bf16.mxu0 0
      %2567 = vmatpush1.bf16.msra.mxu0 0
      %2568 = vmatprep.subr.bf16.mxu0 0
      %2569 = vmatpush1.bf16.msra.mxu0 0
      %2570 = vmatprep.subr.bf16.mxu0 0
      %2571 = vmatpush1.bf16.msra.mxu0 0
      %2572 = vmatprep.subr.bf16.mxu0 0
      %2573 = vmatpush1.bf16.msra.mxu0 0
      %2574 = vmatprep.subr.bf16.mxu0 0
      %2575 = vmatpush1.bf16.msra.mxu0 0
      %2576 = vmatprep.subr.bf16.mxu0 0
      %2577 = vmatpush1.bf16.msra.mxu0 0
      %2578 = vmatprep.subr.bf16.mxu0 0
      %2579 = vmatpush1.bf16.msra.mxu0 0
      %2580 = vmatprep.subr.bf16.mxu0 0
      %2581 = vmatpush1.bf16.msra.mxu0 0
      %2582 = vmatprep.subr.bf16.mxu0 0
      %2583 = vmatpush1.bf16.msra.mxu0 0
      %2584 = vmatprep.subr.bf16.mxu0 0
      %2585 = vmatpush1.bf16.msra.mxu0 0
      %2586 = vmatprep.subr.bf16.mxu0 0
      %2587 = vmatpush1.bf16.msra.mxu0 0
      %2588 = vmatprep.subr.bf16.mxu0 0
      %2589 = vmatpush1.bf16.msra.mxu0 0
      %2590 = vmatprep.mubr.bf16.mxu0 0
      %2591 = vmatmul.mubr.bf16.gmra.mrb[0].mxu0 %v2199
      %v2592 = vpop.f32.mrb[0].mxu0
      %v2593 = vadd.f32 0.0, %v2592
      %v2594 = vpop.f32.mrb[0].mxu0
      %v2595 = vpop.f32.mrb[0].mxu0
      %v2596 = vadd.f32 0.0, %v2595
      %v2597 = vpop.f32.mrb[0].mxu0
      %2598 = vdwg.mxu0
      %s2599 = scalar_lea.vmem %s3, 272
      %v2600 = vld [vmem:[%s2599] sm:$0xf]
      %v2601 = vld [vmem:[%s2599 + $0x4] sm:$0xf]
      %v2602 = vld [vmem:[%s2599 + $0x8] sm:$0xf]
      %v2603 = vld [vmem:[%s2599 + $0xc] sm:$0xf]
      %v2608 = vunpack.c.l.b16 %v2600
      %v2609 = vunpack.c.l.b16 %v2601
      %v2610 = vunpack.c.l.b16 %v2602
      %v2611 = vunpack.c.l.b16 %v2603
      %v2612 = vpack.c.b16 %v2609, %v2608
      %v2613 = vpack.c.b16 %v2611, %v2610
      %2616 = vmatprep.subr.bf16.mxu0 0
      %2617 = vmatpush1.bf16.msra.mxu0 %v2612
      %2618 = vmatprep.subr.bf16.mxu0 0
      %2619 = vmatpush1.bf16.msra.mxu0 %v2613
      %2620 = vmatprep.subr.bf16.mxu0 0
      %2621 = vmatpush1.bf16.msra.mxu0 0
      %2622 = vmatprep.subr.bf16.mxu0 0
      %2623 = vmatpush1.bf16.msra.mxu0 0
      %2624 = vmatprep.subr.bf16.mxu0 0
      %2625 = vmatpush1.bf16.msra.mxu0 0
      %2626 = vmatprep.subr.bf16.mxu0 0
      %2627 = vmatpush1.bf16.msra.mxu0 0
      %2628 = vmatprep.subr.bf16.mxu0 0
      %2629 = vmatpush1.bf16.msra.mxu0 0
      %2630 = vmatprep.subr.bf16.mxu0 0
      %2631 = vmatpush1.bf16.msra.mxu0 0
      %2632 = vmatprep.subr.bf16.mxu0 0
      %2633 = vmatpush1.bf16.msra.mxu0 0
      %2634 = vmatprep.subr.bf16.mxu0 0
      %2635 = vmatpush1.bf16.msra.mxu0 0
      %2636 = vmatprep.subr.bf16.mxu0 0
      %2637 = vmatpush1.bf16.msra.mxu0 0
      %2638 = vmatprep.subr.bf16.mxu0 0
      %2639 = vmatpush1.bf16.msra.mxu0 0
      %2640 = vmatprep.subr.bf16.mxu0 0
      %2641 = vmatpush1.bf16.msra.mxu0 0
      %2642 = vmatprep.subr.bf16.mxu0 0
      %2643 = vmatpush1.bf16.msra.mxu0 0
      %2644 = vmatprep.subr.bf16.mxu0 0
      %2645 = vmatpush1.bf16.msra.mxu0 0
      %2646 = vmatprep.subr.bf16.mxu0 0
      %2647 = vmatpush1.bf16.msra.mxu0 0
      %2648 = vmatprep.mubr.bf16.mxu0 0
      %2649 = vmatmul.mubr.bf16.gmra.mrb[0].mxu0 %v2199
      %v2650 = vpop.f32.mrb[0].mxu0
      %v2651 = vadd.f32 0.0, %v2650
      %v2652 = vpop.f32.mrb[0].mxu0
      %v2653 = vpop.f32.mrb[0].mxu0
      %v2654 = vadd.f32 0.0, %v2653
      %v2655 = vpop.f32.mrb[0].mxu0
      %2656 = vdwg.mxu0
      %v2657 = vpack.c.bf16 %v2538, %v2535
      %v2658 = vpack.c.bf16 %v2596, %v2593
      %v2660 = vsel %vm732, %v2657, 0
      %v2663 = vsel %vm732, %v2658, 0
      %2665 = vmatprep.subr.bf16.mxu0 0
      %2666 = vmatpush1.bf16.xpose.msra.mxu0 %v2663
      %2667 = vmatprep.subr.bf16.mxu0 0
      %2668 = vmatpush1.bf16.xpose.msra.mxu0 0
      %2669 = vmatprep.subr.bf16.mxu0 0
      %2670 = vmatpush1.bf16.xpose.msra.mxu0 0
      %2671 = vmatprep.subr.bf16.mxu0 0
      %2672 = vmatpush1.bf16.xpose.msra.mxu0 0
      %2673 = vmatprep.subr.bf16.mxu0 0
      %2674 = vmatpush1.bf16.xpose.msra.mxu0 0
      %2675 = vmatprep.subr.bf16.mxu0 0
      %2676 = vmatpush1.bf16.xpose.msra.mxu0 0
      %2677 = vmatprep.subr.bf16.mxu0 0
      %2678 = vmatpush1.bf16.xpose.msra.mxu0 0
      %2679 = vmatprep.subr.bf16.mxu0 0
      %2680 = vmatpush1.bf16.xpose.msra.mxu0 0
      %2681 = vmatprep.subr.bf16.mxu0 0
      %2682 = vmatpush1.bf16.xpose.msra.mxu0 0
      %2683 = vmatprep.subr.bf16.mxu0 0
      %2684 = vmatpush1.bf16.xpose.msra.mxu0 0
      %2685 = vmatprep.subr.bf16.mxu0 0
      %2686 = vmatpush1.bf16.xpose.msra.mxu0 0
      %2687 = vmatprep.subr.bf16.mxu0 0
      %2688 = vmatpush1.bf16.xpose.msra.mxu0 0
      %2689 = vmatprep.subr.bf16.mxu0 0
      %2690 = vmatpush1.bf16.xpose.msra.mxu0 0
      %2691 = vmatprep.subr.bf16.mxu0 0
      %2692 = vmatpush1.bf16.xpose.msra.mxu0 0
      %2693 = vmatprep.subr.bf16.mxu0 0
      %2694 = vmatpush1.bf16.xpose.msra.mxu0 0
      %2695 = vmatprep.subr.bf16.mxu0 0
      %2696 = vmatpush1.bf16.xpose.msra.mxu0 0
      %2697 = vmatprep.mubr.bf16.mxu0 0
      %2698 = vmatmul.mubr.bf16.gmra.mrb[0].mxu0 %v2660
      %v2699 = vpop.f32.mrb[0].mxu0
      %v2700 = vadd.f32 0.0, %v2699
      %v2701 = vpop.f32.mrb[0].mxu0
      %v2702 = vpop.f32.mrb[0].mxu0
      %v2703 = vadd.f32 0.0, %v2702
      %v2704 = vpop.f32.mrb[0].mxu0
      %2705 = vdwg.mxu0
      %v2706 = vmul.f32 %v2700, 0.35355338
      %v2707 = vmul.f32 %v2703, 0.35355338
      %v2708 = vsel %vm782, %v2706, -inf
      %2709 = vmax.xlane.f32.xlu0 %v2708
      %v2710 = vpop.xlane.xlu0 %2709
      %v2711 = vsel %vm786, %v2707, -inf
      %2712 = vmax.xlane.f32.xlu0 %v2711
      %v2713 = vpop.xlane.xlu0 %2712
      %v2714 = vsub.f32 %v2706, %v2710
      %v2715 = vsub.f32 %v2707, %v2713
      %v2716 = vmul.f32 %v2714, 1.442695
      %v2717 = vpow.pop %v2716
      %v2718 = vmul.f32 %v2715, 1.442695
      %v2719 = vpow.pop %v2718
      %v2720 = vsel %vm782, %v2717, 0.0
      %2721 = vadd.xlane.f32.xlu0 %v2720
      %v2722 = vpop.xlane.xlu0 %2721
      %v2723 = vsel %vm786, %v2719, 0.0
      %2724 = vadd.xlane.f32.xlu0 %v2723
      %v2725 = vpop.xlane.xlu0 %2724
      %v2726 = vrcp.pop %v2722
      %v2727 = vrcp.pop %v2725
      %v2728 = vmul.f32 %v2717, %v2726
      %v2729 = vmul.f32 %v2719, %v2727
      %v2730 = vpack.c.bf16 %v2729, %v2728
      %v2731 = vpack.c.bf16 %v2654, %v2651
      %v2733 = vsel %vm782, %v2730, 0
      %v2736 = vand.u32 %v2731, %v814
      %2738 = vmatprep.subr.bf16.mxu0 0
      %2739 = vmatpush1.bf16.msra.mxu0 %v2736
      %2740 = vmatprep.subr.bf16.mxu0 0
      %2741 = vmatpush1.bf16.msra.mxu0 0
      %2742 = vmatprep.subr.bf16.mxu0 0
      %2743 = vmatpush1.bf16.msra.mxu0 0
      %2744 = vmatprep.subr.bf16.mxu0 0
      %2745 = vmatpush1.bf16.msra.mxu0 0
      %2746 = vmatprep.subr.bf16.mxu0 0
      %2747 = vmatpush1.bf16.msra.mxu0 0
      %2748 = vmatprep.subr.bf16.mxu0 0
      %2749 = vmatpush1.bf16.msra.mxu0 0
      %2750 = vmatprep.subr.bf16.mxu0 0
      %2751 = vmatpush1.bf16.msra.mxu0 0
      %2752 = vmatprep.subr.bf16.mxu0 0
      %2753 = vmatpush1.bf16.msra.mxu0 0
      %2754 = vmatprep.subr.bf16.mxu0 0
      %2755 = vmatpush1.bf16.msra.mxu0 0
      %2756 = vmatprep.subr.bf16.mxu0 0
      %2757 = vmatpush1.bf16.msra.mxu0 0
      %2758 = vmatprep.subr.bf16.mxu0 0
      %2759 = vmatpush1.bf16.msra.mxu0 0
      %2760 = vmatprep.subr.bf16.mxu0 0
      %2761 = vmatpush1.bf16.msra.mxu0 0
      %2762 = vmatprep.subr.bf16.mxu0 0
      %2763 = vmatpush1.bf16.msra.mxu0 0
      %2764 = vmatprep.subr.bf16.mxu0 0
      %2765 = vmatpush1.bf16.msra.mxu0 0
      %2766 = vmatprep.subr.bf16.mxu0 0
      %2767 = vmatpush1.bf16.msra.mxu0 0
      %2768 = vmatprep.subr.bf16.mxu0 0
      %2769 = vmatpush1.bf16.msra.mxu0 0
      %2770 = vmatprep.mubr.bf16.mxu0 0
      %2771 = vmatmul.mubr.bf16.gmra.mrb[0].mxu0 %v2733
      %v2772 = vpop.f32.mrb[0].mxu0
      %v2773 = vadd.f32 0.0, %v2772
      %v2774 = vpop.f32.mrb[0].mxu0
      %v2775 = vpop.f32.mrb[0].mxu0
      %v2776 = vadd.f32 0.0, %v2775
      %v2777 = vpop.f32.mrb[0].mxu0
      %2778 = vdwg.mxu0
      %s2779 = scalar_lea.vmem %s4, 20
      %v2780 = vld [vmem:[%s2779] sm:$0xf]
      %v2781 = vpack.c.bf16 %v2776, %v2773
      %v2783 = vsel %vm732, %v2781, 0
      %v2786 = vsel %vm811, %v2780, 0
      %2788 = vmatprep.subr.bf16.mxu0 0
      %2789 = vmatpush1.bf16.msra.mxu0 %v2786
      %2790 = vmatprep.subr.bf16.mxu0 0
      %2791 = vmatpush1.bf16.msra.mxu0 0
      %2792 = vmatprep.subr.bf16.mxu0 0
      %2793 = vmatpush1.bf16.msra.mxu0 0
      %2794 = vmatprep.subr.bf16.mxu0 0
      %2795 = vmatpush1.bf16.msra.mxu0 0
      %2796 = vmatprep.subr.bf16.mxu0 0
      %2797 = vmatpush1.bf16.msra.mxu0 0
      %2798 = vmatprep.subr.bf16.mxu0 0
      %2799 = vmatpush1.bf16.msra.mxu0 0
      %2800 = vmatprep.subr.bf16.mxu0 0
      %2801 = vmatpush1.bf16.msra.mxu0 0
      %2802 = vmatprep.subr.bf16.mxu0 0
      %2803 = vmatpush1.bf16.msra.mxu0 0
      %2804 = vmatprep.subr.bf16.mxu0 0
      %2805 = vmatpush1.bf16.msra.mxu0 0
      %2806 = vmatprep.subr.bf16.mxu0 0
      %2807 = vmatpush1.bf16.msra.mxu0 0
      %2808 = vmatprep.subr.bf16.mxu0 0
      %2809 = vmatpush1.bf16.msra.mxu0 0
      %2810 = vmatprep.subr.bf16.mxu0 0
      %2811 = vmatpush1.bf16.msra.mxu0 0
      %2812 = vmatprep.subr.bf16.mxu0 0
      %2813 = vmatpush1.bf16.msra.mxu0 0
      %2814 = vmatprep.subr.bf16.mxu0 0
      %2815 = vmatpush1.bf16.msra.mxu0 0
      %2816 = vmatprep.subr.bf16.mxu0 0
      %2817 = vmatpush1.bf16.msra.mxu0 0
      %2818 = vmatprep.subr.bf16.mxu0 0
      %2819 = vmatpush1.bf16.msra.mxu0 0
      %2820 = vmatprep.mubr.bf16.mxu0 0
      %2821 = vmatmul.mubr.bf16.gmra.mrb[0].mxu0 %v2783
      %v2822 = vpop.f32.mrb[0].mxu0
      %v2823 = vadd.f32 0.0, %v2822
      %v2824 = vpop.f32.mrb[0].mxu0
      %v2825 = vpop.f32.mrb[0].mxu0
      %v2826 = vadd.f32 0.0, %v2825
      %v2827 = vpop.f32.mrb[0].mxu0
      %2828 = vdwg.mxu0
      %v2830 = vsel %vm732, %v2482, 0
      %v2833 = vsel %vm811, %v2481, 0
      %2835 = vmatprep.subr.bf16.mxu0 0
      %2836 = vmatpush1.bf16.msra.mxu0 %v2833
      %2837 = vmatprep.subr.bf16.mxu0 0
      %2838 = vmatpush1.bf16.msra.mxu0 0
      %2839 = vmatprep.subr.bf16.mxu0 0
      %2840 = vmatpush1.bf16.msra.mxu0 0
      %2841 = vmatprep.subr.bf16.mxu0 0
      %2842 = vmatpush1.bf16.msra.mxu0 0
      %2843 = vmatprep.subr.bf16.mxu0 0
      %2844 = vmatpush1.bf16.msra.mxu0 0
      %2845 = vmatprep.subr.bf16.mxu0 0
      %2846 = vmatpush1.bf16.msra.mxu0 0
      %2847 = vmatprep.subr.bf16.mxu0 0
      %2848 = vmatpush1.bf16.msra.mxu0 0
      %2849 = vmatprep.subr.bf16.mxu0 0
      %2850 = vmatpush1.bf16.msra.mxu0 0
      %2851 = vmatprep.subr.bf16.mxu0 0
      %2852 = vmatpush1.bf16.msra.mxu0 0
      %2853 = vmatprep.subr.bf16.mxu0 0
      %2854 = vmatpush1.bf16.msra.mxu0 0
      %2855 = vmatprep.subr.bf16.mxu0 0
      %2856 = vmatpush1.bf16.msra.mxu0 0
      %2857 = vmatprep.subr.bf16.mxu0 0
      %2858 = vmatpush1.bf16.msra.mxu0 0
      %2859 = vmatprep.subr.bf16.mxu0 0
      %2860 = vmatpush1.bf16.msra.mxu0 0
      %2861 = vmatprep.subr.bf16.mxu0 0
      %2862 = vmatpush1.bf16.msra.mxu0 0
      %2863 = vmatprep.subr.bf16.mxu0 0
      %2864 = vmatpush1.bf16.msra.mxu0 0
      %2865 = vmatprep.subr.bf16.mxu0 0
      %2866 = vmatpush1.bf16.msra.mxu0 0
      %2867 = vmatprep.mubr.bf16.mxu0 0
      %2868 = vmatmul.mubr.bf16.gmra.mrb[0].mxu0 %v2830
      %v2869 = vpop.f32.mrb[0].mxu0
      %v2870 = vadd.f32 %v2823, %v2869
      %v2871 = vpop.f32.mrb[0].mxu0
      %v2872 = vpop.f32.mrb[0].mxu0
      %v2873 = vadd.f32 %v2826, %v2872
      %v2874 = vpop.f32.mrb[0].mxu0
      %2875 = vdwg.mxu0
      %s2876 = scalar_lea.vmem %s3, 288
      %v2877 = vld [vmem:[%s2876] sm:$0xf]
      %v2878 = vld [vmem:[%s2876 + $0x4] sm:$0xf]
      %v2879 = vld [vmem:[%s2876 + $0x8] sm:$0xf]
      %v2880 = vld [vmem:[%s2876 + $0xc] sm:$0xf]
      %v2885 = vunpack.c.l.b16 %v2877
      %v2886 = vunpack.c.l.b16 %v2878
      %v2887 = vunpack.c.l.b16 %v2879
      %v2888 = vunpack.c.l.b16 %v2880
      %v2889 = vpack.c.b16 %v2886, %v2885
      %v2890 = vpack.c.b16 %v2888, %v2887
      %2893 = vmatprep.subr.bf16.mxu0 0
      %2894 = vmatpush1.bf16.msra.mxu0 %v2889
      %2895 = vmatprep.subr.bf16.mxu0 0
      %2896 = vmatpush1.bf16.msra.mxu0 %v2890
      %2897 = vmatprep.subr.bf16.mxu0 0
      %2898 = vmatpush1.bf16.msra.mxu0 0
      %2899 = vmatprep.subr.bf16.mxu0 0
      %2900 = vmatpush1.bf16.msra.mxu0 0
      %2901 = vmatprep.subr.bf16.mxu0 0
      %2902 = vmatpush1.bf16.msra.mxu0 0
      %2903 = vmatprep.subr.bf16.mxu0 0
      %2904 = vmatpush1.bf16.msra.mxu0 0
      %2905 = vmatprep.subr.bf16.mxu0 0
      %2906 = vmatpush1.bf16.msra.mxu0 0
      %2907 = vmatprep.subr.bf16.mxu0 0
      %2908 = vmatpush1.bf16.msra.mxu0 0
      %2909 = vmatprep.subr.bf16.mxu0 0
      %2910 = vmatpush1.bf16.msra.mxu0 0
      %2911 = vmatprep.subr.bf16.mxu0 0
      %2912 = vmatpush1.bf16.msra.mxu0 0
      %2913 = vmatprep.subr.bf16.mxu0 0
      %2914 = vmatpush1.bf16.msra.mxu0 0
      %2915 = vmatprep.subr.bf16.mxu0 0
      %2916 = vmatpush1.bf16.msra.mxu0 0
      %2917 = vmatprep.subr.bf16.mxu0 0
      %2918 = vmatpush1.bf16.msra.mxu0 0
      %2919 = vmatprep.subr.bf16.mxu0 0
      %2920 = vmatpush1.bf16.msra.mxu0 0
      %2921 = vmatprep.subr.bf16.mxu0 0
      %2922 = vmatpush1.bf16.msra.mxu0 0
      %2923 = vmatprep.subr.bf16.mxu0 0
      %2924 = vmatpush1.bf16.msra.mxu0 0
      %2925 = vmatprep.mubr.bf16.mxu0 0
      %2926 = vmatmul.mubr.bf16.gmra.mrb[0].mxu0 %v2199
      %v2927 = vpop.f32.mrb[0].mxu0
      %v2928 = vadd.f32 0.0, %v2927
      %v2929 = vpop.f32.mrb[0].mxu0
      %v2930 = vpop.f32.mrb[0].mxu0
      %v2931 = vadd.f32 0.0, %v2930
      %v2932 = vpop.f32.mrb[0].mxu0
      %2933 = vdwg.mxu0
      %s2934 = scalar_lea.vmem %s3, 304
      %v2935 = vld [vmem:[%s2934] sm:$0xf]
      %v2936 = vld [vmem:[%s2934 + $0x4] sm:$0xf]
      %v2937 = vld [vmem:[%s2934 + $0x8] sm:$0xf]
      %v2938 = vld [vmem:[%s2934 + $0xc] sm:$0xf]
      %v2943 = vunpack.c.l.b16 %v2935
      %v2944 = vunpack.c.l.b16 %v2936
      %v2945 = vunpack.c.l.b16 %v2937
      %v2946 = vunpack.c.l.b16 %v2938
      %v2947 = vpack.c.b16 %v2944, %v2943
      %v2948 = vpack.c.b16 %v2946, %v2945
      %2951 = vmatprep.subr.bf16.mxu0 0
      %2952 = vmatpush1.bf16.msra.mxu0 %v2947
      %2953 = vmatprep.subr.bf16.mxu0 0
      %2954 = vmatpush1.bf16.msra.mxu0 %v2948
      %2955 = vmatprep.subr.bf16.mxu0 0
      %2956 = vmatpush1.bf16.msra.mxu0 0
      %2957 = vmatprep.subr.bf16.mxu0 0
      %2958 = vmatpush1.bf16.msra.mxu0 0
      %2959 = vmatprep.subr.bf16.mxu0 0
      %2960 = vmatpush1.bf16.msra.mxu0 0
      %2961 = vmatprep.subr.bf16.mxu0 0
      %2962 = vmatpush1.bf16.msra.mxu0 0
      %2963 = vmatprep.subr.bf16.mxu0 0
      %2964 = vmatpush1.bf16.msra.mxu0 0
      %2965 = vmatprep.subr.bf16.mxu0 0
      %2966 = vmatpush1.bf16.msra.mxu0 0
      %2967 = vmatprep.subr.bf16.mxu0 0
      %2968 = vmatpush1.bf16.msra.mxu0 0
      %2969 = vmatprep.subr.bf16.mxu0 0
      %2970 = vmatpush1.bf16.msra.mxu0 0
      %2971 = vmatprep.subr.bf16.mxu0 0
      %2972 = vmatpush1.bf16.msra.mxu0 0
      %2973 = vmatprep.subr.bf16.mxu0 0
      %2974 = vmatpush1.bf16.msra.mxu0 0
      %2975 = vmatprep.subr.bf16.mxu0 0
      %2976 = vmatpush1.bf16.msra.mxu0 0
      %2977 = vmatprep.subr.bf16.mxu0 0
      %2978 = vmatpush1.bf16.msra.mxu0 0
      %2979 = vmatprep.subr.bf16.mxu0 0
      %2980 = vmatpush1.bf16.msra.mxu0 0
      %2981 = vmatprep.subr.bf16.mxu0 0
      %2982 = vmatpush1.bf16.msra.mxu0 0
      %2983 = vmatprep.mubr.bf16.mxu0 0
      %2984 = vmatmul.mubr.bf16.gmra.mrb[0].mxu0 %v2199
      %v2985 = vpop.f32.mrb[0].mxu0
      %v2986 = vadd.f32 0.0, %v2985
      %v2987 = vpop.f32.mrb[0].mxu0
      %v2988 = vpop.f32.mrb[0].mxu0
      %v2989 = vadd.f32 0.0, %v2988
      %v2990 = vpop.f32.mrb[0].mxu0
      %2991 = vdwg.mxu0
      %s2992 = scalar_lea.vmem %s3, 320
      %v2993 = vld [vmem:[%s2992] sm:$0xf]
      %v2994 = vld [vmem:[%s2992 + $0x4] sm:$0xf]
      %v2995 = vld [vmem:[%s2992 + $0x8] sm:$0xf]
      %v2996 = vld [vmem:[%s2992 + $0xc] sm:$0xf]
      %v3001 = vunpack.c.l.b16 %v2993
      %v3002 = vunpack.c.l.b16 %v2994
      %v3003 = vunpack.c.l.b16 %v2995
      %v3004 = vunpack.c.l.b16 %v2996
      %v3005 = vpack.c.b16 %v3002, %v3001
      %v3006 = vpack.c.b16 %v3004, %v3003
      %3009 = vmatprep.subr.bf16.mxu0 0
      %3010 = vmatpush1.bf16.msra.mxu0 %v3005
      %3011 = vmatprep.subr.bf16.mxu0 0
      %3012 = vmatpush1.bf16.msra.mxu0 %v3006
      %3013 = vmatprep.subr.bf16.mxu0 0
      %3014 = vmatpush1.bf16.msra.mxu0 0
      %3015 = vmatprep.subr.bf16.mxu0 0
      %3016 = vmatpush1.bf16.msra.mxu0 0
      %3017 = vmatprep.subr.bf16.mxu0 0
      %3018 = vmatpush1.bf16.msra.mxu0 0
      %3019 = vmatprep.subr.bf16.mxu0 0
      %3020 = vmatpush1.bf16.msra.mxu0 0
      %3021 = vmatprep.subr.bf16.mxu0 0
      %3022 = vmatpush1.bf16.msra.mxu0 0
      %3023 = vmatprep.subr.bf16.mxu0 0
      %3024 = vmatpush1.bf16.msra.mxu0 0
      %3025 = vmatprep.subr.bf16.mxu0 0
      %3026 = vmatpush1.bf16.msra.mxu0 0
      %3027 = vmatprep.subr.bf16.mxu0 0
      %3028 = vmatpush1.bf16.msra.mxu0 0
      %3029 = vmatprep.subr.bf16.mxu0 0
      %3030 = vmatpush1.bf16.msra.mxu0 0
      %3031 = vmatprep.subr.bf16.mxu0 0
      %3032 = vmatpush1.bf16.msra.mxu0 0
      %3033 = vmatprep.subr.bf16.mxu0 0
      %3034 = vmatpush1.bf16.msra.mxu0 0
      %3035 = vmatprep.subr.bf16.mxu0 0
      %3036 = vmatpush1.bf16.msra.mxu0 0
      %3037 = vmatprep.subr.bf16.mxu0 0
      %3038 = vmatpush1.bf16.msra.mxu0 0
      %3039 = vmatprep.subr.bf16.mxu0 0
      %3040 = vmatpush1.bf16.msra.mxu0 0
      %3041 = vmatprep.mubr.bf16.mxu0 0
      %3042 = vmatmul.mubr.bf16.gmra.mrb[0].mxu0 %v2199
      %v3043 = vpop.f32.mrb[0].mxu0
      %v3044 = vadd.f32 0.0, %v3043
      %v3045 = vpop.f32.mrb[0].mxu0
      %v3046 = vpop.f32.mrb[0].mxu0
      %v3047 = vadd.f32 0.0, %v3046
      %v3048 = vpop.f32.mrb[0].mxu0
      %3049 = vdwg.mxu0
      %v3050 = vpack.c.bf16 %v2931, %v2928
      %v3051 = vpack.c.bf16 %v2989, %v2986
      %v3053 = vsel %vm732, %v3050, 0
      %v3056 = vsel %vm732, %v3051, 0
      %3058 = vmatprep.subr.bf16.mxu0 0
      %3059 = vmatpush1.bf16.xpose.msra.mxu0 %v3056
      %3060 = vmatprep.subr.bf16.mxu0 0
      %3061 = vmatpush1.bf16.xpose.msra.mxu0 0
      %3062 = vmatprep.subr.bf16.mxu0 0
      %3063 = vmatpush1.bf16.xpose.msra.mxu0 0
      %3064 = vmatprep.subr.bf16.mxu0 0
      %3065 = vmatpush1.bf16.xpose.msra.mxu0 0
      %3066 = vmatprep.subr.bf16.mxu0 0
      %3067 = vmatpush1.bf16.xpose.msra.mxu0 0
      %3068 = vmatprep.subr.bf16.mxu0 0
      %3069 = vmatpush1.bf16.xpose.msra.mxu0 0
      %3070 = vmatprep.subr.bf16.mxu0 0
      %3071 = vmatpush1.bf16.xpose.msra.mxu0 0
      %3072 = vmatprep.subr.bf16.mxu0 0
      %3073 = vmatpush1.bf16.xpose.msra.mxu0 0
      %3074 = vmatprep.subr.bf16.mxu0 0
      %3075 = vmatpush1.bf16.xpose.msra.mxu0 0
      %3076 = vmatprep.subr.bf16.mxu0 0
      %3077 = vmatpush1.bf16.xpose.msra.mxu0 0
      %3078 = vmatprep.subr.bf16.mxu0 0
      %3079 = vmatpush1.bf16.xpose.msra.mxu0 0
      %3080 = vmatprep.subr.bf16.mxu0 0
      %3081 = vmatpush1.bf16.xpose.msra.mxu0 0
      %3082 = vmatprep.subr.bf16.mxu0 0
      %3083 = vmatpush1.bf16.xpose.msra.mxu0 0
      %3084 = vmatprep.subr.bf16.mxu0 0
      %3085 = vmatpush1.bf16.xpose.msra.mxu0 0
      %3086 = vmatprep.subr.bf16.mxu0 0
      %3087 = vmatpush1.bf16.xpose.msra.mxu0 0
      %3088 = vmatprep.subr.bf16.mxu0 0
      %3089 = vmatpush1.bf16.xpose.msra.mxu0 0
      %3090 = vmatprep.mubr.bf16.mxu0 0
      %3091 = vmatmul.mubr.bf16.gmra.mrb[0].mxu0 %v3053
      %v3092 = vpop.f32.mrb[0].mxu0
      %v3093 = vadd.f32 0.0, %v3092
      %v3094 = vpop.f32.mrb[0].mxu0
      %v3095 = vpop.f32.mrb[0].mxu0
      %v3096 = vadd.f32 0.0, %v3095
      %v3097 = vpop.f32.mrb[0].mxu0
      %3098 = vdwg.mxu0
      %v3099 = vmul.f32 %v3093, 0.35355338
      %v3100 = vmul.f32 %v3096, 0.35355338
      %v3101 = vsel %vm782, %v3099, -inf
      %3102 = vmax.xlane.f32.xlu0 %v3101
      %v3103 = vpop.xlane.xlu0 %3102
      %v3104 = vsel %vm786, %v3100, -inf
      %3105 = vmax.xlane.f32.xlu0 %v3104
      %v3106 = vpop.xlane.xlu0 %3105
      %v3107 = vsub.f32 %v3099, %v3103
      %v3108 = vsub.f32 %v3100, %v3106
      %v3109 = vmul.f32 %v3107, 1.442695
      %v3110 = vpow.pop %v3109
      %v3111 = vmul.f32 %v3108, 1.442695
      %v3112 = vpow.pop %v3111
      %v3113 = vsel %vm782, %v3110, 0.0
      %3114 = vadd.xlane.f32.xlu0 %v3113
      %v3115 = vpop.xlane.xlu0 %3114
      %v3116 = vsel %vm786, %v3112, 0.0
      %3117 = vadd.xlane.f32.xlu0 %v3116
      %v3118 = vpop.xlane.xlu0 %3117
      %v3119 = vrcp.pop %v3115
      %v3120 = vrcp.pop %v3118
      %v3121 = vmul.f32 %v3110, %v3119
      %v3122 = vmul.f32 %v3112, %v3120
      %v3123 = vpack.c.bf16 %v3122, %v3121
      %v3124 = vpack.c.bf16 %v3047, %v3044
      %v3126 = vsel %vm782, %v3123, 0
      %v3129 = vand.u32 %v3124, %v814
      %3131 = vmatprep.subr.bf16.mxu0 0
      %3132 = vmatpush1.bf16.msra.mxu0 %v3129
      %3133 = vmatprep.subr.bf16.mxu0 0
      %3134 = vmatpush1.bf16.msra.mxu0 0
      %3135 = vmatprep.subr.bf16.mxu0 0
      %3136 = vmatpush1.bf16.msra.mxu0 0
      %3137 = vmatprep.subr.bf16.mxu0 0
      %3138 = vmatpush1.bf16.msra.mxu0 0
      %3139 = vmatprep.subr.bf16.mxu0 0
      %3140 = vmatpush1.bf16.msra.mxu0 0
      %3141 = vmatprep.subr.bf16.mxu0 0
      %3142 = vmatpush1.bf16.msra.mxu0 0
      %3143 = vmatprep.subr.bf16.mxu0 0
      %3144 = vmatpush1.bf16.msra.mxu0 0
      %3145 = vmatprep.subr.bf16.mxu0 0
      %3146 = vmatpush1.bf16.msra.mxu0 0
      %3147 = vmatprep.subr.bf16.mxu0 0
      %3148 = vmatpush1.bf16.msra.mxu0 0
      %3149 = vmatprep.subr.bf16.mxu0 0
      %3150 = vmatpush1.bf16.msra.mxu0 0
      %3151 = vmatprep.subr.bf16.mxu0 0
      %3152 = vmatpush1.bf16.msra.mxu0 0
      %3153 = vmatprep.subr.bf16.mxu0 0
      %3154 = vmatpush1.bf16.msra.mxu0 0
      %3155 = vmatprep.subr.bf16.mxu0 0
      %3156 = vmatpush1.bf16.msra.mxu0 0
      %3157 = vmatprep.subr.bf16.mxu0 0
      %3158 = vmatpush1.bf16.msra.mxu0 0
      %3159 = vmatprep.subr.bf16.mxu0 0
      %3160 = vmatpush1.bf16.msra.mxu0 0
      %3161 = vmatprep.subr.bf16.mxu0 0
      %3162 = vmatpush1.bf16.msra.mxu0 0
      %3163 = vmatprep.mubr.bf16.mxu0 0
      %3164 = vmatmul.mubr.bf16.gmra.mrb[0].mxu0 %v3126
      %v3165 = vpop.f32.mrb[0].mxu0
      %v3166 = vadd.f32 0.0, %v3165
      %v3167 = vpop.f32.mrb[0].mxu0
      %v3168 = vpop.f32.mrb[0].mxu0
      %v3169 = vadd.f32 0.0, %v3168
      %v3170 = vpop.f32.mrb[0].mxu0
      %3171 = vdwg.mxu0
      %s3172 = scalar_lea.vmem %s4, 24
      %v3173 = vld [vmem:[%s3172] sm:$0xf]
      %v3174 = vpack.c.bf16 %v3169, %v3166
      %v3176 = vsel %vm732, %v3174, 0
      %v3179 = vsel %vm811, %v3173, 0
      %3181 = vmatprep.subr.bf16.mxu0 0
      %3182 = vmatpush1.bf16.msra.mxu0 %v3179
      %3183 = vmatprep.subr.bf16.mxu0 0
      %3184 = vmatpush1.bf16.msra.mxu0 0
      %3185 = vmatprep.subr.bf16.mxu0 0
      %3186 = vmatpush1.bf16.msra.mxu0 0
      %3187 = vmatprep.subr.bf16.mxu0 0
      %3188 = vmatpush1.bf16.msra.mxu0 0
      %3189 = vmatprep.subr.bf16.mxu0 0
      %3190 = vmatpush1.bf16.msra.mxu0 0
      %3191 = vmatprep.subr.bf16.mxu0 0
      %3192 = vmatpush1.bf16.msra.mxu0 0
      %3193 = vmatprep.subr.bf16.mxu0 0
      %3194 = vmatpush1.bf16.msra.mxu0 0
      %3195 = vmatprep.subr.bf16.mxu0 0
      %3196 = vmatpush1.bf16.msra.mxu0 0
      %3197 = vmatprep.subr.bf16.mxu0 0
      %3198 = vmatpush1.bf16.msra.mxu0 0
      %3199 = vmatprep.subr.bf16.mxu0 0
      %3200 = vmatpush1.bf16.msra.mxu0 0
      %3201 = vmatprep.subr.bf16.mxu0 0
      %3202 = vmatpush1.bf16.msra.mxu0 0
      %3203 = vmatprep.subr.bf16.mxu0 0
      %3204 = vmatpush1.bf16.msra.mxu0 0
      %3205 = vmatprep.subr.bf16.mxu0 0
      %3206 = vmatpush1.bf16.msra.mxu0 0
      %3207 = vmatprep.subr.bf16.mxu0 0
      %3208 = vmatpush1.bf16.msra.mxu0 0
      %3209 = vmatprep.subr.bf16.mxu0 0
      %3210 = vmatpush1.bf16.msra.mxu0 0
      %3211 = vmatprep.subr.bf16.mxu0 0
      %3212 = vmatpush1.bf16.msra.mxu0 0
      %3213 = vmatprep.mubr.bf16.mxu0 0
      %3214 = vmatmul.mubr.bf16.gmra.mrb[0].mxu0 %v3176
      %v3215 = vpop.f32.mrb[0].mxu0
      %v3216 = vadd.f32 0.0, %v3215
      %v3217 = vpop.f32.mrb[0].mxu0
      %v3218 = vpop.f32.mrb[0].mxu0
      %v3219 = vadd.f32 0.0, %v3218
      %v3220 = vpop.f32.mrb[0].mxu0
      %3221 = vdwg.mxu0
      %v3222 = vadd.f32 %v2870, %v3216
      %v3223 = vadd.f32 %v2873, %v3219
      %s3224 = scalar_lea.vmem %s3, 336
      %v3225 = vld [vmem:[%s3224] sm:$0xf]
      %v3226 = vld [vmem:[%s3224 + $0x4] sm:$0xf]
      %v3227 = vld [vmem:[%s3224 + $0x8] sm:$0xf]
      %v3228 = vld [vmem:[%s3224 + $0xc] sm:$0xf]
      %v3233 = vunpack.c.l.b16 %v3225
      %v3234 = vunpack.c.l.b16 %v3226
      %v3235 = vunpack.c.l.b16 %v3227
      %v3236 = vunpack.c.l.b16 %v3228
      %v3237 = vpack.c.b16 %v3234, %v3233
      %v3238 = vpack.c.b16 %v3236, %v3235
      %3241 = vmatprep.subr.bf16.mxu0 0
      %3242 = vmatpush1.bf16.msra.mxu0 %v3237
      %3243 = vmatprep.subr.bf16.mxu0 0
      %3244 = vmatpush1.bf16.msra.mxu0 %v3238
      %3245 = vmatprep.subr.bf16.mxu0 0
      %3246 = vmatpush1.bf16.msra.mxu0 0
      %3247 = vmatprep.subr.bf16.mxu0 0
      %3248 = vmatpush1.bf16.msra.mxu0 0
      %3249 = vmatprep.subr.bf16.mxu0 0
      %3250 = vmatpush1.bf16.msra.mxu0 0
      %3251 = vmatprep.subr.bf16.mxu0 0
      %3252 = vmatpush1.bf16.msra.mxu0 0
      %3253 = vmatprep.subr.bf16.mxu0 0
      %3254 = vmatpush1.bf16.msra.mxu0 0
      %3255 = vmatprep.subr.bf16.mxu0 0
      %3256 = vmatpush1.bf16.msra.mxu0 0
      %3257 = vmatprep.subr.bf16.mxu0 0
      %3258 = vmatpush1.bf16.msra.mxu0 0
      %3259 = vmatprep.subr.bf16.mxu0 0
      %3260 = vmatpush1.bf16.msra.mxu0 0
      %3261 = vmatprep.subr.bf16.mxu0 0
      %3262 = vmatpush1.bf16.msra.mxu0 0
      %3263 = vmatprep.subr.bf16.mxu0 0
      %3264 = vmatpush1.bf16.msra.mxu0 0
      %3265 = vmatprep.subr.bf16.mxu0 0
      %3266 = vmatpush1.bf16.msra.mxu0 0
      %3267 = vmatprep.subr.bf16.mxu0 0
      %3268 = vmatpush1.bf16.msra.mxu0 0
      %3269 = vmatprep.subr.bf16.mxu0 0
      %3270 = vmatpush1.bf16.msra.mxu0 0
      %3271 = vmatprep.subr.bf16.mxu0 0
      %3272 = vmatpush1.bf16.msra.mxu0 0
      %3273 = vmatprep.mubr.bf16.mxu0 0
      %3274 = vmatmul.mubr.bf16.gmra.mrb[0].mxu0 %v2199
      %v3275 = vpop.f32.mrb[0].mxu0
      %v3276 = vadd.f32 0.0, %v3275
      %v3277 = vpop.f32.mrb[0].mxu0
      %v3278 = vpop.f32.mrb[0].mxu0
      %v3279 = vadd.f32 0.0, %v3278
      %v3280 = vpop.f32.mrb[0].mxu0
      %3281 = vdwg.mxu0
      %s3282 = scalar_lea.vmem %s3, 352
      %v3283 = vld [vmem:[%s3282] sm:$0xf]
      %v3284 = vld [vmem:[%s3282 + $0x4] sm:$0xf]
      %v3285 = vld [vmem:[%s3282 + $0x8] sm:$0xf]
      %v3286 = vld [vmem:[%s3282 + $0xc] sm:$0xf]
      %v3291 = vunpack.c.l.b16 %v3283
      %v3292 = vunpack.c.l.b16 %v3284
      %v3293 = vunpack.c.l.b16 %v3285
      %v3294 = vunpack.c.l.b16 %v3286
      %v3295 = vpack.c.b16 %v3292, %v3291
      %v3296 = vpack.c.b16 %v3294, %v3293
      %3299 = vmatprep.subr.bf16.mxu0 0
      %3300 = vmatpush1.bf16.msra.mxu0 %v3295
      %3301 = vmatprep.subr.bf16.mxu0 0
      %3302 = vmatpush1.bf16.msra.mxu0 %v3296
      %3303 = vmatprep.subr.bf16.mxu0 0
      %3304 = vmatpush1.bf16.msra.mxu0 0
      %3305 = vmatprep.subr.bf16.mxu0 0
      %3306 = vmatpush1.bf16.msra.mxu0 0
      %3307 = vmatprep.subr.bf16.mxu0 0
      %3308 = vmatpush1.bf16.msra.mxu0 0
      %3309 = vmatprep.subr.bf16.mxu0 0
      %3310 = vmatpush1.bf16.msra.mxu0 0
      %3311 = vmatprep.subr.bf16.mxu0 0
      %3312 = vmatpush1.bf16.msra.mxu0 0
      %3313 = vmatprep.subr.bf16.mxu0 0
      %3314 = vmatpush1.bf16.msra.mxu0 0
      %3315 = vmatprep.subr.bf16.mxu0 0
      %3316 = vmatpush1.bf16.msra.mxu0 0
      %3317 = vmatprep.subr.bf16.mxu0 0
      %3318 = vmatpush1.bf16.msra.mxu0 0
      %3319 = vmatprep.subr.bf16.mxu0 0
      %3320 = vmatpush1.bf16.msra.mxu0 0
      %3321 = vmatprep.subr.bf16.mxu0 0
      %3322 = vmatpush1.bf16.msra.mxu0 0
      %3323 = vmatprep.subr.bf16.mxu0 0
      %3324 = vmatpush1.bf16.msra.mxu0 0
      %3325 = vmatprep.subr.bf16.mxu0 0
      %3326 = vmatpush1.bf16.msra.mxu0 0
      %3327 = vmatprep.subr.bf16.mxu0 0
      %3328 = vmatpush1.bf16.msra.mxu0 0
      %3329 = vmatprep.subr.bf16.mxu0 0
      %3330 = vmatpush1.bf16.msra.mxu0 0
      %3331 = vmatprep.mubr.bf16.mxu0 0
      %3332 = vmatmul.mubr.bf16.gmra.mrb[0].mxu0 %v2199
      %v3333 = vpop.f32.mrb[0].mxu0
      %v3334 = vadd.f32 0.0, %v3333
      %v3335 = vpop.f32.mrb[0].mxu0
      %v3336 = vpop.f32.mrb[0].mxu0
      %v3337 = vadd.f32 0.0, %v3336
      %v3338 = vpop.f32.mrb[0].mxu0
      %3339 = vdwg.mxu0
      %s3340 = scalar_lea.vmem %s3, 368
      %v3341 = vld [vmem:[%s3340] sm:$0xf]
      %v3342 = vld [vmem:[%s3340 + $0x4] sm:$0xf]
      %v3343 = vld [vmem:[%s3340 + $0x8] sm:$0xf]
      %v3344 = vld [vmem:[%s3340 + $0xc] sm:$0xf]
      %v3349 = vunpack.c.l.b16 %v3341
      %v3350 = vunpack.c.l.b16 %v3342
      %v3351 = vunpack.c.l.b16 %v3343
      %v3352 = vunpack.c.l.b16 %v3344
      %v3353 = vpack.c.b16 %v3350, %v3349
      %v3354 = vpack.c.b16 %v3352, %v3351
      %3357 = vmatprep.subr.bf16.mxu0 0
      %3358 = vmatpush1.bf16.msra.mxu0 %v3353
      %3359 = vmatprep.subr.bf16.mxu0 0
      %3360 = vmatpush1.bf16.msra.mxu0 %v3354
      %3361 = vmatprep.subr.bf16.mxu0 0
      %3362 = vmatpush1.bf16.msra.mxu0 0
      %3363 = vmatprep.subr.bf16.mxu0 0
      %3364 = vmatpush1.bf16.msra.mxu0 0
      %3365 = vmatprep.subr.bf16.mxu0 0
      %3366 = vmatpush1.bf16.msra.mxu0 0
      %3367 = vmatprep.subr.bf16.mxu0 0
      %3368 = vmatpush1.bf16.msra.mxu0 0
      %3369 = vmatprep.subr.bf16.mxu0 0
      %3370 = vmatpush1.bf16.msra.mxu0 0
      %3371 = vmatprep.subr.bf16.mxu0 0
      %3372 = vmatpush1.bf16.msra.mxu0 0
      %3373 = vmatprep.subr.bf16.mxu0 0
      %3374 = vmatpush1.bf16.msra.mxu0 0
      %3375 = vmatprep.subr.bf16.mxu0 0
      %3376 = vmatpush1.bf16.msra.mxu0 0
      %3377 = vmatprep.subr.bf16.mxu0 0
      %3378 = vmatpush1.bf16.msra.mxu0 0
      %3379 = vmatprep.subr.bf16.mxu0 0
      %3380 = vmatpush1.bf16.msra.mxu0 0
      %3381 = vmatprep.subr.bf16.mxu0 0
      %3382 = vmatpush1.bf16.msra.mxu0 0
      %3383 = vmatprep.subr.bf16.mxu0 0
      %3384 = vmatpush1.bf16.msra.mxu0 0
      %3385 = vmatprep.subr.bf16.mxu0 0
      %3386 = vmatpush1.bf16.msra.mxu0 0
      %3387 = vmatprep.subr.bf16.mxu0 0
      %3388 = vmatpush1.bf16.msra.mxu0 0
      %3389 = vmatprep.mubr.bf16.mxu0 0
      %3390 = vmatmul.mubr.bf16.gmra.mrb[0].mxu0 %v2199
      %v3391 = vpop.f32.mrb[0].mxu0
      %v3392 = vadd.f32 0.0, %v3391
      %v3393 = vpop.f32.mrb[0].mxu0
      %v3394 = vpop.f32.mrb[0].mxu0
      %v3395 = vadd.f32 0.0, %v3394
      %v3396 = vpop.f32.mrb[0].mxu0
      %3397 = vdwg.mxu0
      %v3398 = vpack.c.bf16 %v3279, %v3276
      %v3399 = vpack.c.bf16 %v3337, %v3334
      %v3401 = vsel %vm732, %v3398, 0
      %v3404 = vsel %vm732, %v3399, 0
      %3406 = vmatprep.subr.bf16.mxu0 0
      %3407 = vmatpush1.bf16.xpose.msra.mxu0 %v3404
      %3408 = vmatprep.subr.bf16.mxu0 0
      %3409 = vmatpush1.bf16.xpose.msra.mxu0 0
      %3410 = vmatprep.subr.bf16.mxu0 0
      %3411 = vmatpush1.bf16.xpose.msra.mxu0 0
      %3412 = vmatprep.subr.bf16.mxu0 0
      %3413 = vmatpush1.bf16.xpose.msra.mxu0 0
      %3414 = vmatprep.subr.bf16.mxu0 0
      %3415 = vmatpush1.bf16.xpose.msra.mxu0 0
      %3416 = vmatprep.subr.bf16.mxu0 0
      %3417 = vmatpush1.bf16.xpose.msra.mxu0 0
      %3418 = vmatprep.subr.bf16.mxu0 0
      %3419 = vmatpush1.bf16.xpose.msra.mxu0 0
      %3420 = vmatprep.subr.bf16.mxu0 0
      %3421 = vmatpush1.bf16.xpose.msra.mxu0 0
      %3422 = vmatprep.subr.bf16.mxu0 0
      %3423 = vmatpush1.bf16.xpose.msra.mxu0 0
      %3424 = vmatprep.subr.bf16.mxu0 0
      %3425 = vmatpush1.bf16.xpose.msra.mxu0 0
      %3426 = vmatprep.subr.bf16.mxu0 0
      %3427 = vmatpush1.bf16.xpose.msra.mxu0 0
      %3428 = vmatprep.subr.bf16.mxu0 0
      %3429 = vmatpush1.bf16.xpose.msra.mxu0 0
      %3430 = vmatprep.subr.bf16.mxu0 0
      %3431 = vmatpush1.bf16.xpose.msra.mxu0 0
      %3432 = vmatprep.subr.bf16.mxu0 0
      %3433 = vmatpush1.bf16.xpose.msra.mxu0 0
      %3434 = vmatprep.subr.bf16.mxu0 0
      %3435 = vmatpush1.bf16.xpose.msra.mxu0 0
      %3436 = vmatprep.subr.bf16.mxu0 0
      %3437 = vmatpush1.bf16.xpose.msra.mxu0 0
      %3438 = vmatprep.mubr.bf16.mxu0 0
      %3439 = vmatmul.mubr.bf16.gmra.mrb[0].mxu0 %v3401
      %v3440 = vpop.f32.mrb[0].mxu0
      %v3441 = vadd.f32 0.0, %v3440
      %v3442 = vpop.f32.mrb[0].mxu0
      %v3443 = vpop.f32.mrb[0].mxu0
      %v3444 = vadd.f32 0.0, %v3443
      %v3445 = vpop.f32.mrb[0].mxu0
      %3446 = vdwg.mxu0
      %v3447 = vmul.f32 %v3441, 0.35355338
      %v3448 = vmul.f32 %v3444, 0.35355338
      %v3449 = vsel %vm782, %v3447, -inf
      %3450 = vmax.xlane.f32.xlu0 %v3449
      %v3451 = vpop.xlane.xlu0 %3450
      %v3452 = vsel %vm786, %v3448, -inf
      %3453 = vmax.xlane.f32.xlu0 %v3452
      %v3454 = vpop.xlane.xlu0 %3453
      %v3455 = vsub.f32 %v3447, %v3451
      %v3456 = vsub.f32 %v3448, %v3454
      %v3457 = vmul.f32 %v3455, 1.442695
      %v3458 = vpow.pop %v3457
      %v3459 = vmul.f32 %v3456, 1.442695
      %v3460 = vpow.pop %v3459
      %v3461 = vsel %vm782, %v3458, 0.0
      %3462 = vadd.xlane.f32.xlu0 %v3461
      %v3463 = vpop.xlane.xlu0 %3462
      %v3464 = vsel %vm786, %v3460, 0.0
      %3465 = vadd.xlane.f32.xlu0 %v3464
      %v3466 = vpop.xlane.xlu0 %3465
      %v3467 = vrcp.pop %v3463
      %v3468 = vrcp.pop %v3466
      %v3469 = vmul.f32 %v3458, %v3467
      %v3470 = vmul.f32 %v3460, %v3468
      %v3471 = vpack.c.bf16 %v3470, %v3469
      %v3472 = vpack.c.bf16 %v3395, %v3392
      %v3474 = vsel %vm782, %v3471, 0
      %v3477 = vand.u32 %v3472, %v814
      %3479 = vmatprep.subr.bf16.mxu0 0
      %3480 = vmatpush1.bf16.msra.mxu0 %v3477
      %3481 = vmatprep.subr.bf16.mxu0 0
      %3482 = vmatpush1.bf16.msra.mxu0 0
      %3483 = vmatprep.subr.bf16.mxu0 0
      %3484 = vmatpush1.bf16.msra.mxu0 0
      %3485 = vmatprep.subr.bf16.mxu0 0
      %3486 = vmatpush1.bf16.msra.mxu0 0
      %3487 = vmatprep.subr.bf16.mxu0 0
      %3488 = vmatpush1.bf16.msra.mxu0 0
      %3489 = vmatprep.subr.bf16.mxu0 0
      %3490 = vmatpush1.bf16.msra.mxu0 0
      %3491 = vmatprep.subr.bf16.mxu0 0
      %3492 = vmatpush1.bf16.msra.mxu0 0
      %3493 = vmatprep.subr.bf16.mxu0 0
      %3494 = vmatpush1.bf16.msra.mxu0 0
      %3495 = vmatprep.subr.bf16.mxu0 0
      %3496 = vmatpush1.bf16.msra.mxu0 0
      %3497 = vmatprep.subr.bf16.mxu0 0
      %3498 = vmatpush1.bf16.msra.mxu0 0
      %3499 = vmatprep.subr.bf16.mxu0 0
      %3500 = vmatpush1.bf16.msra.mxu0 0
      %3501 = vmatprep.subr.bf16.mxu0 0
      %3502 = vmatpush1.bf16.msra.mxu0 0
      %3503 = vmatprep.subr.bf16.mxu0 0
      %3504 = vmatpush1.bf16.msra.mxu0 0
      %3505 = vmatprep.subr.bf16.mxu0 0
      %3506 = vmatpush1.bf16.msra.mxu0 0
      %3507 = vmatprep.subr.bf16.mxu0 0
      %3508 = vmatpush1.bf16.msra.mxu0 0
      %3509 = vmatprep.subr.bf16.mxu0 0
      %3510 = vmatpush1.bf16.msra.mxu0 0
      %3511 = vmatprep.mubr.bf16.mxu0 0
      %3512 = vmatmul.mubr.bf16.gmra.mrb[0].mxu0 %v3474
      %v3513 = vpop.f32.mrb[0].mxu0
      %v3514 = vadd.f32 0.0, %v3513
      %v3515 = vpop.f32.mrb[0].mxu0
      %v3516 = vpop.f32.mrb[0].mxu0
      %v3517 = vadd.f32 0.0, %v3516
      %v3518 = vpop.f32.mrb[0].mxu0
      %3519 = vdwg.mxu0
      %s3520 = scalar_lea.vmem %s4, 28
      %v3521 = vld [vmem:[%s3520] sm:$0xf]
      %v3522 = vpack.c.bf16 %v3517, %v3514
      %v3524 = vsel %vm732, %v3522, 0
      %v3527 = vsel %vm811, %v3521, 0
      %3529 = vmatprep.subr.bf16.mxu0 0
      %3530 = vmatpush1.bf16.msra.mxu0 %v3527
      %3531 = vmatprep.subr.bf16.mxu0 0
      %3532 = vmatpush1.bf16.msra.mxu0 0
      %3533 = vmatprep.subr.bf16.mxu0 0
      %3534 = vmatpush1.bf16.msra.mxu0 0
      %3535 = vmatprep.subr.bf16.mxu0 0
      %3536 = vmatpush1.bf16.msra.mxu0 0
      %3537 = vmatprep.subr.bf16.mxu0 0
      %3538 = vmatpush1.bf16.msra.mxu0 0
      %3539 = vmatprep.subr.bf16.mxu0 0
      %3540 = vmatpush1.bf16.msra.mxu0 0
      %3541 = vmatprep.subr.bf16.mxu0 0
      %3542 = vmatpush1.bf16.msra.mxu0 0
      %3543 = vmatprep.subr.bf16.mxu0 0
      %3544 = vmatpush1.bf16.msra.mxu0 0
      %3545 = vmatprep.subr.bf16.mxu0 0
      %3546 = vmatpush1.bf16.msra.mxu0 0
      %3547 = vmatprep.subr.bf16.mxu0 0
      %3548 = vmatpush1.bf16.msra.mxu0 0
      %3549 = vmatprep.subr.bf16.mxu0 0
      %3550 = vmatpush1.bf16.msra.mxu0 0
      %3551 = vmatprep.subr.bf16.mxu0 0
      %3552 = vmatpush1.bf16.msra.mxu0 0
      %3553 = vmatprep.subr.bf16.mxu0 0
      %3554 = vmatpush1.bf16.msra.mxu0 0
      %3555 = vmatprep.subr.bf16.mxu0 0
      %3556 = vmatpush1.bf16.msra.mxu0 0
      %3557 = vmatprep.subr.bf16.mxu0 0
      %3558 = vmatpush1.bf16.msra.mxu0 0
      %3559 = vmatprep.subr.bf16.mxu0 0
      %3560 = vmatpush1.bf16.msra.mxu0 0
      %3561 = vmatprep.mubr.bf16.mxu0 0
      %3562 = vmatmul.mubr.bf16.gmra.mrb[0].mxu0 %v3524
      %v3563 = vpop.f32.mrb[0].mxu0
      %v3564 = vadd.f32 0.0, %v3563
      %v3565 = vpop.f32.mrb[0].mxu0
      %v3566 = vpop.f32.mrb[0].mxu0
      %v3567 = vadd.f32 0.0, %v3566
      %v3568 = vpop.f32.mrb[0].mxu0
      %3569 = vdwg.mxu0
      %v3570 = vadd.f32 %v3222, %v3564
      %v3571 = vadd.f32 %v3223, %v3567
      %v3572 = vadd.f32 %v2141, %v3570
      %v3573 = vadd.f32 %v2142, %v3571
      %v3574 = vadd.f32 %v3572, %v2145
      %v3575 = vadd.f32 %v3573, %v2145
      %v3576 = vsel %vm474, %v3574, 0.0
      %3577 = vadd.xlane.f32.xlu0 %v3576
      %v3578 = vpop.xlane.xlu0 %3577
      %v3579 = vsel %vm478, %v3575, 0.0
      %3580 = vadd.xlane.f32.xlu0 %v3579
      %v3581 = vpop.xlane.xlu0 %3580
      %v3582 = vmul.f32 %v3578, %v482
      %v3583 = vmul.f32 %v3581, %v482
      %v3584 = vsub.f32 %v3574, %v3582
      %v3585 = vsub.f32 %v3575, %v3583
      %v3586 = vmul.f32 %v3584, %v3584
      %v3587 = vmul.f32 %v3585, %v3585
      %v3588 = vsel %vm474, %v3586, 0.0
      %3589 = vadd.xlane.f32.xlu0 %v3588
      %v3590 = vpop.xlane.xlu0 %3589
      %v3591 = vsel %vm478, %v3587, 0.0
      %3592 = vadd.xlane.f32.xlu0 %v3591
      %v3593 = vpop.xlane.xlu0 %3592
      %v3594 = vmul.f32 %v3590, %v482
      %v3595 = vmul.f32 %v3593, %v482
      %v3596 = vadd.f32 %v3594, 1e-05
      %v3597 = vadd.f32 %v3595, 1e-05
      %v3598 = vrsqrt.pop %v3596
      %v3599 = vrsqrt.pop %v3597
      %v3600 = vmul.f32 %v3584, %v3598
      %v3601 = vmul.f32 %v3585, %v3599
      %v3602 = vmul.f32 %v3600, %v2146
      %v3603 = vmul.f32 %v3601, %v2146
      %v3604 = vadd.f32 %v3602, %v2147
      %v3605 = vadd.f32 %v3603, %v2147
      %v3606 = vld [vmem:[%s2 + $0xb0] sm:$0xf]
      %v3607 = vld [vmem:[%s2 + $0xb4] sm:$0xf]
      %v3608 = vld [vmem:[%s2 + $0xb8] sm:$0xf]
      %v3609 = vld [vmem:[%s2 + $0xbc] sm:$0xf]
      %v3610 = vpack.c.bf16 %v3605, %v3604
      %v3615 = vunpack.c.l.b16 %v3606
      %v3616 = vunpack.c.l.b16 %v3607
      %v3617 = vunpack.c.l.b16 %v3608
      %v3618 = vunpack.c.l.b16 %v3609
      %v3619 = vpack.c.b16 %v3616, %v3615
      %v3620 = vpack.c.b16 %v3618, %v3617
      %v3624 = vsel %vm474, %v3610, 0
      %3626 = vmatprep.subr.bf16.mxu0 0
      %3627 = vmatpush1.bf16.msra.mxu0 %v3619
      %3628 = vmatprep.subr.bf16.mxu0 0
      %3629 = vmatpush1.bf16.msra.mxu0 %v3620
      %3630 = vmatprep.subr.bf16.mxu0 0
      %3631 = vmatpush1.bf16.msra.mxu0 0
      %3632 = vmatprep.subr.bf16.mxu0 0
      %3633 = vmatpush1.bf16.msra.mxu0 0
      %3634 = vmatprep.subr.bf16.mxu0 0
      %3635 = vmatpush1.bf16.msra.mxu0 0
      %3636 = vmatprep.subr.bf16.mxu0 0
      %3637 = vmatpush1.bf16.msra.mxu0 0
      %3638 = vmatprep.subr.bf16.mxu0 0
      %3639 = vmatpush1.bf16.msra.mxu0 0
      %3640 = vmatprep.subr.bf16.mxu0 0
      %3641 = vmatpush1.bf16.msra.mxu0 0
      %3642 = vmatprep.subr.bf16.mxu0 0
      %3643 = vmatpush1.bf16.msra.mxu0 0
      %3644 = vmatprep.subr.bf16.mxu0 0
      %3645 = vmatpush1.bf16.msra.mxu0 0
      %3646 = vmatprep.subr.bf16.mxu0 0
      %3647 = vmatpush1.bf16.msra.mxu0 0
      %3648 = vmatprep.subr.bf16.mxu0 0
      %3649 = vmatpush1.bf16.msra.mxu0 0
      %3650 = vmatprep.subr.bf16.mxu0 0
      %3651 = vmatpush1.bf16.msra.mxu0 0
      %3652 = vmatprep.subr.bf16.mxu0 0
      %3653 = vmatpush1.bf16.msra.mxu0 0
      %3654 = vmatprep.subr.bf16.mxu0 0
      %3655 = vmatpush1.bf16.msra.mxu0 0
      %3656 = vmatprep.subr.bf16.mxu0 0
      %3657 = vmatpush1.bf16.msra.mxu0 0
      %3658 = vmatprep.mubr.bf16.mxu0 0
      %3659 = vmatmul.mubr.bf16.gmra.mrb[0].mxu0 %v3624
      %v3660 = vpop.f32.mrb[0].mxu0
      %v3661 = vadd.f32 %v2148, %v3660
      %v3662 = vpop.f32.mrb[0].mxu0
      %v3663 = vpop.f32.mrb[0].mxu0
      %v3664 = vadd.f32 %v2148, %v3663
      %v3665 = vpop.f32.mrb[0].mxu0
      %3666 = vdwg.mxu0
      %v3667 = vmul.f32 %v3661, 0.5
      %v3668 = vmul.f32 %v3664, 0.5
      %v3669 = vmul.f32 %v3661, 0.044715
      %v3670 = vmul.f32 %v3664, 0.044715
      %v3671 = vmul.f32 %v3669, %v3661
      %v3672 = vmul.f32 %v3670, %v3664
      %v3673 = vmul.f32 %v3671, %v3661
      %v3674 = vmul.f32 %v3672, %v3664
      %v3675 = vadd.f32 %v3661, %v3673
      %v3676 = vadd.f32 %v3664, %v3674
      %v3677 = vmul.f32 %v3675, 0.7978846
      %v3678 = vmul.f32 %v3676, 0.7978846
      %v3679 = vtanh.pop %v3677
      %v3680 = vtanh.pop %v3678
      %v3681 = vadd.f32 %v3679, 1.0
      %v3682 = vadd.f32 %v3680, 1.0
      %v3683 = vmul.f32 %v3667, %v3681
      %v3684 = vmul.f32 %v3668, %v3682
      %v3685 = vld [vmem:[%s2 + $0xc0] sm:$0xf]
      %v3686 = vld [vmem:[%s2 + $0xc4] sm:$0xf]
      %v3687 = vld [vmem:[%s2 + $0xc8] sm:$0xf]
      %v3688 = vld [vmem:[%s2 + $0xcc] sm:$0xf]
      %v3689 = vld [vmem:[%s2 + $0xd0] sm:$0xf]
      %v3690 = vld [vmem:[%s2 + $0xd4] sm:$0xf]
      %v3691 = vld [vmem:[%s2 + $0xd8] sm:$0xf]
      %v3692 = vld [vmem:[%s2 + $0xdc] sm:$0xf]
      %v3693 = vpack.c.bf16 %v3684, %v3683
      %v3702 = vunpack.c.l.b16 %v3685
      %v3703 = vunpack.c.l.b16 %v3686
      %v3704 = vunpack.c.l.b16 %v3687
      %v3705 = vunpack.c.l.b16 %v3688
      %v3706 = vunpack.c.l.b16 %v3689
      %v3707 = vunpack.c.l.b16 %v3690
      %v3708 = vunpack.c.l.b16 %v3691
      %v3709 = vunpack.c.l.b16 %v3692
      %v3710 = vpack.c.b16 %v3703, %v3702
      %v3711 = vpack.c.b16 %v3705, %v3704
      %v3712 = vpack.c.b16 %v3707, %v3706
      %v3713 = vpack.c.b16 %v3709, %v3708
      %v3719 = vsel %vm2096, %v3693, 0
      %3721 = vmatprep.subr.bf16.mxu0 0
      %3722 = vmatpush1.bf16.msra.mxu0 %v3710
      %3723 = vmatprep.subr.bf16.mxu0 0
      %3724 = vmatpush1.bf16.msra.mxu0 %v3711
      %3725 = vmatprep.subr.bf16.mxu0 0
      %3726 = vmatpush1.bf16.msra.mxu0 %v3712
      %3727 = vmatprep.subr.bf16.mxu0 0
      %3728 = vmatpush1.bf16.msra.mxu0 %v3713
      %3729 = vmatprep.subr.bf16.mxu0 0
      %3730 = vmatpush1.bf16.msra.mxu0 0
      %3731 = vmatprep.subr.bf16.mxu0 0
      %3732 = vmatpush1.bf16.msra.mxu0 0
      %3733 = vmatprep.subr.bf16.mxu0 0
      %3734 = vmatpush1.bf16.msra.mxu0 0
      %3735 = vmatprep.subr.bf16.mxu0 0
      %3736 = vmatpush1.bf16.msra.mxu0 0
      %3737 = vmatprep.subr.bf16.mxu0 0
      %3738 = vmatpush1.bf16.msra.mxu0 0
      %3739 = vmatprep.subr.bf16.mxu0 0
      %3740 = vmatpush1.bf16.msra.mxu0 0
      %3741 = vmatprep.subr.bf16.mxu0 0
      %3742 = vmatpush1.bf16.msra.mxu0 0
      %3743 = vmatprep.subr.bf16.mxu0 0
      %3744 = vmatpush1.bf16.msra.mxu0 0
      %3745 = vmatprep.subr.bf16.mxu0 0
      %3746 = vmatpush1.bf16.msra.mxu0 0
      %3747 = vmatprep.subr.bf16.mxu0 0
      %3748 = vmatpush1.bf16.msra.mxu0 0
      %3749 = vmatprep.subr.bf16.mxu0 0
      %3750 = vmatpush1.bf16.msra.mxu0 0
      %3751 = vmatprep.subr.bf16.mxu0 0
      %3752 = vmatpush1.bf16.msra.mxu0 0
      %3753 = vmatprep.mubr.bf16.mxu0 0
      %3754 = vmatmul.mubr.bf16.gmra.mrb[0].mxu0 %v3719
      %v3755 = vpop.f32.mrb[0].mxu0
      %v3756 = vadd.f32 %v2149, %v3755
      %v3757 = vpop.f32.mrb[0].mxu0
      %v3758 = vpop.f32.mrb[0].mxu0
      %v3759 = vadd.f32 %v2149, %v3758
      %v3760 = vpop.f32.mrb[0].mxu0
      %3761 = vdwg.mxu0
      %v3762 = vadd.f32 %v3574, %v3756
      %v3763 = vadd.f32 %v3575, %v3759
      %v3764 = vld [vmem:[%s1 + $0x6] ss:$0 sm:$0xff]
      %v3765 = vld [vmem:[%s1 + $0x7] ss:$0 sm:$0xff]
      %v3766 = vsel %vm474, %v3762, 0.0
      %3767 = vadd.xlane.f32.xlu0 %v3766
      %v3768 = vpop.xlane.xlu0 %3767
      %v3769 = vsel %vm478, %v3763, 0.0
      %3770 = vadd.xlane.f32.xlu0 %v3769
      %v3771 = vpop.xlane.xlu0 %3770
      %v3772 = vmul.f32 %v3768, %v482
      %v3773 = vmul.f32 %v3771, %v482
      %v3774 = vsub.f32 %v3762, %v3772
      %v3775 = vsub.f32 %v3763, %v3773
      %v3776 = vmul.f32 %v3774, %v3774
      %v3777 = vmul.f32 %v3775, %v3775
      %v3778 = vsel %vm474, %v3776, 0.0
      %3779 = vadd.xlane.f32.xlu0 %v3778
      %v3780 = vpop.xlane.xlu0 %3779
      %v3781 = vsel %vm478, %v3777, 0.0
      %3782 = vadd.xlane.f32.xlu0 %v3781
      %v3783 = vpop.xlane.xlu0 %3782
      %v3784 = vmul.f32 %v3780, %v482
      %v3785 = vmul.f32 %v3783, %v482
      %v3786 = vadd.f32 %v3784, 1e-05
      %v3787 = vadd.f32 %v3785, 1e-05
      %v3788 = vrsqrt.pop %v3786
      %v3789 = vrsqrt.pop %v3787
      %v3790 = vmul.f32 %v3774, %v3788
      %v3791 = vmul.f32 %v3775, %v3789
      %v3792 = vmul.f32 %v3790, %v3764
      %v3793 = vmul.f32 %v3791, %v3764
      %v3794 = vadd.f32 %v3792, %v3765
      %v3795 = vadd.f32 %v3793, %v3765
      %v3796 = vsel %vm474, %v3794, 0.0
      %v3797 = vsel %vm478, %v3795, 0.0
      %v3798 = vadd.f32 %v3796, %v3797
      %v3799 = vrot.slane %v3798, 4
      %v3800 = vadd.f32 %v3798, %v3799
      %v3801 = vrot.slane %v3800, 2
      %v3802 = vadd.f32 %v3800, %v3801
      %v3803 = vrot.slane %v3802, 1
      %v3804 = vadd.f32 %v3802, %v3803
      %v3805 = vrcp.pop 9.0
      %v3806 = vmul.f32 %v3804, %v3805
      %v3807 = vld [vmem:[%s1 + $0x50] ss:$0 sm:$0xff]
      %v3808 = vld [vmem:[%s1 + $0x51] ss:$0 sm:$0xff]
      %v3809 = vld [vmem:[%s1 + $0x52] ss:$0 sm:$0xff]
      %v3810 = vld [vmem:[%s2 + $0xe0] sm:$0xf]
      %v3811 = vld [vmem:[%s2 + $0xe4] sm:$0xf]
      %v3812 = vld [vmem:[%s2 + $0xe8] sm:$0xf]
      %v3813 = vld [vmem:[%s2 + $0xec] sm:$0xf]
      %v3814 = vpack.c.bf16 %v3806, %v3806
      %v3819 = vunpack.c.l.b16 %v3810
      %v3820 = vunpack.c.l.b16 %v3811
      %v3821 = vunpack.c.l.b16 %v3812
      %v3822 = vunpack.c.l.b16 %v3813
      %v3823 = vpack.c.b16 %v3820, %v3819
      %v3824 = vpack.c.b16 %v3822, %v3821
      %v3828 = vsel %vm474, %v3814, 0
      %3830 = vmatprep.subr.bf16.mxu0 0
      %3831 = vmatpush1.bf16.msra.mxu0 %v3823
      %3832 = vmatprep.subr.bf16.mxu0 0
      %3833 = vmatpush1.bf16.msra.mxu0 %v3824
      %3834 = vmatprep.subr.bf16.mxu0 0
      %3835 = vmatpush1.bf16.msra.mxu0 0
      %3836 = vmatprep.subr.bf16.mxu0 0
      %3837 = vmatpush1.bf16.msra.mxu0 0
      %3838 = vmatprep.subr.bf16.mxu0 0
      %3839 = vmatpush1.bf16.msra.mxu0 0
      %3840 = vmatprep.subr.bf16.mxu0 0
      %3841 = vmatpush1.bf16.msra.mxu0 0
      %3842 = vmatprep.subr.bf16.mxu0 0
      %3843 = vmatpush1.bf16.msra.mxu0 0
      %3844 = vmatprep.subr.bf16.mxu0 0
      %3845 = vmatpush1.bf16.msra.mxu0 0
      %3846 = vmatprep.subr.bf16.mxu0 0
      %3847 = vmatpush1.bf16.msra.mxu0 0
      %3848 = vmatprep.subr.bf16.mxu0 0
      %3849 = vmatpush1.bf16.msra.mxu0 0
      %3850 = vmatprep.subr.bf16.mxu0 0
      %3851 = vmatpush1.bf16.msra.mxu0 0
      %3852 = vmatprep.subr.bf16.mxu0 0
      %3853 = vmatpush1.bf16.msra.mxu0 0
      %3854 = vmatprep.subr.bf16.mxu0 0
      %3855 = vmatpush1.bf16.msra.mxu0 0
      %3856 = vmatprep.subr.bf16.mxu0 0
      %3857 = vmatpush1.bf16.msra.mxu0 0
      %3858 = vmatprep.subr.bf16.mxu0 0
      %3859 = vmatpush1.bf16.msra.mxu0 0
      %3860 = vmatprep.subr.bf16.mxu0 0
      %3861 = vmatpush1.bf16.msra.mxu0 0
      %3862 = vmatprep.mubr.bf16.mxu0 0
      %3863 = vmatmul.mubr.bf16.gmra.mrb[0].mxu0 %v3828
      %v3864 = vpop.f32.mrb[0].mxu0
      %v3865 = vadd.f32 %v3807, %v3864
      %v3866 = vpop.f32.mrb[0].mxu0
      %v3867 = vpop.f32.mrb[0].mxu0
      %v3868 = vpop.f32.mrb[0].mxu0
      %3869 = vdwg.mxu0
      %v3870 = vmul.f32 %v3865, 0.5
      %v3871 = vmul.f32 %v3865, 0.044715
      %v3872 = vmul.f32 %v3871, %v3865
      %v3873 = vmul.f32 %v3872, %v3865
      %v3874 = vadd.f32 %v3865, %v3873
      %v3875 = vmul.f32 %v3874, 0.7978846
      %v3876 = vtanh.pop %v3875
      %v3877 = vadd.f32 %v3876, 1.0
      %v3878 = vmul.f32 %v3870, %v3877
      %v3879 = vld [vmem:[%s2 + $0xf0] sm:$0xf]
      %v3880 = vld [vmem:[%s2 + $0xf4] sm:$0xf]
      %v3881 = vld [vmem:[%s2 + $0xf8] sm:$0xf]
      %v3882 = vld [vmem:[%s2 + $0xfc] sm:$0xf]
      %v3883 = vld [vmem:[%s2 + $0x100] sm:$0xf]
      %v3884 = vld [vmem:[%s2 + $0x104] sm:$0xf]
      %v3885 = vld [vmem:[%s2 + $0x108] sm:$0xf]
      %v3886 = vld [vmem:[%s2 + $0x10c] sm:$0xf]
      %v3887 = vld [vmem:[%s2 + $0x110] sm:$0xf]
      %v3888 = vld [vmem:[%s2 + $0x114] sm:$0xf]
      %v3889 = vld [vmem:[%s2 + $0x118] sm:$0xf]
      %v3890 = vld [vmem:[%s2 + $0x11c] sm:$0xf]
      %v3891 = vld [vmem:[%s2 + $0x120] sm:$0xf]
      %v3892 = vld [vmem:[%s2 + $0x124] sm:$0xf]
      %v3893 = vld [vmem:[%s2 + $0x128] sm:$0xf]
      %v3894 = vld [vmem:[%s2 + $0x12c] sm:$0xf]
      %v3895 = vpack.c.bf16 %v3878, %v3878
      %v3912 = vunpack.c.l.b16 %v3879
      %v3913 = vunpack.c.l.b16 %v3880
      %v3914 = vunpack.c.l.b16 %v3881
      %v3915 = vunpack.c.l.b16 %v3882
      %v3916 = vunpack.c.l.b16 %v3883
      %v3917 = vunpack.c.l.b16 %v3884
      %v3918 = vunpack.c.l.b16 %v3885
      %v3919 = vunpack.c.l.b16 %v3886
      %v3920 = vunpack.c.l.b16 %v3887
      %v3921 = vunpack.c.l.b16 %v3888
      %v3922 = vunpack.c.l.b16 %v3889
      %v3923 = vunpack.c.l.b16 %v3890
      %v3924 = vunpack.c.l.b16 %v3891
      %v3925 = vunpack.c.l.b16 %v3892
      %v3926 = vunpack.c.l.b16 %v3893
      %v3927 = vunpack.c.l.b16 %v3894
      %v3928 = vpack.c.b16 %v3913, %v3912
      %v3929 = vpack.c.b16 %v3915, %v3914
      %v3930 = vpack.c.b16 %v3917, %v3916
      %v3931 = vpack.c.b16 %v3919, %v3918
      %v3932 = vpack.c.b16 %v3921, %v3920
      %v3933 = vpack.c.b16 %v3923, %v3922
      %v3934 = vpack.c.b16 %v3925, %v3924
      %v3935 = vpack.c.b16 %v3927, %v3926
      %3944 = vmatprep.subr.bf16.mxu0 0
      %3945 = vmatpush1.bf16.msra.mxu0 %v3928
      %3946 = vmatprep.subr.bf16.mxu0 0
      %3947 = vmatpush1.bf16.msra.mxu0 %v3929
      %3948 = vmatprep.subr.bf16.mxu0 0
      %3949 = vmatpush1.bf16.msra.mxu0 %v3930
      %3950 = vmatprep.subr.bf16.mxu0 0
      %3951 = vmatpush1.bf16.msra.mxu0 %v3931
      %3952 = vmatprep.subr.bf16.mxu0 0
      %3953 = vmatpush1.bf16.msra.mxu0 %v3932
      %3954 = vmatprep.subr.bf16.mxu0 0
      %3955 = vmatpush1.bf16.msra.mxu0 %v3933
      %3956 = vmatprep.subr.bf16.mxu0 0
      %3957 = vmatpush1.bf16.msra.mxu0 %v3934
      %3958 = vmatprep.subr.bf16.mxu0 0
      %3959 = vmatpush1.bf16.msra.mxu0 %v3935
      %3960 = vmatprep.subr.bf16.mxu0 0
      %3961 = vmatpush1.bf16.msra.mxu0 0
      %3962 = vmatprep.subr.bf16.mxu0 0
      %3963 = vmatpush1.bf16.msra.mxu0 0
      %3964 = vmatprep.subr.bf16.mxu0 0
      %3965 = vmatpush1.bf16.msra.mxu0 0
      %3966 = vmatprep.subr.bf16.mxu0 0
      %3967 = vmatpush1.bf16.msra.mxu0 0
      %3968 = vmatprep.subr.bf16.mxu0 0
      %3969 = vmatpush1.bf16.msra.mxu0 0
      %3970 = vmatprep.subr.bf16.mxu0 0
      %3971 = vmatpush1.bf16.msra.mxu0 0
      %3972 = vmatprep.subr.bf16.mxu0 0
      %3973 = vmatpush1.bf16.msra.mxu0 0
      %3974 = vmatprep.subr.bf16.mxu0 0
      %3975 = vmatpush1.bf16.msra.mxu0 0
      %3976 = vmatprep.mubr.bf16.mxu0 0
      %3977 = vmatmul.mubr.bf16.gmra.mrb[0].mxu0 %v3895
      %v3978 = vpop.f32.mrb[0].mxu0
      %v3979 = vadd.f32 %v3808, %v3978
      %v3980 = vpop.f32.mrb[0].mxu0
      %v3981 = vpop.f32.mrb[0].mxu0
      %v3982 = vpop.f32.mrb[0].mxu0
      %3983 = vdwg.mxu0
      %v3984 = vmul.f32 %v3979, 0.5
      %v3985 = vmul.f32 %v3979, 0.044715
      %v3986 = vmul.f32 %v3985, %v3979
      %v3987 = vmul.f32 %v3986, %v3979
      %v3988 = vadd.f32 %v3979, %v3987
      %v3989 = vmul.f32 %v3988, 0.7978846
      %v3990 = vtanh.pop %v3989
      %v3991 = vadd.f32 %v3990, 1.0
      %v3992 = vmul.f32 %v3984, %v3991
      %v3993 = vld [vmem:[%s2 + $0x130] sm:$0xf]
      %v3994 = vld [vmem:[%s2 + $0x134] sm:$0xf]
      %v3995 = vld [vmem:[%s2 + $0x138] sm:$0xf]
      %v3996 = vld [vmem:[%s2 + $0x13c] sm:$0xf]
      %v3997 = vld [vmem:[%s2 + $0x140] sm:$0xf]
      %v3998 = vld [vmem:[%s2 + $0x144] sm:$0xf]
      %v3999 = vld [vmem:[%s2 + $0x148] sm:$0xf]
      %v4000 = vld [vmem:[%s2 + $0x14c] sm:$0xf]
      %v4001 = vpack.c.bf16 %v3992, %v3992
      %v4010 = vunpack.c.l.b16 %v3993
      %v4011 = vunpack.c.l.b16 %v3994
      %v4012 = vunpack.c.l.b16 %v3995
      %v4013 = vunpack.c.l.b16 %v3996
      %v4014 = vunpack.c.l.b16 %v3997
      %v4015 = vunpack.c.l.b16 %v3998
      %v4016 = vunpack.c.l.b16 %v3999
      %v4017 = vunpack.c.l.b16 %v4000
      %v4018 = vpack.c.b16 %v4011, %v4010
      %v4019 = vpack.c.b16 %v4013, %v4012
      %v4020 = vpack.c.b16 %v4015, %v4014
      %v4021 = vpack.c.b16 %v4017, %v4016
      %v4027 = vsel %vm2096, %v4001, 0
      %4029 = vmatprep.subr.bf16.mxu0 0
      %4030 = vmatpush1.bf16.msra.mxu0 %v4018
      %4031 = vmatprep.subr.bf16.mxu0 0
      %4032 = vmatpush1.bf16.msra.mxu0 %v4019
      %4033 = vmatprep.subr.bf16.mxu0 0
      %4034 = vmatpush1.bf16.msra.mxu0 %v4020
      %4035 = vmatprep.subr.bf16.mxu0 0
      %4036 = vmatpush1.bf16.msra.mxu0 %v4021
      %4037 = vmatprep.subr.bf16.mxu0 0
      %4038 = vmatpush1.bf16.msra.mxu0 0
      %4039 = vmatprep.subr.bf16.mxu0 0
      %4040 = vmatpush1.bf16.msra.mxu0 0
      %4041 = vmatprep.subr.bf16.mxu0 0
      %4042 = vmatpush1.bf16.msra.mxu0 0
      %4043 = vmatprep.subr.bf16.mxu0 0
      %4044 = vmatpush1.bf16.msra.mxu0 0
      %4045 = vmatprep.subr.bf16.mxu0 0
      %4046 = vmatpush1.bf16.msra.mxu0 0
      %4047 = vmatprep.subr.bf16.mxu0 0
      %4048 = vmatpush1.bf16.msra.mxu0 0
      %4049 = vmatprep.subr.bf16.mxu0 0
      %4050 = vmatpush1.bf16.msra.mxu0 0
      %4051 = vmatprep.subr.bf16.mxu0 0
      %4052 = vmatpush1.bf16.msra.mxu0 0
      %4053 = vmatprep.subr.bf16.mxu0 0
      %4054 = vmatpush1.bf16.msra.mxu0 0
      %4055 = vmatprep.subr.bf16.mxu0 0
      %4056 = vmatpush1.bf16.msra.mxu0 0
      %4057 = vmatprep.subr.bf16.mxu0 0
      %4058 = vmatpush1.bf16.msra.mxu0 0
      %4059 = vmatprep.subr.bf16.mxu0 0
      %4060 = vmatpush1.bf16.msra.mxu0 0
      %4061 = vmatprep.mubr.bf16.mxu0 0
      %4062 = vmatmul.mubr.bf16.gmra.mrb[0].mxu0 %v4027
      %v4063 = vpop.f32.mrb[0].mxu0
      %v4064 = vadd.f32 %v3809, %v4063
      %v4065 = vpop.f32.mrb[0].mxu0
      %v4066 = vpop.f32.mrb[0].mxu0
      %v4067 = vpop.f32.mrb[0].mxu0
      %4068 = vdwg.mxu0
      %4069 = vst [vmem:[%s220] sm:$0x1] %v4064
      %p4070 = scmp.lt.s32.totalorder %s16, 1
      %s4071 = scalar_select %p4070, %s16, 1
      %s4072 = scalar_lea.vmem %s5, %s4071
      // Predicated region
      $region41: #{brain_age_forward.1} parent=39 // pred_check
        %p4073 = pneg %p144
      $region42: #{brain_age_forward.1} parent=39 // pred_check_branch
        %4075 = sbr.rel (%p4073) target = $region44
      $region43: #{brain_age_forward.1} parent=39 // pred_region
        _
      $region44: #{brain_age_forward.1} parent=39 // pred_fallthru
        _
    $region40: #{brain_age_forward.1} parent=5 // pred_fallthru
      _
    %p4076 = scmp.le.s32.totalorder 2, %s11
    // Predicated region
    $region45: #{brain_age_forward.1} parent=5 // pred_check
      %p4077 = pneg %p4076
    $region46: #{brain_age_forward.1} parent=5 // pred_check_branch
      %4079 = sbr.rel (%p4077) target = $region48
    $region47: #{brain_age_forward.1} parent=5 // pred_region
      %s4080 = ssub.s32 %s11, 2
      // Predicated region
      $region49: #{brain_age_forward.1} parent=47 // pred_check
        %p4081 = pneg %p150
      $region50: #{brain_age_forward.1} parent=47 // pred_check_branch
        %4083 = sbr.rel (%p4081) target = $region52
      $region51: #{brain_age_forward.1} parent=47 // pred_region
        %p4084 = scmp.lt.s32.totalorder %s17, 1
        %s4085 = scalar_select %p4084, %s17, 1
        %s4086 = scalar_lea.vmem %s5, %s4085
      $region52: #{brain_age_forward.1} parent=47 // pred_fallthru
        _
    $region48: #{brain_age_forward.1} parent=5 // pred_fallthru
      _
  $region6: #{brain_age_forward.1} parent=0 // loop_footer
    %s15 = sadd.s32 1, %s11
  $region7: #{brain_age_forward.1} parent=0 // loop_footer_branch
    %10 = sbr.rel target = $region3
  $region8: #{brain_age_forward.1} parent=0 // loop_exit
    _

</llo_original>
